<compile_context>
chip_gen: v6e
topology: v6e:2x2x1
jax: 0.10.0
libtpu: 0.0.40
codegen_flags: <defaults>
</compile_context>

<pallas_src>
import jax
import jax.numpy as jnp
from jax.experimental import pallas as pl
from jax.experimental.pallas import tpu as pltpu


# ------------------------------ in-kernel helpers ----------------------------
def _im2col_3x3(pad_ref, H, W, C):
    """(H+2, W+2, C) padded VMEM ref -> (H*W, 9*C) patch matrix, (kh, kw, ci) order."""
    return jnp.concatenate(
        [pad_ref[kh:kh + H, kw:kw + W, :]
         for kh in range(3) for kw in range(3)],
        axis=-1).reshape(H * W, 9 * C)


# --------------------------- fused forward kernel ---------------------------
def _fused_kernel(x_ref, wA_ref, bA_ref, wD_ref, bD_ref, wB_ref, bB_ref,
                  wC_ref, bC_ref, o_ref, pad0_ref, pad1_ref):
    # x_ref : (1, H, W, Cin)          one batch element (NHWC)
    # wA_ref: (9*Cin, C1)  bA_ref: (1, C1)
    # wD_ref: (9*C1, C2)   bD_ref: (1, C2)
    # wB_ref: (C2, Hid)    bB_ref: (1, Hid)
    # wC_ref: (Hid, NCls)  bC_ref: (1, NCls)
    # o_ref : (1, 1, NCls)
    # pad0_ref: VMEM (H+2, W+2, Cin)   pad1_ref: VMEM (H+2, W+2, C1)
    H, W, Cin = x_ref.shape[1], x_ref.shape[2], x_ref.shape[3]
    C1 = wA_ref.shape[1]

    # ---------------- modelA: conv3x3 (SAME) + ReLU ----------------
    # Zero-fill halo scratch then write the interior (no HBM round-trip for padding).
    pad0_ref[...] = jnp.zeros_like(pad0_ref)
    pad0_ref[1:H + 1, 1:W + 1, :] = x_ref[0]

    # im2col: one (H*W, 9*Cin) patch matrix -> single MXU matmul with K = 9*Cin.
    patches0 = _im2col_3x3(pad0_ref, H, W, Cin)
    y1 = jnp.dot(patches0, wA_ref[...], preferred_element_type=jnp.float32)
    y1 = jnp.maximum(y1 + bA_ref[...], 0.0)                 # (H*W, C1), f32

    # ---------------- modelD: conv3x3 (SAME) + ReLU ----------------
    pad1_ref[...] = jnp.zeros_like(pad1_ref)
    pad1_ref[1:H + 1, 1:W + 1, :] = y1.reshape(H, W, C1)

    patches1 = _im2col_3x3(pad1_ref, H, W, C1)
    y2 = jnp.dot(patches1, wD_ref[...], preferred_element_type=jnp.float32)
    y2 = jnp.maximum(y2 + bD_ref[...], 0.0)                 # (H*W, C2), f32

    # ---------------- modelB: global-avg-pool + Linear + ReLU ----------------
    pooled = jnp.sum(y2, axis=0, keepdims=True) * (1.0 / (H * W))   # (1, C2), f32 accum
    h = jnp.dot(pooled, wB_ref[...], preferred_element_type=jnp.float32)
    h = jnp.maximum(h + bB_ref[...], 0.0)                   # (1, Hid)

    # ---------------- modelC: Linear ----------------
    out = jnp.dot(h, wC_ref[...], preferred_element_type=jnp.float32) + bC_ref[...]
    o_ref[...] = out.reshape(1, 1, -1).astype(o_ref.dtype)  # (1, 1, NCls)


# ------------------------------ python wrapper ------------------------------
def model_fusion_forward(x_nchw, params):
    """x_nchw: (B, Cin, H, W) like the PyTorch module.  Returns (B, NumCls)."""
    x = jnp.transpose(x_nchw, (0, 2, 3, 1))                 # NCHW -> NHWC (boundary glue)
    B, H, W, Cin = x.shape
    C1 = params["wA"].shape[-1]
    C2 = params["wD"].shape[-1]
    Hid = params["wB"].shape[-1]
    NumCls = params["wC"].shape[-1]

    # Pre-reshape conv weights to (9*Cin, Cout) so the kernel does one matmul per conv.
    wA2 = params["wA"].reshape(9 * Cin, C1)
    wD2 = params["wD"].reshape(9 * C1, C2)
    bA = params["bA"].reshape(1, C1)
    bD = params["bD"].reshape(1, C2)
    bB = params["bB"].reshape(1, Hid)
    bC = params["bC"].reshape(1, NumCls)

    # Advisory cost hint for the XLA scheduler around the custom call.
    flops = 2 * B * (H * W * 9 * Cin * C1 + H * W * 9 * C1 * C2
                     + C2 * Hid + Hid * NumCls)
    bytes_accessed = 4 * (x.size + wA2.size + wD2.size + params["wB"].size
                          + params["wC"].size + bA.size + bD.size + bB.size
                          + bC.size + B * NumCls)
    cost = pl.CostEstimate(flops=flops, transcendentals=0,
                           bytes_accessed=bytes_accessed)

    out3 = pl.pallas_call(
        _fused_kernel,
        out_shape=jax.ShapeDtypeStruct((B, 1, NumCls), x.dtype),
        grid=(B,),
        in_specs=[
            pl.BlockSpec((1, H, W, Cin), lambda bi: (bi, 0, 0, 0)),
            pl.BlockSpec((9 * Cin, C1), lambda bi: (0, 0)),
            pl.BlockSpec((1, C1), lambda bi: (0, 0)),
            pl.BlockSpec((9 * C1, C2), lambda bi: (0, 0)),
            pl.BlockSpec((1, C2), lambda bi: (0, 0)),
            pl.BlockSpec((C2, Hid), lambda bi: (0, 0)),
            pl.BlockSpec((1, Hid), lambda bi: (0, 0)),
            pl.BlockSpec((Hid, NumCls), lambda bi: (0, 0)),
            pl.BlockSpec((1, NumCls), lambda bi: (0, 0)),
        ],
        out_specs=pl.BlockSpec((1, 1, NumCls), lambda bi: (bi, 0, 0)),
        scratch_shapes=[
            pltpu.VMEM((H + 2, W + 2, Cin), jnp.float32),   # padded input
            pltpu.VMEM((H + 2, W + 2, C1), jnp.float32),    # padded x1
        ],
        compiler_params=pltpu.CompilerParams(
            dimension_semantics=("parallel",)),
        cost_estimate=cost,
    )(x, wA2, bA, wD2, bD, params["wB"], bB, params["wC"], bC)
    return out3.reshape(B, NumCls)


# ------------------------------ pure-JAX reference --------------------------
def _reference(x_nchw, p):
    x = jnp.transpose(x_nchw, (0, 2, 3, 1))                 # NHWC
    dn = ("NHWC", "HWIO", "NHWC")
    x1 = jax.nn.relu(
        jax.lax.conv_general_dilated(x, p["wA"], (1, 1), "SAME",
                                     dimension_numbers=dn) + p["bA"])
    x4 = jax.nn.relu(
        jax.lax.conv_general_dilated(x1, p["wD"], (1, 1), "SAME",
                                     dimension_numbers=dn) + p["bD"])
    pooled = jnp.mean(x4, axis=(1, 2))
    x2 = jax.nn.relu(pooled @ p["wB"] + p["bB"])
    return x2 @ p["wC"] + p["bC"]


if __name__ == "__main__":
    B, H, W = 2, 16, 16
    Cin, C1, C2, Hid, NumCls = 4, 8, 8, 32, 10

    key = jax.random.PRNGKey(0)
    keys = jax.random.split(key, 9)
    params = {
        "wA": 0.1 * jax.random.normal(keys[0], (3, 3, Cin, C1), jnp.float32),
        "bA": 0.1 * jax.random.normal(keys[1], (C1,), jnp.float32),
        "wD": 0.1 * jax.random.normal(keys[2], (3, 3, C1, C2), jnp.float32),
        "bD": 0.1 * jax.random.normal(keys[3], (C2,), jnp.float32),
        "wB": 0.1 * jax.random.normal(keys[4], (C2, Hid), jnp.float32),   # frozen in torch
        "bB": 0.1 * jax.random.normal(keys[5], (Hid,), jnp.float32),
        "wC": 0.1 * jax.random.normal(keys[6], (Hid, NumCls), jnp.float32),
        "bC": 0.1 * jax.random.normal(keys[7], (NumCls,), jnp.float32),
    }
    x = jax.random.normal(keys[8], (B, Cin, H, W), jnp.float32)  # NCHW like PyTorch

    out = jax.block_until_ready(model_fusion_forward(x, params))
    ref = jax.block_until_ready(_reference(x, params))

    assert out.shape == (B, NumCls), out.shape
    assert jnp.allclose(out, ref, rtol=1e-4, atol=1e-4), "mismatch vs reference"
    print("KERNEL_OK")
</pallas_src>

<mosaic_0001>
module attributes {stable_mosaic.version = 11 : i64} {
  func.func @_fused_kernel(%arg0: i32, %arg1: memref<1x16x16x4xf32, #tpu.memory_space<vmem>>, %arg2: memref<36x8xf32, #tpu.memory_space<vmem>>, %arg3: memref<1x8xf32, #tpu.memory_space<vmem>>, %arg4: memref<72x8xf32, #tpu.memory_space<vmem>>, %arg5: memref<1x8xf32, #tpu.memory_space<vmem>>, %arg6: memref<8x32xf32, #tpu.memory_space<vmem>>, %arg7: memref<1x32xf32, #tpu.memory_space<vmem>>, %arg8: memref<32x10xf32, #tpu.memory_space<vmem>>, %arg9: memref<1x10xf32, #tpu.memory_space<vmem>>, %arg10: memref<1x1x10xf32, #tpu.memory_space<vmem>>, %arg11: memref<18x18x4xf32, #tpu.memory_space<vmem>>, %arg12: memref<18x18x8xf32, #tpu.memory_space<vmem>>) attributes {dimension_semantics = [#tpu.dimension_semantics<parallel>], iteration_bounds = array<i64: 2>, scalar_prefetch = 0 : i64, scratch_operands = 2 : i64, tpu.core_type = #tpu.core_type<tc>, window_params = [{transform_indices = @transform_0, window_bounds = array<i64: 1, 16, 16, 4>}, {pipeline_mode = #tpu.pipeline_mode<synchronous>, transform_indices = @transform_1, window_bounds = array<i64: 36, 8>}, {pipeline_mode = #tpu.pipeline_mode<synchronous>, transform_indices = @transform_2, window_bounds = array<i64: 1, 8>}, {pipeline_mode = #tpu.pipeline_mode<synchronous>, transform_indices = @transform_3, window_bounds = array<i64: 72, 8>}, {pipeline_mode = #tpu.pipeline_mode<synchronous>, transform_indices = @transform_4, window_bounds = array<i64: 1, 8>}, {pipeline_mode = #tpu.pipeline_mode<synchronous>, transform_indices = @transform_5, window_bounds = array<i64: 8, 32>}, {pipeline_mode = #tpu.pipeline_mode<synchronous>, transform_indices = @transform_6, window_bounds = array<i64: 1, 32>}, {pipeline_mode = #tpu.pipeline_mode<synchronous>, transform_indices = @transform_7, window_bounds = array<i64: 32, 10>}, {pipeline_mode = #tpu.pipeline_mode<synchronous>, transform_indices = @transform_8, window_bounds = array<i64: 1, 10>}, {transform_indices = @transform_9, window_bounds = array<i64: 1, 1, 10>}]} {
    %cst = arith.constant 0.000000e+00 : f32
    %0 = vector.broadcast %cst : f32 to vector<18x18x4xf32>
    %c0 = arith.constant 0 : index
    %c0_0 = arith.constant 0 : index
    %c0_1 = arith.constant 0 : index
    %1 = vector.load %arg11[%c0, %c0_0, %c0_1] : memref<18x18x4xf32, #tpu.memory_space<vmem>>, vector<18x18x4xf32>
    tpu.vector_store %arg11[%c0, %c0_0, %c0_1], %0 {strides = array<i32>} : memref<18x18x4xf32, #tpu.memory_space<vmem>>, vector<18x18x4xf32>,
    %c0_2 = arith.constant 0 : index
    %c0_3 = arith.constant 0 : index
    %c0_4 = arith.constant 0 : index
    %c0_5 = arith.constant 0 : index
    %2 = vector.load %arg1[%c0_2, %c0_3, %c0_4, %c0_5] : memref<1x16x16x4xf32, #tpu.memory_space<vmem>>, vector<1x16x16x4xf32>
    %3 = vector.shape_cast %2 : vector<1x16x16x4xf32> to vector<16x16x4xf32>
    %c1 = arith.constant 1 : index
    %c1_6 = arith.constant 1 : index
    %c0_7 = arith.constant 0 : index
    %4 = vector.load %arg11[%c1, %c1_6, %c0_7] : memref<18x18x4xf32, #tpu.memory_space<vmem>>, vector<16x16x4xf32>
    tpu.vector_store %arg11[%c1, %c1_6, %c0_7], %3 {strides = array<i32>} : memref<18x18x4xf32, #tpu.memory_space<vmem>>, vector<16x16x4xf32>,
    %c0_8 = arith.constant 0 : index
    %c0_9 = arith.constant 0 : index
    %c0_10 = arith.constant 0 : index
    %5 = vector.load %arg11[%c0_8, %c0_9, %c0_10] : memref<18x18x4xf32, #tpu.memory_space<vmem>>, vector<16x16x4xf32>
    %c0_11 = arith.constant 0 : index
    %c1_12 = arith.constant 1 : index
    %c0_13 = arith.constant 0 : index
    %6 = vector.load %arg11[%c0_11, %c1_12, %c0_13] : memref<18x18x4xf32, #tpu.memory_space<vmem>>, vector<16x16x4xf32>
    %c0_14 = arith.constant 0 : index
    %c2 = arith.constant 2 : index
    %c0_15 = arith.constant 0 : index
    %7 = vector.load %arg11[%c0_14, %c2, %c0_15] : memref<18x18x4xf32, #tpu.memory_space<vmem>>, vector<16x16x4xf32>
    %c1_16 = arith.constant 1 : index
    %c0_17 = arith.constant 0 : index
    %c0_18 = arith.constant 0 : index
    %8 = vector.load %arg11[%c1_16, %c0_17, %c0_18] : memref<18x18x4xf32, #tpu.memory_space<vmem>>, vector<16x16x4xf32>
    %c1_19 = arith.constant 1 : index
    %c1_20 = arith.constant 1 : index
    %c0_21 = arith.constant 0 : index
    %9 = vector.load %arg11[%c1_19, %c1_20, %c0_21] : memref<18x18x4xf32, #tpu.memory_space<vmem>>, vector<16x16x4xf32>
    %c1_22 = arith.constant 1 : index
    %c2_23 = arith.constant 2 : index
    %c0_24 = arith.constant 0 : index
    %10 = vector.load %arg11[%c1_22, %c2_23, %c0_24] : memref<18x18x4xf32, #tpu.memory_space<vmem>>, vector<16x16x4xf32>
    %c2_25 = arith.constant 2 : index
    %c0_26 = arith.constant 0 : index
    %c0_27 = arith.constant 0 : index
    %11 = vector.load %arg11[%c2_25, %c0_26, %c0_27] : memref<18x18x4xf32, #tpu.memory_space<vmem>>, vector<16x16x4xf32>
    %c2_28 = arith.constant 2 : index
    %c1_29 = arith.constant 1 : index
    %c0_30 = arith.constant 0 : index
    %12 = vector.load %arg11[%c2_28, %c1_29, %c0_30] : memref<18x18x4xf32, #tpu.memory_space<vmem>>, vector<16x16x4xf32>
    %c2_31 = arith.constant 2 : index
    %c2_32 = arith.constant 2 : index
    %c0_33 = arith.constant 0 : index
    %13 = vector.load %arg11[%c2_31, %c2_32, %c0_33] : memref<18x18x4xf32, #tpu.memory_space<vmem>>, vector<16x16x4xf32>
    %14 = tpu.concatenate %5, %6, %7, %8, %9, %10, %11, %12, %13 in 2 : vector<16x16x4xf32>, vector<16x16x4xf32>, vector<16x16x4xf32>, vector<16x16x4xf32>, vector<16x16x4xf32>, vector<16x16x4xf32>, vector<16x16x4xf32>, vector<16x16x4xf32>, vector<16x16x4xf32> -> vector<16x16x36xf32>
    %15 = vector.shape_cast %14 : vector<16x16x36xf32> to vector<256x36xf32>
    %c0_34 = arith.constant 0 : index
    %c0_35 = arith.constant 0 : index
    %16 = vector.load %arg2[%c0_34, %c0_35] : memref<36x8xf32, #tpu.memory_space<vmem>>, vector<36x8xf32>
    %cst_36 = arith.constant dense<0.000000e+00> : vector<256x8xf32>
    %17 = tpu.matmul %15, %16, %cst_36 {dimension_numbers = #tpu.dot_dimension_numbers<[1], [0], [0], [1], [0, 0, 1, 1], [], []>} : vector<256x36xf32>, vector<36x8xf32>, vector<256x8xf32> -> vector<256x8xf32>
    %c0_37 = arith.constant 0 : index
    %c0_38 = arith.constant 0 : index
    %18 = vector.load %arg3[%c0_37, %c0_38] : memref<1x8xf32, #tpu.memory_space<vmem>>, vector<1x8xf32>
    %19 = vector.broadcast %18 : vector<1x8xf32> to vector<256x8xf32>
    %20 = arith.addf %17, %19 : vector<256x8xf32>
    %cst_39 = arith.constant 0.000000e+00 : f32
    %21 = vector.broadcast %cst_39 : f32 to vector<256x8xf32>
    %22 = arith.maximumf %20, %21 : vector<256x8xf32>
    %cst_40 = arith.constant 0.000000e+00 : f32
    %23 = vector.broadcast %cst_40 : f32 to vector<18x18x8xf32>
    %c0_41 = arith.constant 0 : index
    %c0_42 = arith.constant 0 : index
    %c0_43 = arith.constant 0 : index
    %24 = vector.load %arg12[%c0_41, %c0_42, %c0_43] : memref<18x18x8xf32, #tpu.memory_space<vmem>>, vector<18x18x8xf32>
    tpu.vector_store %arg12[%c0_41, %c0_42, %c0_43], %23 {strides = array<i32>} : memref<18x18x8xf32, #tpu.memory_space<vmem>>, vector<18x18x8xf32>,
    %25 = vector.shape_cast %22 : vector<256x8xf32> to vector<16x16x8xf32>
    %c1_44 = arith.constant 1 : index
    %c1_45 = arith.constant 1 : index
    %c0_46 = arith.constant 0 : index
    %26 = vector.load %arg12[%c1_44, %c1_45, %c0_46] : memref<18x18x8xf32, #tpu.memory_space<vmem>>, vector<16x16x8xf32>
    tpu.vector_store %arg12[%c1_44, %c1_45, %c0_46], %25 {strides = array<i32>} : memref<18x18x8xf32, #tpu.memory_space<vmem>>, vector<16x16x8xf32>,
    %c0_47 = arith.constant 0 : index
    %c0_48 = arith.constant 0 : index
    %c0_49 = arith.constant 0 : index
    %27 = vector.load %arg12[%c0_47, %c0_48, %c0_49] : memref<18x18x8xf32, #tpu.memory_space<vmem>>, vector<16x16x8xf32>
    %c0_50 = arith.constant 0 : index
    %c1_51 = arith.constant 1 : index
    %c0_52 = arith.constant 0 : index
    %28 = vector.load %arg12[%c0_50, %c1_51, %c0_52] : memref<18x18x8xf32, #tpu.memory_space<vmem>>, vector<16x16x8xf32>
    %c0_53 = arith.constant 0 : index
    %c2_54 = arith.constant 2 : index
    %c0_55 = arith.constant 0 : index
    %29 = vector.load %arg12[%c0_53, %c2_54, %c0_55] : memref<18x18x8xf32, #tpu.memory_space<vmem>>, vector<16x16x8xf32>
    %c1_56 = arith.constant 1 : index
    %c0_57 = arith.constant 0 : index
    %c0_58 = arith.constant 0 : index
    %30 = vector.load %arg12[%c1_56, %c0_57, %c0_58] : memref<18x18x8xf32, #tpu.memory_space<vmem>>, vector<16x16x8xf32>
    %c1_59 = arith.constant 1 : index
    %c1_60 = arith.constant 1 : index
    %c0_61 = arith.constant 0 : index
    %31 = vector.load %arg12[%c1_59, %c1_60, %c0_61] : memref<18x18x8xf32, #tpu.memory_space<vmem>>, vector<16x16x8xf32>
    %c1_62 = arith.constant 1 : index
    %c2_63 = arith.constant 2 : index
    %c0_64 = arith.constant 0 : index
    %32 = vector.load %arg12[%c1_62, %c2_63, %c0_64] : memref<18x18x8xf32, #tpu.memory_space<vmem>>, vector<16x16x8xf32>
    %c2_65 = arith.constant 2 : index
    %c0_66 = arith.constant 0 : index
    %c0_67 = arith.constant 0 : index
    %33 = vector.load %arg12[%c2_65, %c0_66, %c0_67] : memref<18x18x8xf32, #tpu.memory_space<vmem>>, vector<16x16x8xf32>
    %c2_68 = arith.constant 2 : index
    %c1_69 = arith.constant 1 : index
    %c0_70 = arith.constant 0 : index
    %34 = vector.load %arg12[%c2_68, %c1_69, %c0_70] : memref<18x18x8xf32, #tpu.memory_space<vmem>>, vector<16x16x8xf32>
    %c2_71 = arith.constant 2 : index
    %c2_72 = arith.constant 2 : index
    %c0_73 = arith.constant 0 : index
    %35 = vector.load %arg12[%c2_71, %c2_72, %c0_73] : memref<18x18x8xf32, #tpu.memory_space<vmem>>, vector<16x16x8xf32>
    %36 = tpu.concatenate %27, %28, %29, %30, %31, %32, %33, %34, %35 in 2 : vector<16x16x8xf32>, vector<16x16x8xf32>, vector<16x16x8xf32>, vector<16x16x8xf32>, vector<16x16x8xf32>, vector<16x16x8xf32>, vector<16x16x8xf32>, vector<16x16x8xf32>, vector<16x16x8xf32> -> vector<16x16x72xf32>
    %37 = vector.shape_cast %36 : vector<16x16x72xf32> to vector<256x72xf32>
    %c0_74 = arith.constant 0 : index
    %c0_75 = arith.constant 0 : index
    %38 = vector.load %arg4[%c0_74, %c0_75] : memref<72x8xf32, #tpu.memory_space<vmem>>, vector<72x8xf32>
    %cst_76 = arith.constant dense<0.000000e+00> : vector<256x8xf32>
    %39 = tpu.matmul %37, %38, %cst_76 {dimension_numbers = #tpu.dot_dimension_numbers<[1], [0], [0], [1], [0, 0, 1, 1], [], []>} : vector<256x72xf32>, vector<72x8xf32>, vector<256x8xf32> -> vector<256x8xf32>
    %c0_77 = arith.constant 0 : index
    %c0_78 = arith.constant 0 : index
    %40 = vector.load %arg5[%c0_77, %c0_78] : memref<1x8xf32, #tpu.memory_space<vmem>>, vector<1x8xf32>
    %41 = vector.broadcast %40 : vector<1x8xf32> to vector<256x8xf32>
    %42 = arith.addf %39, %41 : vector<256x8xf32>
    %cst_79 = arith.constant 0.000000e+00 : f32
    %43 = vector.broadcast %cst_79 : f32 to vector<256x8xf32>
    %44 = arith.maximumf %42, %43 : vector<256x8xf32>
    %cst_80 = arith.constant dense<0.000000e+00> : vector<8xf32>
    %45 = vector.multi_reduction <add>, %44, %cst_80 [0] : vector<256x8xf32> to vector<8xf32>
    %46 = vector.shape_cast %45 : vector<8xf32> to vector<1x8xf32>
    %cst_81 = arith.constant 3.906250e-03 : f32
    %47 = vector.broadcast %cst_81 : f32 to vector<1x8xf32>
    %48 = arith.mulf %46, %47 : vector<1x8xf32>
    %c0_82 = arith.constant 0 : index
    %c0_83 = arith.constant 0 : index
    %49 = vector.load %arg6[%c0_82, %c0_83] : memref<8x32xf32, #tpu.memory_space<vmem>>, vector<8x32xf32>
    %cst_84 = arith.constant dense<0.000000e+00> : vector<1x32xf32>
    %50 = tpu.matmul %48, %49, %cst_84 {dimension_numbers = #tpu.dot_dimension_numbers<[1], [0], [0], [1], [0, 0, 1, 1], [], []>} : vector<1x8xf32>, vector<8x32xf32>, vector<1x32xf32> -> vector<1x32xf32>
    %c0_85 = arith.constant 0 : index
    %c0_86 = arith.constant 0 : index
    %51 = vector.load %arg7[%c0_85, %c0_86] : memref<1x32xf32, #tpu.memory_space<vmem>>, vector<1x32xf32>
    %52 = arith.addf %50, %51 : vector<1x32xf32>
    %cst_87 = arith.constant 0.000000e+00 : f32
    %53 = vector.broadcast %cst_87 : f32 to vector<1x32xf32>
    %54 = arith.maximumf %52, %53 : vector<1x32xf32>
    %c0_88 = arith.constant 0 : index
    %c0_89 = arith.constant 0 : index
    %55 = vector.load %arg8[%c0_88, %c0_89] : memref<32x10xf32, #tpu.memory_space<vmem>>, vector<32x10xf32>
    %cst_90 = arith.constant dense<0.000000e+00> : vector<1x10xf32>
    %56 = tpu.matmul %54, %55, %cst_90 {dimension_numbers = #tpu.dot_dimension_numbers<[1], [0], [0], [1], [0, 0, 1, 1], [], []>} : vector<1x32xf32>, vector<32x10xf32>, vector<1x10xf32> -> vector<1x10xf32>
    %c0_91 = arith.constant 0 : index
    %c0_92 = arith.constant 0 : index
    %57 = vector.load %arg9[%c0_91, %c0_92] : memref<1x10xf32, #tpu.memory_space<vmem>>, vector<1x10xf32>
    %58 = arith.addf %56, %57 : vector<1x10xf32>
    %59 = vector.shape_cast %58 : vector<1x10xf32> to vector<1x1x10xf32>
    %c0_93 = arith.constant 0 : index
    %c0_94 = arith.constant 0 : index
    %c0_95 = arith.constant 0 : index
    %60 = vector.load %arg10[%c0_93, %c0_94, %c0_95] : memref<1x1x10xf32, #tpu.memory_space<vmem>>, vector<1x1x10xf32>
    tpu.vector_store %arg10[%c0_93, %c0_94, %c0_95], %59 {strides = array<i32>} : memref<1x1x10xf32, #tpu.memory_space<vmem>>, vector<1x1x10xf32>,
    return
  }
  func.func @transform_0(%arg0: i32) -> (i32, i32, i32, i32) {
    %c0_i32 = arith.constant 0 : i32
    %c0_i32_0 = arith.constant 0 : i32
    %c0_i32_1 = arith.constant 0 : i32
    %c0_i32_2 = arith.constant 0 : i32
    return %arg0, %c0_i32, %c0_i32_0, %c0_i32_1 : i32, i32, i32, i32
  }
  func.func @transform_1(%arg0: i32) -> (i32, i32) {
    %c0_i32 = arith.constant 0 : i32
    %c0_i32_0 = arith.constant 0 : i32
    %c0_i32_1 = arith.constant 0 : i32
    return %c0_i32, %c0_i32_0 : i32, i32
  }
  func.func @transform_2(%arg0: i32) -> (i32, i32) {
    %c0_i32 = arith.constant 0 : i32
    %c0_i32_0 = arith.constant 0 : i32
    %c0_i32_1 = arith.constant 0 : i32
    return %c0_i32, %c0_i32_0 : i32, i32
  }
  func.func @transform_3(%arg0: i32) -> (i32, i32) {
    %c0_i32 = arith.constant 0 : i32
    %c0_i32_0 = arith.constant 0 : i32
    %c0_i32_1 = arith.constant 0 : i32
    return %c0_i32, %c0_i32_0 : i32, i32
  }
  func.func @transform_4(%arg0: i32) -> (i32, i32) {
    %c0_i32 = arith.constant 0 : i32
    %c0_i32_0 = arith.constant 0 : i32
    %c0_i32_1 = arith.constant 0 : i32
    return %c0_i32, %c0_i32_0 : i32, i32
  }
  func.func @transform_5(%arg0: i32) -> (i32, i32) {
    %c0_i32 = arith.constant 0 : i32
    %c0_i32_0 = arith.constant 0 : i32
    %c0_i32_1 = arith.constant 0 : i32
    return %c0_i32, %c0_i32_0 : i32, i32
  }
  func.func @transform_6(%arg0: i32) -> (i32, i32) {
    %c0_i32 = arith.constant 0 : i32
    %c0_i32_0 = arith.constant 0 : i32
    %c0_i32_1 = arith.constant 0 : i32
    return %c0_i32, %c0_i32_0 : i32, i32
  }
  func.func @transform_7(%arg0: i32) -> (i32, i32) {
    %c0_i32 = arith.constant 0 : i32
    %c0_i32_0 = arith.constant 0 : i32
    %c0_i32_1 = arith.constant 0 : i32
    return %c0_i32, %c0_i32_0 : i32, i32
  }
  func.func @transform_8(%arg0: i32) -> (i32, i32) {
    %c0_i32 = arith.constant 0 : i32
    %c0_i32_0 = arith.constant 0 : i32
    %c0_i32_1 = arith.constant 0 : i32
    return %c0_i32, %c0_i32_0 : i32, i32
  }
  func.func @transform_9(%arg0: i32) -> (i32, i32, i32) {
    %c0_i32 = arith.constant 0 : i32
    %c0_i32_0 = arith.constant 0 : i32
    %c0_i32_1 = arith.constant 0 : i32
    return %arg0, %c0_i32, %c0_i32_0 : i32, i32, i32
  }
}

</mosaic_0001>

<llo_original>
// kernel: tpu_custom_call.1
$region0: #{tpu_custom_call.1}
  #allocation0 [shape = 'u32[]', space=smem, size = 0x4, offset = 0x4, fixed_abs, tag = 'smem constant byte address 0x4 - core index']
  #allocation1 [shape = 'u32[144,128]{1,0:T(1,128)}', space=vmem, size = 0x12000, scoped, tag = 'internal scratch']
  #allocation2 [shape = 'f32[18,18,4]{2,1,0:T(8,128)}', space=vmem, size = 0x36000, scoped, tag = 'scratch operand']
  #allocation3 [shape = 'f32[18,18,8]{2,1,0:T(8,128)}', space=vmem, size = 0x36000, scoped, tag = 'scratch operand']
  %s0 = inlined_call_operand.vmem [shape: f32[2,16,16,4], index: 0, kind: input, shape index: {}]
  %s1 = inlined_call_operand.vmem [shape: f32[36,8], index: 1, kind: input, shape index: {}]
  %s2 = inlined_call_operand.vmem [shape: f32[1,8], index: 2, kind: input, shape index: {}]
  %s3 = inlined_call_operand.vmem [shape: f32[72,8], index: 3, kind: input, shape index: {}]
  %s4 = inlined_call_operand.vmem [shape: f32[1,8], index: 4, kind: input, shape index: {}]
  %s5 = inlined_call_operand.vmem [shape: f32[8,32], index: 5, kind: input, shape index: {}]
  %s6 = inlined_call_operand.vmem [shape: f32[1,32], index: 6, kind: input, shape index: {}]
  %s7 = inlined_call_operand.vmem [shape: f32[32,10], index: 7, kind: input, shape index: {}]
  %s8 = inlined_call_operand.vmem [shape: f32[1,10], index: 8, kind: input, shape index: {}]
  %s9 = inlined_call_operand.hbm [shape: f32[2,1,10], index: 9, kind: output, shape index: {}]
  %s10 = sld [smem:[#allocation0]]
  $region69: #{tpu_custom_call.1} parent=0
    _
  %s12 = ssub.s32 1, %s10
  %s13 = scalar_select 0, %s12, %s10
  $region1: #{tpu_custom_call.1} parent=0
    #allocation4 [shape = 'u8[1024]{0}', space=vmem, size = 0x400, scoped, tag = 'output window, operand 0']
    #allocation5 [shape = 's32[2]{0}', space=sflag, size = 0x8, scoped, tag = 'scoped memory for tpu_custom_call.1']
    %14 = vsyncpa [#allocation5], 0
    %s15 = scalar_lea.sflag [#allocation5], 1
    %16 = vsyncpa %s15, 0
    loop: start=0, step=1, limit=4
    $region2: #{tpu_custom_call.1} parent=1 // loop_pre_header
      _
    $region3: #{tpu_custom_call.1} parent=1 // loop_header
      %s18 = sphi 0, %s22
      %p19 = scmp.ge.s32.totalorder %s18, 4
      %s28 = sphi 0, %s30
      %s31 = sphi 0, %s28
      %s32 = sphi 0, %s31
      %s48 = sphi 0, %s32
      %s52 = sphi 0, %s52
      %s54 = sphi 0, %s52
      %s55 = sphi 0, %s54
      %s69 = sphi 0, %s55
      %s73 = sphi 0, %s73
      %s75 = sphi 0, %s73
      %s76 = sphi 0, %s75
      %s90 = sphi 0, %s76
      %s94 = sphi 0, %s94
      %s96 = sphi 0, %s94
      %s97 = sphi 0, %s96
      %s111 = sphi 0, %s97
      %s115 = sphi 0, %s115
      %s117 = sphi 0, %s115
      %s118 = sphi 0, %s117
      %s132 = sphi 0, %s118
      %s136 = sphi 0, %s136
      %s138 = sphi 0, %s136
      %s139 = sphi 0, %s138
      %s153 = sphi 0, %s139
      %s157 = sphi 0, %s157
      %s159 = sphi 0, %s157
      %s160 = sphi 0, %s159
      %s174 = sphi 0, %s160
      %s178 = sphi 0, %s178
      %s180 = sphi 0, %s178
      %s181 = sphi 0, %s180
      %s195 = sphi 0, %s181
      %s199 = sphi 0, %s199
      %s201 = sphi 0, %s199
      %s202 = sphi 0, %s201
      %s216 = sphi 0, %s202
      %s222 = sphi 0, %s224
      %s225 = sphi 0, %s222
      %s226 = sphi 0, %s225
      %s242 = sphi 0, %s226
    $region4: #{tpu_custom_call.1} parent=1 // loop_header_branch
      %21 = sbr.rel (%p19) target = $region8
    $region5: #{tpu_custom_call.1} parent=1 // loop_body
      %s23 = ssub.s32 %s18, 1
      %s24 = ssub.s32 %s18, 2
      %s25 = sadd.s32 %s18, 1
      %s26 = ssub.s32 %s18, %s25
      %p27 = scmp.eq.s32.totalorder %s26, 0
      %s29 = sadd.s32 %s28, 1
      %s30 = scalar_select %p27, %s28, %s29
      %p33 = pneg %p27
      %p34 = scmp.eq.s32.totalorder %s18, 1
      %p35 = por %p33, %p34
      %p36 = scmp.ne.s32.totalorder %s28, %s31
      %p37 = scmp.eq.s32.totalorder %s18, 0
      %p38 = por %p36, %p37
      %p39 = scmp.ne.s32.totalorder %s28, %s31
      %p40 = scmp.eq.s32.totalorder %s23, 1
      %p41 = por %p39, %p40
      %p42 = scmp.ne.s32.totalorder %s31, %s32
      %p43 = scmp.eq.s32.totalorder %s23, 0
      %p44 = por %p42, %p43
      %p45 = scmp.ne.s32.totalorder %s31, %s32
      %p46 = scmp.eq.s32.totalorder %s24, 1
      %p47 = por %p45, %p46
      %p49 = scmp.ne.s32.totalorder %s32, %s48
      %p50 = scmp.eq.s32.totalorder %s24, 0
      %p51 = por %p49, %p50
      %s53 = sadd.s32 %s52, 1
      %p56 = scmp.eq.s32.totalorder %s18, 1
      %p57 = scmp.ne.s32.totalorder %s52, %s54
      %p58 = scmp.eq.s32.totalorder %s18, 0
      %p59 = por %p57, %p58
      %p60 = scmp.ne.s32.totalorder %s52, %s54
      %p61 = scmp.eq.s32.totalorder %s23, 1
      %p62 = por %p60, %p61
      %p63 = scmp.ne.s32.totalorder %s54, %s55
      %p64 = scmp.eq.s32.totalorder %s23, 0
      %p65 = por %p63, %p64
      %p66 = scmp.ne.s32.totalorder %s54, %s55
      %p67 = scmp.eq.s32.totalorder %s24, 1
      %p68 = por %p66, %p67
      %p70 = scmp.ne.s32.totalorder %s55, %s69
      %p71 = scmp.eq.s32.totalorder %s24, 0
      %p72 = por %p70, %p71
      %s74 = sadd.s32 %s73, 1
      %p77 = scmp.eq.s32.totalorder %s18, 1
      %p78 = scmp.ne.s32.totalorder %s73, %s75
      %p79 = scmp.eq.s32.totalorder %s18, 0
      %p80 = por %p78, %p79
      %p81 = scmp.ne.s32.totalorder %s73, %s75
      %p82 = scmp.eq.s32.totalorder %s23, 1
      %p83 = por %p81, %p82
      %p84 = scmp.ne.s32.totalorder %s75, %s76
      %p85 = scmp.eq.s32.totalorder %s23, 0
      %p86 = por %p84, %p85
      %p87 = scmp.ne.s32.totalorder %s75, %s76
      %p88 = scmp.eq.s32.totalorder %s24, 1
      %p89 = por %p87, %p88
      %p91 = scmp.ne.s32.totalorder %s76, %s90
      %p92 = scmp.eq.s32.totalorder %s24, 0
      %p93 = por %p91, %p92
      %s95 = sadd.s32 %s94, 1
      %p98 = scmp.eq.s32.totalorder %s18, 1
      %p99 = scmp.ne.s32.totalorder %s94, %s96
      %p100 = scmp.eq.s32.totalorder %s18, 0
      %p101 = por %p99, %p100
      %p102 = scmp.ne.s32.totalorder %s94, %s96
      %p103 = scmp.eq.s32.totalorder %s23, 1
      %p104 = por %p102, %p103
      %p105 = scmp.ne.s32.totalorder %s96, %s97
      %p106 = scmp.eq.s32.totalorder %s23, 0
      %p107 = por %p105, %p106
      %p108 = scmp.ne.s32.totalorder %s96, %s97
      %p109 = scmp.eq.s32.totalorder %s24, 1
      %p110 = por %p108, %p109
      %p112 = scmp.ne.s32.totalorder %s97, %s111
      %p113 = scmp.eq.s32.totalorder %s24, 0
      %p114 = por %p112, %p113
      %s116 = sadd.s32 %s115, 1
      %p119 = scmp.eq.s32.totalorder %s18, 1
      %p120 = scmp.ne.s32.totalorder %s115, %s117
      %p121 = scmp.eq.s32.totalorder %s18, 0
      %p122 = por %p120, %p121
      %p123 = scmp.ne.s32.totalorder %s115, %s117
      %p124 = scmp.eq.s32.totalorder %s23, 1
      %p125 = por %p123, %p124
      %p126 = scmp.ne.s32.totalorder %s117, %s118
      %p127 = scmp.eq.s32.totalorder %s23, 0
      %p128 = por %p126, %p127
      %p129 = scmp.ne.s32.totalorder %s117, %s118
      %p130 = scmp.eq.s32.totalorder %s24, 1
      %p131 = por %p129, %p130
      %p133 = scmp.ne.s32.totalorder %s118, %s132
      %p134 = scmp.eq.s32.totalorder %s24, 0
      %p135 = por %p133, %p134
      %s137 = sadd.s32 %s136, 1
      %p140 = scmp.eq.s32.totalorder %s18, 1
      %p141 = scmp.ne.s32.totalorder %s136, %s138
      %p142 = scmp.eq.s32.totalorder %s18, 0
      %p143 = por %p141, %p142
      %p144 = scmp.ne.s32.totalorder %s136, %s138
      %p145 = scmp.eq.s32.totalorder %s23, 1
      %p146 = por %p144, %p145
      %p147 = scmp.ne.s32.totalorder %s138, %s139
      %p148 = scmp.eq.s32.totalorder %s23, 0
      %p149 = por %p147, %p148
      %p150 = scmp.ne.s32.totalorder %s138, %s139
      %p151 = scmp.eq.s32.totalorder %s24, 1
      %p152 = por %p150, %p151
      %p154 = scmp.ne.s32.totalorder %s139, %s153
      %p155 = scmp.eq.s32.totalorder %s24, 0
      %p156 = por %p154, %p155
      %s158 = sadd.s32 %s157, 1
      %p161 = scmp.eq.s32.totalorder %s18, 1
      %p162 = scmp.ne.s32.totalorder %s157, %s159
      %p163 = scmp.eq.s32.totalorder %s18, 0
      %p164 = por %p162, %p163
      %p165 = scmp.ne.s32.totalorder %s157, %s159
      %p166 = scmp.eq.s32.totalorder %s23, 1
      %p167 = por %p165, %p166
      %p168 = scmp.ne.s32.totalorder %s159, %s160
      %p169 = scmp.eq.s32.totalorder %s23, 0
      %p170 = por %p168, %p169
      %p171 = scmp.ne.s32.totalorder %s159, %s160
      %p172 = scmp.eq.s32.totalorder %s24, 1
      %p173 = por %p171, %p172
      %p175 = scmp.ne.s32.totalorder %s160, %s174
      %p176 = scmp.eq.s32.totalorder %s24, 0
      %p177 = por %p175, %p176
      %s179 = sadd.s32 %s178, 1
      %p182 = scmp.eq.s32.totalorder %s18, 1
      %p183 = scmp.ne.s32.totalorder %s178, %s180
      %p184 = scmp.eq.s32.totalorder %s18, 0
      %p185 = por %p183, %p184
      %p186 = scmp.ne.s32.totalorder %s178, %s180
      %p187 = scmp.eq.s32.totalorder %s23, 1
      %p188 = por %p186, %p187
      %p189 = scmp.ne.s32.totalorder %s180, %s181
      %p190 = scmp.eq.s32.totalorder %s23, 0
      %p191 = por %p189, %p190
      %p192 = scmp.ne.s32.totalorder %s180, %s181
      %p193 = scmp.eq.s32.totalorder %s24, 1
      %p194 = por %p192, %p193
      %p196 = scmp.ne.s32.totalorder %s181, %s195
      %p197 = scmp.eq.s32.totalorder %s24, 0
      %p198 = por %p196, %p197
      %s200 = sadd.s32 %s199, 1
      %p203 = scmp.eq.s32.totalorder %s18, 1
      %p204 = scmp.ne.s32.totalorder %s199, %s201
      %p205 = scmp.eq.s32.totalorder %s18, 0
      %p206 = por %p204, %p205
      %p207 = scmp.ne.s32.totalorder %s199, %s201
      %p208 = scmp.eq.s32.totalorder %s23, 1
      %p209 = por %p207, %p208
      %p210 = scmp.ne.s32.totalorder %s201, %s202
      %p211 = scmp.eq.s32.totalorder %s23, 0
      %p212 = por %p210, %p211
      %p213 = scmp.ne.s32.totalorder %s201, %s202
      %p214 = scmp.eq.s32.totalorder %s24, 1
      %p215 = por %p213, %p214
      %p217 = scmp.ne.s32.totalorder %s202, %s216
      %p218 = scmp.eq.s32.totalorder %s24, 0
      %p219 = por %p217, %p218
      %s220 = ssub.s32 %s18, %s25
      %p221 = scmp.eq.s32.totalorder %s220, 0
      %s223 = sadd.s32 %s222, 1
      %s224 = scalar_select %p221, %s222, %s223
      %p227 = pneg %p221
      %p228 = scmp.eq.s32.totalorder %s18, 1
      %p229 = por %p227, %p228
      %p230 = scmp.ne.s32.totalorder %s222, %s225
      %p231 = scmp.eq.s32.totalorder %s18, 0
      %p232 = por %p230, %p231
      %p233 = scmp.ne.s32.totalorder %s222, %s225
      %p234 = scmp.eq.s32.totalorder %s23, 1
      %p235 = por %p233, %p234
      %p236 = scmp.ne.s32.totalorder %s225, %s226
      %p237 = scmp.eq.s32.totalorder %s23, 0
      %p238 = por %p236, %p237
      %p239 = scmp.ne.s32.totalorder %s225, %s226
      %p240 = scmp.eq.s32.totalorder %s24, 1
      %p241 = por %p239, %p240
      %p243 = scmp.ne.s32.totalorder %s226, %s242
      %p244 = scmp.eq.s32.totalorder %s24, 0
      %p245 = por %p243, %p244
      %p246 = scmp.le.s32.totalorder 1, %s18
      %p247 = scmp.lt.s32.totalorder %s18, 3
      %p248 = pnand %p246, %p247
      %p249 = pneg %p248
      // Predicated region
      $region9: #{tpu_custom_call.1} parent=5 // pred_check
        _
      $region10: #{tpu_custom_call.1} parent=5 // pred_check_branch
        %251 = sbr.rel (%p248) target = $region12
      $region11: #{tpu_custom_call.1} parent=5 // pred_region
        %s252 = ssub.s32 %s18, 1
        // Predicated region
        $region13: #{tpu_custom_call.1} parent=11 // pred_check
          %p253 = pneg %p65
        $region14: #{tpu_custom_call.1} parent=11 // pred_check_branch
          %255 = sbr.rel (%p253) target = $region16
        $region15: #{tpu_custom_call.1} parent=11 // pred_region
          _
        $region16: #{tpu_custom_call.1} parent=11 // pred_fallthru
          _
        // Predicated region
        $region17: #{tpu_custom_call.1} parent=11 // pred_check
          %p256 = pneg %p86
        $region18: #{tpu_custom_call.1} parent=11 // pred_check_branch
          %258 = sbr.rel (%p256) target = $region20
        $region19: #{tpu_custom_call.1} parent=11 // pred_region
          _
        $region20: #{tpu_custom_call.1} parent=11 // pred_fallthru
          _
        // Predicated region
        $region21: #{tpu_custom_call.1} parent=11 // pred_check
          %p259 = pneg %p107
        $region22: #{tpu_custom_call.1} parent=11 // pred_check_branch
          %261 = sbr.rel (%p259) target = $region24
        $region23: #{tpu_custom_call.1} parent=11 // pred_region
          _
        $region24: #{tpu_custom_call.1} parent=11 // pred_fallthru
          _
        // Predicated region
        $region25: #{tpu_custom_call.1} parent=11 // pred_check
          %p262 = pneg %p128
        $region26: #{tpu_custom_call.1} parent=11 // pred_check_branch
          %264 = sbr.rel (%p262) target = $region28
        $region27: #{tpu_custom_call.1} parent=11 // pred_region
          _
        $region28: #{tpu_custom_call.1} parent=11 // pred_fallthru
          _
        // Predicated region
        $region29: #{tpu_custom_call.1} parent=11 // pred_check
          %p265 = pneg %p149
        $region30: #{tpu_custom_call.1} parent=11 // pred_check_branch
          %267 = sbr.rel (%p265) target = $region32
        $region31: #{tpu_custom_call.1} parent=11 // pred_region
          _
        $region32: #{tpu_custom_call.1} parent=11 // pred_fallthru
          _
        // Predicated region
        $region33: #{tpu_custom_call.1} parent=11 // pred_check
          %p268 = pneg %p170
        $region34: #{tpu_custom_call.1} parent=11 // pred_check_branch
          %270 = sbr.rel (%p268) target = $region36
        $region35: #{tpu_custom_call.1} parent=11 // pred_region
          _
        $region36: #{tpu_custom_call.1} parent=11 // pred_fallthru
          _
        // Predicated region
        $region37: #{tpu_custom_call.1} parent=11 // pred_check
          %p271 = pneg %p191
        $region38: #{tpu_custom_call.1} parent=11 // pred_check_branch
          %273 = sbr.rel (%p271) target = $region40
        $region39: #{tpu_custom_call.1} parent=11 // pred_region
          _
        $region40: #{tpu_custom_call.1} parent=11 // pred_fallthru
          _
        // Predicated region
        $region41: #{tpu_custom_call.1} parent=11 // pred_check
          %p274 = pneg %p212
        $region42: #{tpu_custom_call.1} parent=11 // pred_check_branch
          %276 = sbr.rel (%p274) target = $region44
        $region43: #{tpu_custom_call.1} parent=11 // pred_region
          _
        $region44: #{tpu_custom_call.1} parent=11 // pred_fallthru
          _
      $region12: #{tpu_custom_call.1} parent=5 // pred_fallthru
        _
      %p277 = scmp.lt.s32.totalorder %s18, 2
      // Predicated region
      $region45: #{tpu_custom_call.1} parent=5 // pred_check
        %p278 = pneg %p277
      $region46: #{tpu_custom_call.1} parent=5 // pred_check_branch
        %280 = sbr.rel (%p278) target = $region48
      $region47: #{tpu_custom_call.1} parent=5 // pred_region
        // Predicated region
        $region49: #{tpu_custom_call.1} parent=47 // pred_check
          %p281 = pneg %p38
        $region50: #{tpu_custom_call.1} parent=47 // pred_check_branch
          %283 = sbr.rel (%p281) target = $region52
        $region51: #{tpu_custom_call.1} parent=47 // pred_region
          %p284 = scmp.lt.s32.totalorder %s18, 1
          %s285 = scalar_select %p284, %s18, 1
          %s286 = smul.addr %s285, 32
          %s287 = smul.addr %s286, 8
          %s288 = scalar_lea.vmem %s0, %s287
        $region52: #{tpu_custom_call.1} parent=47 // pred_fallthru
          _
      $region48: #{tpu_custom_call.1} parent=5 // pred_fallthru
        _
      %p289 = scmp.le.s32.totalorder 1, %s18
      %p290 = scmp.lt.s32.totalorder %s18, 3
      %p291 = pnand %p289, %p290
      %p292 = pneg %p291
      // Predicated region
      $region53: #{tpu_custom_call.1} parent=5 // pred_check
        _
      $region54: #{tpu_custom_call.1} parent=5 // pred_check_branch
        %294 = sbr.rel (%p291) target = $region56
      $region55: #{tpu_custom_call.1} parent=5 // pred_region
        %s295 = ssub.s32 %s18, 1
        %p296 = scmp.lt.s32.totalorder %s23, 1
        %s297 = scalar_select %p296, %s23, 1
        %s298 = smul.addr %s297, 32
        %s299 = smul.addr %s298, 8
        %s300 = scalar_lea.vmem %s0, %s299
        %p301 = pneg %p44
        %p302 = pneg %p41
        %p303 = pneg %p65
        %p304 = pneg %p62
        %p305 = pneg %p86
        %p306 = pneg %p83
        %p307 = pneg %p107
        %p308 = pneg %p104
        %p309 = pneg %p128
        %p310 = pneg %p125
        %p311 = pneg %p149
        %p312 = pneg %p146
        %p313 = pneg %p170
        %p314 = pneg %p167
        %p315 = pneg %p191
        %p316 = pneg %p188
        %p317 = pneg %p212
        %p318 = pneg %p209
        %p319 = pneg %p238
        %p320 = pneg %p235
        %s321 = sand.u32 %s225, 1
        %s322 = scalar_lea.sflag [#allocation5], %s321
        %s323 = sand.u32 %s225, 1
        %s324 = scalar_lea.vmem [#allocation4], %s323
        %p325 = scmp.lt.s32.totalorder %s23, 1
        %s326 = scalar_select %p325, %s23, 1
        %s327 = smul.addr %s326, 32
        %s328 = smul.addr %s327, 8
        %s329 = scalar_lea.vmem %s0, %s328
        %vm330 = vcmask 31744
        %331 = vst.msk [vmem:[#allocation2] sm:$0xff] %vm330, 0.0
        %332 = vst.msk [vmem:[#allocation2 + $0x8] sm:$0xff] %vm330, 0.0
        %vm333 = vcmask 25600
        %334 = vst.msk [vmem:[#allocation2 + $0x10] sm:$0x3] %vm333, 0.0
        %335 = vst.msk [vmem:[#allocation2 + $0x18] sm:$0xff] %vm330, 0.0
        %336 = vst.msk [vmem:[#allocation2 + $0x20] sm:$0xff] %vm330, 0.0
        %337 = vst.msk [vmem:[#allocation2 + $0x28] sm:$0x3] %vm333, 0.0
        %338 = vst.msk [vmem:[#allocation2 + $0x30] sm:$0xff] %vm330, 0.0
        %339 = vst.msk [vmem:[#allocation2 + $0x38] sm:$0xff] %vm330, 0.0
        %340 = vst.msk [vmem:[#allocation2 + $0x40] sm:$0x3] %vm333, 0.0
        %341 = vst.msk [vmem:[#allocation2 + $0x48] sm:$0xff] %vm330, 0.0
        %342 = vst.msk [vmem:[#allocation2 + $0x50] sm:$0xff] %vm330, 0.0
        %343 = vst.msk [vmem:[#allocation2 + $0x58] sm:$0x3] %vm333, 0.0
        %344 = vst.msk [vmem:[#allocation2 + $0x60] sm:$0xff] %vm330, 0.0
        %345 = vst.msk [vmem:[#allocation2 + $0x68] sm:$0xff] %vm330, 0.0
        %346 = vst.msk [vmem:[#allocation2 + $0x70] sm:$0x3] %vm333, 0.0
        %347 = vst.msk [vmem:[#allocation2 + $0x78] sm:$0xff] %vm330, 0.0
        %348 = vst.msk [vmem:[#allocation2 + $0x80] sm:$0xff] %vm330, 0.0
        %349 = vst.msk [vmem:[#allocation2 + $0x88] sm:$0x3] %vm333, 0.0
        %350 = vst.msk [vmem:[#allocation2 + $0x90] sm:$0xff] %vm330, 0.0
        %351 = vst.msk [vmem:[#allocation2 + $0x98] sm:$0xff] %vm330, 0.0
        %352 = vst.msk [vmem:[#allocation2 + $0xa0] sm:$0x3] %vm333, 0.0
        %353 = vst.msk [vmem:[#allocation2 + $0xa8] sm:$0xff] %vm330, 0.0
        %354 = vst.msk [vmem:[#allocation2 + $0xb0] sm:$0xff] %vm330, 0.0
        %355 = vst.msk [vmem:[#allocation2 + $0xb8] sm:$0x3] %vm333, 0.0
        %356 = vst.msk [vmem:[#allocation2 + $0xc0] sm:$0xff] %vm330, 0.0
        %357 = vst.msk [vmem:[#allocation2 + $0xc8] sm:$0xff] %vm330, 0.0
        %358 = vst.msk [vmem:[#allocation2 + $0xd0] sm:$0x3] %vm333, 0.0
        %359 = vst.msk [vmem:[#allocation2 + $0xd8] sm:$0xff] %vm330, 0.0
        %360 = vst.msk [vmem:[#allocation2 + $0xe0] sm:$0xff] %vm330, 0.0
        %361 = vst.msk [vmem:[#allocation2 + $0xe8] sm:$0x3] %vm333, 0.0
        %362 = vst.msk [vmem:[#allocation2 + $0xf0] sm:$0xff] %vm330, 0.0
        %363 = vst.msk [vmem:[#allocation2 + $0xf8] sm:$0xff] %vm330, 0.0
        %364 = vst.msk [vmem:[#allocation2 + $0x100] sm:$0x3] %vm333, 0.0
        %365 = vst.msk [vmem:[#allocation2 + $0x108] sm:$0xff] %vm330, 0.0
        %366 = vst.msk [vmem:[#allocation2 + $0x110] sm:$0xff] %vm330, 0.0
        %367 = vst.msk [vmem:[#allocation2 + $0x118] sm:$0x3] %vm333, 0.0
        %368 = vst.msk [vmem:[#allocation2 + $0x120] sm:$0xff] %vm330, 0.0
        %369 = vst.msk [vmem:[#allocation2 + $0x128] sm:$0xff] %vm330, 0.0
        %370 = vst.msk [vmem:[#allocation2 + $0x130] sm:$0x3] %vm333, 0.0
        %371 = vst.msk [vmem:[#allocation2 + $0x138] sm:$0xff] %vm330, 0.0
        %372 = vst.msk [vmem:[#allocation2 + $0x140] sm:$0xff] %vm330, 0.0
        %373 = vst.msk [vmem:[#allocation2 + $0x148] sm:$0x3] %vm333, 0.0
        %374 = vst.msk [vmem:[#allocation2 + $0x150] sm:$0xff] %vm330, 0.0
        %375 = vst.msk [vmem:[#allocation2 + $0x158] sm:$0xff] %vm330, 0.0
        %376 = vst.msk [vmem:[#allocation2 + $0x160] sm:$0x3] %vm333, 0.0
        %377 = vst.msk [vmem:[#allocation2 + $0x168] sm:$0xff] %vm330, 0.0
        %378 = vst.msk [vmem:[#allocation2 + $0x170] sm:$0xff] %vm330, 0.0
        %379 = vst.msk [vmem:[#allocation2 + $0x178] sm:$0x3] %vm333, 0.0
        %380 = vst.msk [vmem:[#allocation2 + $0x180] sm:$0xff] %vm330, 0.0
        %381 = vst.msk [vmem:[#allocation2 + $0x188] sm:$0xff] %vm330, 0.0
        %382 = vst.msk [vmem:[#allocation2 + $0x190] sm:$0x3] %vm333, 0.0
        %383 = vst.msk [vmem:[#allocation2 + $0x198] sm:$0xff] %vm330, 0.0
        %384 = vst.msk [vmem:[#allocation2 + $0x1a0] sm:$0xff] %vm330, 0.0
        %385 = vst.msk [vmem:[#allocation2 + $0x1a8] sm:$0x3] %vm333, 0.0
        %v386 = vld [vmem:[%s329] sm:$0xff]
        %v387 = vld [vmem:[%s329 + $0x8] sm:$0xff]
        %v388 = vld [vmem:[%s329 + $0x10] sm:$0xff]
        %v389 = vld [vmem:[%s329 + $0x18] sm:$0xff]
        %v390 = vld [vmem:[%s329 + $0x20] sm:$0xff]
        %v391 = vld [vmem:[%s329 + $0x28] sm:$0xff]
        %v392 = vld [vmem:[%s329 + $0x30] sm:$0xff]
        %v393 = vld [vmem:[%s329 + $0x38] sm:$0xff]
        %v394 = vld [vmem:[%s329 + $0x40] sm:$0xff]
        %v395 = vld [vmem:[%s329 + $0x48] sm:$0xff]
        %v396 = vld [vmem:[%s329 + $0x50] sm:$0xff]
        %v397 = vld [vmem:[%s329 + $0x58] sm:$0xff]
        %v398 = vld [vmem:[%s329 + $0x60] sm:$0xff]
        %v399 = vld [vmem:[%s329 + $0x68] sm:$0xff]
        %v400 = vld [vmem:[%s329 + $0x70] sm:$0xff]
        %v401 = vld [vmem:[%s329 + $0x78] sm:$0xff]
        %v402 = vld [vmem:[%s329 + $0x80] sm:$0xff]
        %v403 = vld [vmem:[%s329 + $0x88] sm:$0xff]
        %v404 = vld [vmem:[%s329 + $0x90] sm:$0xff]
        %v405 = vld [vmem:[%s329 + $0x98] sm:$0xff]
        %v406 = vld [vmem:[%s329 + $0xa0] sm:$0xff]
        %v407 = vld [vmem:[%s329 + $0xa8] sm:$0xff]
        %v408 = vld [vmem:[%s329 + $0xb0] sm:$0xff]
        %v409 = vld [vmem:[%s329 + $0xb8] sm:$0xff]
        %v410 = vld [vmem:[%s329 + $0xc0] sm:$0xff]
        %v411 = vld [vmem:[%s329 + $0xc8] sm:$0xff]
        %v412 = vld [vmem:[%s329 + $0xd0] sm:$0xff]
        %v413 = vld [vmem:[%s329 + $0xd8] sm:$0xff]
        %v414 = vld [vmem:[%s329 + $0xe0] sm:$0xff]
        %v415 = vld [vmem:[%s329 + $0xe8] sm:$0xff]
        %v416 = vld [vmem:[%s329 + $0xf0] sm:$0xff]
        %v417 = vld [vmem:[%s329 + $0xf8] sm:$0xff]
        %s418 = scalar_lea.vmem [#allocation2], 24
        %419 = vst.msk [vmem:[%s418 + $0x1] sm:$0xff] %vm330, %v386
        %420 = vst.msk [vmem:[%s418 + $0x9] sm:$0xff] %vm330, %v387
        %421 = vst.msk [vmem:[%s418 + $0x19] sm:$0xff] %vm330, %v388
        %422 = vst.msk [vmem:[%s418 + $0x21] sm:$0xff] %vm330, %v389
        %423 = vst.msk [vmem:[%s418 + $0x31] sm:$0xff] %vm330, %v390
        %424 = vst.msk [vmem:[%s418 + $0x39] sm:$0xff] %vm330, %v391
        %425 = vst.msk [vmem:[%s418 + $0x49] sm:$0xff] %vm330, %v392
        %426 = vst.msk [vmem:[%s418 + $0x51] sm:$0xff] %vm330, %v393
        %427 = vst.msk [vmem:[%s418 + $0x61] sm:$0xff] %vm330, %v394
        %428 = vst.msk [vmem:[%s418 + $0x69] sm:$0xff] %vm330, %v395
        %429 = vst.msk [vmem:[%s418 + $0x79] sm:$0xff] %vm330, %v396
        %430 = vst.msk [vmem:[%s418 + $0x81] sm:$0xff] %vm330, %v397
        %431 = vst.msk [vmem:[%s418 + $0x91] sm:$0xff] %vm330, %v398
        %432 = vst.msk [vmem:[%s418 + $0x99] sm:$0xff] %vm330, %v399
        %433 = vst.msk [vmem:[%s418 + $0xa9] sm:$0xff] %vm330, %v400
        %434 = vst.msk [vmem:[%s418 + $0xb1] sm:$0xff] %vm330, %v401
        %435 = vst.msk [vmem:[%s418 + $0xc1] sm:$0xff] %vm330, %v402
        %436 = vst.msk [vmem:[%s418 + $0xc9] sm:$0xff] %vm330, %v403
        %437 = vst.msk [vmem:[%s418 + $0xd9] sm:$0xff] %vm330, %v404
        %438 = vst.msk [vmem:[%s418 + $0xe1] sm:$0xff] %vm330, %v405
        %439 = vst.msk [vmem:[%s418 + $0xf1] sm:$0xff] %vm330, %v406
        %440 = vst.msk [vmem:[%s418 + $0xf9] sm:$0xff] %vm330, %v407
        %441 = vst.msk [vmem:[%s418 + $0x109] sm:$0xff] %vm330, %v408
        %442 = vst.msk [vmem:[%s418 + $0x111] sm:$0xff] %vm330, %v409
        %443 = vst.msk [vmem:[%s418 + $0x121] sm:$0xff] %vm330, %v410
        %444 = vst.msk [vmem:[%s418 + $0x129] sm:$0xff] %vm330, %v411
        %445 = vst.msk [vmem:[%s418 + $0x139] sm:$0xff] %vm330, %v412
        %446 = vst.msk [vmem:[%s418 + $0x141] sm:$0xff] %vm330, %v413
        %447 = vst.msk [vmem:[%s418 + $0x151] sm:$0xff] %vm330, %v414
        %448 = vst.msk [vmem:[%s418 + $0x159] sm:$0xff] %vm330, %v415
        %449 = vst.msk [vmem:[%s418 + $0x169] sm:$0xff] %vm330, %v416
        %450 = vst.msk [vmem:[%s418 + $0x171] sm:$0xff] %vm330, %v417
        %v451 = vld [vmem:[#allocation2] sm:$0xff]
        %v452 = vld [vmem:[#allocation2 + $0x8] sm:$0xff]
        %v453 = vld [vmem:[#allocation2 + $0x18] sm:$0xff]
        %v454 = vld [vmem:[#allocation2 + $0x20] sm:$0xff]
        %v455 = vld [vmem:[#allocation2 + $0x30] sm:$0xff]
        %v456 = vld [vmem:[#allocation2 + $0x38] sm:$0xff]
        %v457 = vld [vmem:[#allocation2 + $0x48] sm:$0xff]
        %v458 = vld [vmem:[#allocation2 + $0x50] sm:$0xff]
        %v459 = vld [vmem:[#allocation2 + $0x60] sm:$0xff]
        %v460 = vld [vmem:[#allocation2 + $0x68] sm:$0xff]
        %v461 = vld [vmem:[#allocation2 + $0x78] sm:$0xff]
        %v462 = vld [vmem:[#allocation2 + $0x80] sm:$0xff]
        %v463 = vld [vmem:[#allocation2 + $0x90] sm:$0xff]
        %v464 = vld [vmem:[#allocation2 + $0x98] sm:$0xff]
        %v465 = vld [vmem:[#allocation2 + $0xa8] sm:$0xff]
        %v466 = vld [vmem:[#allocation2 + $0xb0] sm:$0xff]
        %v467 = vld [vmem:[#allocation2 + $0xc0] sm:$0xff]
        %v468 = vld [vmem:[#allocation2 + $0xc8] sm:$0xff]
        %v469 = vld [vmem:[#allocation2 + $0xd8] sm:$0xff]
        %v470 = vld [vmem:[#allocation2 + $0xe0] sm:$0xff]
        %v471 = vld [vmem:[#allocation2 + $0xf0] sm:$0xff]
        %v472 = vld [vmem:[#allocation2 + $0xf8] sm:$0xff]
        %v473 = vld [vmem:[#allocation2 + $0x108] sm:$0xff]
        %v474 = vld [vmem:[#allocation2 + $0x110] sm:$0xff]
        %v475 = vld [vmem:[#allocation2 + $0x120] sm:$0xff]
        %v476 = vld [vmem:[#allocation2 + $0x128] sm:$0xff]
        %v477 = vld [vmem:[#allocation2 + $0x138] sm:$0xff]
        %v478 = vld [vmem:[#allocation2 + $0x140] sm:$0xff]
        %v479 = vld [vmem:[#allocation2 + $0x150] sm:$0xff]
        %v480 = vld [vmem:[#allocation2 + $0x158] sm:$0xff]
        %v481 = vld [vmem:[#allocation2 + $0x168] sm:$0xff]
        %v482 = vld [vmem:[#allocation2 + $0x170] sm:$0xff]
        %v483 = vld [vmem:[#allocation2 + $0x1] sm:$0xff]
        %v484 = vld [vmem:[#allocation2 + $0x9] sm:$0xff]
        %v485 = vld [vmem:[#allocation2 + $0x19] sm:$0xff]
        %v486 = vld [vmem:[#allocation2 + $0x21] sm:$0xff]
        %v487 = vld [vmem:[#allocation2 + $0x31] sm:$0xff]
        %v488 = vld [vmem:[#allocation2 + $0x39] sm:$0xff]
        %v489 = vld [vmem:[#allocation2 + $0x49] sm:$0xff]
        %v490 = vld [vmem:[#allocation2 + $0x51] sm:$0xff]
        %v491 = vld [vmem:[#allocation2 + $0x61] sm:$0xff]
        %v492 = vld [vmem:[#allocation2 + $0x69] sm:$0xff]
        %v493 = vld [vmem:[#allocation2 + $0x79] sm:$0xff]
        %v494 = vld [vmem:[#allocation2 + $0x81] sm:$0xff]
        %v495 = vld [vmem:[#allocation2 + $0x91] sm:$0xff]
        %v496 = vld [vmem:[#allocation2 + $0x99] sm:$0xff]
        %v497 = vld [vmem:[#allocation2 + $0xa9] sm:$0xff]
        %v498 = vld [vmem:[#allocation2 + $0xb1] sm:$0xff]
        %v499 = vld [vmem:[#allocation2 + $0xc1] sm:$0xff]
        %v500 = vld [vmem:[#allocation2 + $0xc9] sm:$0xff]
        %v501 = vld [vmem:[#allocation2 + $0xd9] sm:$0xff]
        %v502 = vld [vmem:[#allocation2 + $0xe1] sm:$0xff]
        %v503 = vld [vmem:[#allocation2 + $0xf1] sm:$0xff]
        %v504 = vld [vmem:[#allocation2 + $0xf9] sm:$0xff]
        %v505 = vld [vmem:[#allocation2 + $0x109] sm:$0xff]
        %v506 = vld [vmem:[#allocation2 + $0x111] sm:$0xff]
        %v507 = vld [vmem:[#allocation2 + $0x121] sm:$0xff]
        %v508 = vld [vmem:[#allocation2 + $0x129] sm:$0xff]
        %v509 = vld [vmem:[#allocation2 + $0x139] sm:$0xff]
        %v510 = vld [vmem:[#allocation2 + $0x141] sm:$0xff]
        %v511 = vld [vmem:[#allocation2 + $0x151] sm:$0xff]
        %v512 = vld [vmem:[#allocation2 + $0x159] sm:$0xff]
        %v513 = vld [vmem:[#allocation2 + $0x169] sm:$0xff]
        %v514 = vld [vmem:[#allocation2 + $0x171] sm:$0xff]
        %v515 = vld [vmem:[#allocation2 + $0x2] sm:$0xff]
        %v516 = vld [vmem:[#allocation2 + $0xa] sm:$0xff]
        %v517 = vld [vmem:[#allocation2 + $0x1a] sm:$0xff]
        %v518 = vld [vmem:[#allocation2 + $0x22] sm:$0xff]
        %v519 = vld [vmem:[#allocation2 + $0x32] sm:$0xff]
        %v520 = vld [vmem:[#allocation2 + $0x3a] sm:$0xff]
        %v521 = vld [vmem:[#allocation2 + $0x4a] sm:$0xff]
        %v522 = vld [vmem:[#allocation2 + $0x52] sm:$0xff]
        %v523 = vld [vmem:[#allocation2 + $0x62] sm:$0xff]
        %v524 = vld [vmem:[#allocation2 + $0x6a] sm:$0xff]
        %v525 = vld [vmem:[#allocation2 + $0x7a] sm:$0xff]
        %v526 = vld [vmem:[#allocation2 + $0x82] sm:$0xff]
        %v527 = vld [vmem:[#allocation2 + $0x92] sm:$0xff]
        %v528 = vld [vmem:[#allocation2 + $0x9a] sm:$0xff]
        %v529 = vld [vmem:[#allocation2 + $0xaa] sm:$0xff]
        %v530 = vld [vmem:[#allocation2 + $0xb2] sm:$0xff]
        %v531 = vld [vmem:[#allocation2 + $0xc2] sm:$0xff]
        %v532 = vld [vmem:[#allocation2 + $0xca] sm:$0xff]
        %v533 = vld [vmem:[#allocation2 + $0xda] sm:$0xff]
        %v534 = vld [vmem:[#allocation2 + $0xe2] sm:$0xff]
        %v535 = vld [vmem:[#allocation2 + $0xf2] sm:$0xff]
        %v536 = vld [vmem:[#allocation2 + $0xfa] sm:$0xff]
        %v537 = vld [vmem:[#allocation2 + $0x10a] sm:$0xff]
        %v538 = vld [vmem:[#allocation2 + $0x112] sm:$0xff]
        %v539 = vld [vmem:[#allocation2 + $0x122] sm:$0xff]
        %v540 = vld [vmem:[#allocation2 + $0x12a] sm:$0xff]
        %v541 = vld [vmem:[#allocation2 + $0x13a] sm:$0xff]
        %v542 = vld [vmem:[#allocation2 + $0x142] sm:$0xff]
        %v543 = vld [vmem:[#allocation2 + $0x152] sm:$0xff]
        %v544 = vld [vmem:[#allocation2 + $0x15a] sm:$0xff]
        %v545 = vld [vmem:[#allocation2 + $0x16a] sm:$0xff]
        %v546 = vld [vmem:[#allocation2 + $0x172] sm:$0xff]
        %v547 = vld [vmem:[%s418] sm:$0xff]
        %v548 = vld [vmem:[%s418 + $0x8] sm:$0xff]
        %v549 = vld [vmem:[%s418 + $0x18] sm:$0xff]
        %v550 = vld [vmem:[%s418 + $0x20] sm:$0xff]
        %v551 = vld [vmem:[%s418 + $0x30] sm:$0xff]
        %v552 = vld [vmem:[%s418 + $0x38] sm:$0xff]
        %v553 = vld [vmem:[%s418 + $0x48] sm:$0xff]
        %v554 = vld [vmem:[%s418 + $0x50] sm:$0xff]
        %v555 = vld [vmem:[%s418 + $0x60] sm:$0xff]
        %v556 = vld [vmem:[%s418 + $0x68] sm:$0xff]
        %v557 = vld [vmem:[%s418 + $0x78] sm:$0xff]
        %v558 = vld [vmem:[%s418 + $0x80] sm:$0xff]
        %v559 = vld [vmem:[%s418 + $0x90] sm:$0xff]
        %v560 = vld [vmem:[%s418 + $0x98] sm:$0xff]
        %v561 = vld [vmem:[%s418 + $0xa8] sm:$0xff]
        %v562 = vld [vmem:[%s418 + $0xb0] sm:$0xff]
        %v563 = vld [vmem:[%s418 + $0xc0] sm:$0xff]
        %v564 = vld [vmem:[%s418 + $0xc8] sm:$0xff]
        %v565 = vld [vmem:[%s418 + $0xd8] sm:$0xff]
        %v566 = vld [vmem:[%s418 + $0xe0] sm:$0xff]
        %v567 = vld [vmem:[%s418 + $0xf0] sm:$0xff]
        %v568 = vld [vmem:[%s418 + $0xf8] sm:$0xff]
        %v569 = vld [vmem:[%s418 + $0x108] sm:$0xff]
        %v570 = vld [vmem:[%s418 + $0x110] sm:$0xff]
        %v571 = vld [vmem:[%s418 + $0x120] sm:$0xff]
        %v572 = vld [vmem:[%s418 + $0x128] sm:$0xff]
        %v573 = vld [vmem:[%s418 + $0x138] sm:$0xff]
        %v574 = vld [vmem:[%s418 + $0x140] sm:$0xff]
        %v575 = vld [vmem:[%s418 + $0x150] sm:$0xff]
        %v576 = vld [vmem:[%s418 + $0x158] sm:$0xff]
        %v577 = vld [vmem:[%s418 + $0x168] sm:$0xff]
        %v578 = vld [vmem:[%s418 + $0x170] sm:$0xff]
        %v579 = vld [vmem:[%s418 + $0x1] sm:$0xff]
        %v580 = vld [vmem:[%s418 + $0x9] sm:$0xff]
        %v581 = vld [vmem:[%s418 + $0x19] sm:$0xff]
        %v582 = vld [vmem:[%s418 + $0x21] sm:$0xff]
        %v583 = vld [vmem:[%s418 + $0x31] sm:$0xff]
        %v584 = vld [vmem:[%s418 + $0x39] sm:$0xff]
        %v585 = vld [vmem:[%s418 + $0x49] sm:$0xff]
        %v586 = vld [vmem:[%s418 + $0x51] sm:$0xff]
        %v587 = vld [vmem:[%s418 + $0x61] sm:$0xff]
        %v588 = vld [vmem:[%s418 + $0x69] sm:$0xff]
        %v589 = vld [vmem:[%s418 + $0x79] sm:$0xff]
        %v590 = vld [vmem:[%s418 + $0x81] sm:$0xff]
        %v591 = vld [vmem:[%s418 + $0x91] sm:$0xff]
        %v592 = vld [vmem:[%s418 + $0x99] sm:$0xff]
        %v593 = vld [vmem:[%s418 + $0xa9] sm:$0xff]
        %v594 = vld [vmem:[%s418 + $0xb1] sm:$0xff]
        %v595 = vld [vmem:[%s418 + $0xc1] sm:$0xff]
        %v596 = vld [vmem:[%s418 + $0xc9] sm:$0xff]
        %v597 = vld [vmem:[%s418 + $0xd9] sm:$0xff]
        %v598 = vld [vmem:[%s418 + $0xe1] sm:$0xff]
        %v599 = vld [vmem:[%s418 + $0xf1] sm:$0xff]
        %v600 = vld [vmem:[%s418 + $0xf9] sm:$0xff]
        %v601 = vld [vmem:[%s418 + $0x109] sm:$0xff]
        %v602 = vld [vmem:[%s418 + $0x111] sm:$0xff]
        %v603 = vld [vmem:[%s418 + $0x121] sm:$0xff]
        %v604 = vld [vmem:[%s418 + $0x129] sm:$0xff]
        %v605 = vld [vmem:[%s418 + $0x139] sm:$0xff]
        %v606 = vld [vmem:[%s418 + $0x141] sm:$0xff]
        %v607 = vld [vmem:[%s418 + $0x151] sm:$0xff]
        %v608 = vld [vmem:[%s418 + $0x159] sm:$0xff]
        %v609 = vld [vmem:[%s418 + $0x169] sm:$0xff]
        %v610 = vld [vmem:[%s418 + $0x171] sm:$0xff]
        %v611 = vld [vmem:[%s418 + $0x2] sm:$0xff]
        %v612 = vld [vmem:[%s418 + $0xa] sm:$0xff]
        %v613 = vld [vmem:[%s418 + $0x1a] sm:$0xff]
        %v614 = vld [vmem:[%s418 + $0x22] sm:$0xff]
        %v615 = vld [vmem:[%s418 + $0x32] sm:$0xff]
        %v616 = vld [vmem:[%s418 + $0x3a] sm:$0xff]
        %v617 = vld [vmem:[%s418 + $0x4a] sm:$0xff]
        %v618 = vld [vmem:[%s418 + $0x52] sm:$0xff]
        %v619 = vld [vmem:[%s418 + $0x62] sm:$0xff]
        %v620 = vld [vmem:[%s418 + $0x6a] sm:$0xff]
        %v621 = vld [vmem:[%s418 + $0x7a] sm:$0xff]
        %v622 = vld [vmem:[%s418 + $0x82] sm:$0xff]
        %v623 = vld [vmem:[%s418 + $0x92] sm:$0xff]
        %v624 = vld [vmem:[%s418 + $0x9a] sm:$0xff]
        %v625 = vld [vmem:[%s418 + $0xaa] sm:$0xff]
        %v626 = vld [vmem:[%s418 + $0xb2] sm:$0xff]
        %v627 = vld [vmem:[%s418 + $0xc2] sm:$0xff]
        %v628 = vld [vmem:[%s418 + $0xca] sm:$0xff]
        %v629 = vld [vmem:[%s418 + $0xda] sm:$0xff]
        %v630 = vld [vmem:[%s418 + $0xe2] sm:$0xff]
        %v631 = vld [vmem:[%s418 + $0xf2] sm:$0xff]
        %v632 = vld [vmem:[%s418 + $0xfa] sm:$0xff]
        %v633 = vld [vmem:[%s418 + $0x10a] sm:$0xff]
        %v634 = vld [vmem:[%s418 + $0x112] sm:$0xff]
        %v635 = vld [vmem:[%s418 + $0x122] sm:$0xff]
        %v636 = vld [vmem:[%s418 + $0x12a] sm:$0xff]
        %v637 = vld [vmem:[%s418 + $0x13a] sm:$0xff]
        %v638 = vld [vmem:[%s418 + $0x142] sm:$0xff]
        %v639 = vld [vmem:[%s418 + $0x152] sm:$0xff]
        %v640 = vld [vmem:[%s418 + $0x15a] sm:$0xff]
        %v641 = vld [vmem:[%s418 + $0x16a] sm:$0xff]
        %v642 = vld [vmem:[%s418 + $0x172] sm:$0xff]
        %s643 = scalar_lea.vmem [#allocation2], 48
        %v644 = vld [vmem:[%s643] sm:$0xff]
        %v645 = vld [vmem:[%s643 + $0x8] sm:$0xff]
        %v646 = vld [vmem:[%s643 + $0x18] sm:$0xff]
        %v647 = vld [vmem:[%s643 + $0x20] sm:$0xff]
        %v648 = vld [vmem:[%s643 + $0x30] sm:$0xff]
        %v649 = vld [vmem:[%s643 + $0x38] sm:$0xff]
        %v650 = vld [vmem:[%s643 + $0x48] sm:$0xff]
        %v651 = vld [vmem:[%s643 + $0x50] sm:$0xff]
        %v652 = vld [vmem:[%s643 + $0x60] sm:$0xff]
        %v653 = vld [vmem:[%s643 + $0x68] sm:$0xff]
        %v654 = vld [vmem:[%s643 + $0x78] sm:$0xff]
        %v655 = vld [vmem:[%s643 + $0x80] sm:$0xff]
        %v656 = vld [vmem:[%s643 + $0x90] sm:$0xff]
        %v657 = vld [vmem:[%s643 + $0x98] sm:$0xff]
        %v658 = vld [vmem:[%s643 + $0xa8] sm:$0xff]
        %v659 = vld [vmem:[%s643 + $0xb0] sm:$0xff]
        %v660 = vld [vmem:[%s643 + $0xc0] sm:$0xff]
        %v661 = vld [vmem:[%s643 + $0xc8] sm:$0xff]
        %v662 = vld [vmem:[%s643 + $0xd8] sm:$0xff]
        %v663 = vld [vmem:[%s643 + $0xe0] sm:$0xff]
        %v664 = vld [vmem:[%s643 + $0xf0] sm:$0xff]
        %v665 = vld [vmem:[%s643 + $0xf8] sm:$0xff]
        %v666 = vld [vmem:[%s643 + $0x108] sm:$0xff]
        %v667 = vld [vmem:[%s643 + $0x110] sm:$0xff]
        %v668 = vld [vmem:[%s643 + $0x120] sm:$0xff]
        %v669 = vld [vmem:[%s643 + $0x128] sm:$0xff]
        %v670 = vld [vmem:[%s643 + $0x138] sm:$0xff]
        %v671 = vld [vmem:[%s643 + $0x140] sm:$0xff]
        %v672 = vld [vmem:[%s643 + $0x150] sm:$0xff]
        %v673 = vld [vmem:[%s643 + $0x158] sm:$0xff]
        %v674 = vld [vmem:[%s643 + $0x168] sm:$0xff]
        %v675 = vld [vmem:[%s643 + $0x170] sm:$0xff]
        %v676 = vld [vmem:[%s643 + $0x1] sm:$0xff]
        %v677 = vld [vmem:[%s643 + $0x9] sm:$0xff]
        %v678 = vld [vmem:[%s643 + $0x19] sm:$0xff]
        %v679 = vld [vmem:[%s643 + $0x21] sm:$0xff]
        %v680 = vld [vmem:[%s643 + $0x31] sm:$0xff]
        %v681 = vld [vmem:[%s643 + $0x39] sm:$0xff]
        %v682 = vld [vmem:[%s643 + $0x49] sm:$0xff]
        %v683 = vld [vmem:[%s643 + $0x51] sm:$0xff]
        %v684 = vld [vmem:[%s643 + $0x61] sm:$0xff]
        %v685 = vld [vmem:[%s643 + $0x69] sm:$0xff]
        %v686 = vld [vmem:[%s643 + $0x79] sm:$0xff]
        %v687 = vld [vmem:[%s643 + $0x81] sm:$0xff]
        %v688 = vld [vmem:[%s643 + $0x91] sm:$0xff]
        %v689 = vld [vmem:[%s643 + $0x99] sm:$0xff]
        %v690 = vld [vmem:[%s643 + $0xa9] sm:$0xff]
        %v691 = vld [vmem:[%s643 + $0xb1] sm:$0xff]
        %v692 = vld [vmem:[%s643 + $0xc1] sm:$0xff]
        %v693 = vld [vmem:[%s643 + $0xc9] sm:$0xff]
        %v694 = vld [vmem:[%s643 + $0xd9] sm:$0xff]
        %v695 = vld [vmem:[%s643 + $0xe1] sm:$0xff]
        %v696 = vld [vmem:[%s643 + $0xf1] sm:$0xff]
        %v697 = vld [vmem:[%s643 + $0xf9] sm:$0xff]
        %v698 = vld [vmem:[%s643 + $0x109] sm:$0xff]
        %v699 = vld [vmem:[%s643 + $0x111] sm:$0xff]
        %v700 = vld [vmem:[%s643 + $0x121] sm:$0xff]
        %v701 = vld [vmem:[%s643 + $0x129] sm:$0xff]
        %v702 = vld [vmem:[%s643 + $0x139] sm:$0xff]
        %v703 = vld [vmem:[%s643 + $0x141] sm:$0xff]
        %v704 = vld [vmem:[%s643 + $0x151] sm:$0xff]
        %v705 = vld [vmem:[%s643 + $0x159] sm:$0xff]
        %v706 = vld [vmem:[%s643 + $0x169] sm:$0xff]
        %v707 = vld [vmem:[%s643 + $0x171] sm:$0xff]
        %v708 = vld [vmem:[%s643 + $0x2] sm:$0xff]
        %v709 = vld [vmem:[%s643 + $0xa] sm:$0xff]
        %v710 = vld [vmem:[%s643 + $0x1a] sm:$0xff]
        %v711 = vld [vmem:[%s643 + $0x22] sm:$0xff]
        %v712 = vld [vmem:[%s643 + $0x32] sm:$0xff]
        %v713 = vld [vmem:[%s643 + $0x3a] sm:$0xff]
        %v714 = vld [vmem:[%s643 + $0x4a] sm:$0xff]
        %v715 = vld [vmem:[%s643 + $0x52] sm:$0xff]
        %v716 = vld [vmem:[%s643 + $0x62] sm:$0xff]
        %v717 = vld [vmem:[%s643 + $0x6a] sm:$0xff]
        %v718 = vld [vmem:[%s643 + $0x7a] sm:$0xff]
        %v719 = vld [vmem:[%s643 + $0x82] sm:$0xff]
        %v720 = vld [vmem:[%s643 + $0x92] sm:$0xff]
        %v721 = vld [vmem:[%s643 + $0x9a] sm:$0xff]
        %v722 = vld [vmem:[%s643 + $0xaa] sm:$0xff]
        %v723 = vld [vmem:[%s643 + $0xb2] sm:$0xff]
        %v724 = vld [vmem:[%s643 + $0xc2] sm:$0xff]
        %v725 = vld [vmem:[%s643 + $0xca] sm:$0xff]
        %v726 = vld [vmem:[%s643 + $0xda] sm:$0xff]
        %v727 = vld [vmem:[%s643 + $0xe2] sm:$0xff]
        %v728 = vld [vmem:[%s643 + $0xf2] sm:$0xff]
        %v729 = vld [vmem:[%s643 + $0xfa] sm:$0xff]
        %v730 = vld [vmem:[%s643 + $0x10a] sm:$0xff]
        %v731 = vld [vmem:[%s643 + $0x112] sm:$0xff]
        %v732 = vld [vmem:[%s643 + $0x122] sm:$0xff]
        %v733 = vld [vmem:[%s643 + $0x12a] sm:$0xff]
        %v734 = vld [vmem:[%s643 + $0x13a] sm:$0xff]
        %v735 = vld [vmem:[%s643 + $0x142] sm:$0xff]
        %v736 = vld [vmem:[%s643 + $0x152] sm:$0xff]
        %v737 = vld [vmem:[%s643 + $0x15a] sm:$0xff]
        %v738 = vld [vmem:[%s643 + $0x16a] sm:$0xff]
        %v739 = vld [vmem:[%s643 + $0x172] sm:$0xff]
        %772 = vrot.lane.b32.xlu0 %v483, 4
        %v773 = vpop.permute.xlu0 %772
        %774 = vrot.lane.b32.xlu0 %v484, 4
        %v775 = vpop.permute.xlu0 %774
        %776 = vrot.lane.b32.xlu0 %v485, 4
        %v777 = vpop.permute.xlu0 %776
        %778 = vrot.lane.b32.xlu0 %v486, 4
        %v779 = vpop.permute.xlu0 %778
        %780 = vrot.lane.b32.xlu0 %v487, 4
        %v781 = vpop.permute.xlu0 %780
        %782 = vrot.lane.b32.xlu0 %v488, 4
        %v783 = vpop.permute.xlu0 %782
        %784 = vrot.lane.b32.xlu0 %v489, 4
        %v785 = vpop.permute.xlu0 %784
        %786 = vrot.lane.b32.xlu0 %v490, 4
        %v787 = vpop.permute.xlu0 %786
        %788 = vrot.lane.b32.xlu0 %v491, 4
        %v789 = vpop.permute.xlu0 %788
        %790 = vrot.lane.b32.xlu0 %v492, 4
        %v791 = vpop.permute.xlu0 %790
        %792 = vrot.lane.b32.xlu0 %v493, 4
        %v793 = vpop.permute.xlu0 %792
        %794 = vrot.lane.b32.xlu0 %v494, 4
        %v795 = vpop.permute.xlu0 %794
        %796 = vrot.lane.b32.xlu0 %v495, 4
        %v797 = vpop.permute.xlu0 %796
        %798 = vrot.lane.b32.xlu0 %v496, 4
        %v799 = vpop.permute.xlu0 %798
        %800 = vrot.lane.b32.xlu0 %v497, 4
        %v801 = vpop.permute.xlu0 %800
        %802 = vrot.lane.b32.xlu0 %v498, 4
        %v803 = vpop.permute.xlu0 %802
        %804 = vrot.lane.b32.xlu0 %v499, 4
        %v805 = vpop.permute.xlu0 %804
        %806 = vrot.lane.b32.xlu0 %v500, 4
        %v807 = vpop.permute.xlu0 %806
        %808 = vrot.lane.b32.xlu0 %v501, 4
        %v809 = vpop.permute.xlu0 %808
        %810 = vrot.lane.b32.xlu0 %v502, 4
        %v811 = vpop.permute.xlu0 %810
        %812 = vrot.lane.b32.xlu0 %v503, 4
        %v813 = vpop.permute.xlu0 %812
        %814 = vrot.lane.b32.xlu0 %v504, 4
        %v815 = vpop.permute.xlu0 %814
        %816 = vrot.lane.b32.xlu0 %v505, 4
        %v817 = vpop.permute.xlu0 %816
        %818 = vrot.lane.b32.xlu0 %v506, 4
        %v819 = vpop.permute.xlu0 %818
        %820 = vrot.lane.b32.xlu0 %v507, 4
        %v821 = vpop.permute.xlu0 %820
        %822 = vrot.lane.b32.xlu0 %v508, 4
        %v823 = vpop.permute.xlu0 %822
        %824 = vrot.lane.b32.xlu0 %v509, 4
        %v825 = vpop.permute.xlu0 %824
        %826 = vrot.lane.b32.xlu0 %v510, 4
        %v827 = vpop.permute.xlu0 %826
        %828 = vrot.lane.b32.xlu0 %v511, 4
        %v829 = vpop.permute.xlu0 %828
        %830 = vrot.lane.b32.xlu0 %v512, 4
        %v831 = vpop.permute.xlu0 %830
        %832 = vrot.lane.b32.xlu0 %v513, 4
        %v833 = vpop.permute.xlu0 %832
        %834 = vrot.lane.b32.xlu0 %v514, 4
        %v835 = vpop.permute.xlu0 %834
        %900 = vrot.lane.b32.xlu0 %v515, 8
        %v901 = vpop.permute.xlu0 %900
        %902 = vrot.lane.b32.xlu0 %v516, 8
        %v903 = vpop.permute.xlu0 %902
        %904 = vrot.lane.b32.xlu0 %v517, 8
        %v905 = vpop.permute.xlu0 %904
        %906 = vrot.lane.b32.xlu0 %v518, 8
        %v907 = vpop.permute.xlu0 %906
        %908 = vrot.lane.b32.xlu0 %v519, 8
        %v909 = vpop.permute.xlu0 %908
        %910 = vrot.lane.b32.xlu0 %v520, 8
        %v911 = vpop.permute.xlu0 %910
        %912 = vrot.lane.b32.xlu0 %v521, 8
        %v913 = vpop.permute.xlu0 %912
        %914 = vrot.lane.b32.xlu0 %v522, 8
        %v915 = vpop.permute.xlu0 %914
        %916 = vrot.lane.b32.xlu0 %v523, 8
        %v917 = vpop.permute.xlu0 %916
        %918 = vrot.lane.b32.xlu0 %v524, 8
        %v919 = vpop.permute.xlu0 %918
        %920 = vrot.lane.b32.xlu0 %v525, 8
        %v921 = vpop.permute.xlu0 %920
        %922 = vrot.lane.b32.xlu0 %v526, 8
        %v923 = vpop.permute.xlu0 %922
        %924 = vrot.lane.b32.xlu0 %v527, 8
        %v925 = vpop.permute.xlu0 %924
        %926 = vrot.lane.b32.xlu0 %v528, 8
        %v927 = vpop.permute.xlu0 %926
        %928 = vrot.lane.b32.xlu0 %v529, 8
        %v929 = vpop.permute.xlu0 %928
        %930 = vrot.lane.b32.xlu0 %v530, 8
        %v931 = vpop.permute.xlu0 %930
        %932 = vrot.lane.b32.xlu0 %v531, 8
        %v933 = vpop.permute.xlu0 %932
        %934 = vrot.lane.b32.xlu0 %v532, 8
        %v935 = vpop.permute.xlu0 %934
        %936 = vrot.lane.b32.xlu0 %v533, 8
        %v937 = vpop.permute.xlu0 %936
        %938 = vrot.lane.b32.xlu0 %v534, 8
        %v939 = vpop.permute.xlu0 %938
        %940 = vrot.lane.b32.xlu0 %v535, 8
        %v941 = vpop.permute.xlu0 %940
        %942 = vrot.lane.b32.xlu0 %v536, 8
        %v943 = vpop.permute.xlu0 %942
        %944 = vrot.lane.b32.xlu0 %v537, 8
        %v945 = vpop.permute.xlu0 %944
        %946 = vrot.lane.b32.xlu0 %v538, 8
        %v947 = vpop.permute.xlu0 %946
        %948 = vrot.lane.b32.xlu0 %v539, 8
        %v949 = vpop.permute.xlu0 %948
        %950 = vrot.lane.b32.xlu0 %v540, 8
        %v951 = vpop.permute.xlu0 %950
        %952 = vrot.lane.b32.xlu0 %v541, 8
        %v953 = vpop.permute.xlu0 %952
        %954 = vrot.lane.b32.xlu0 %v542, 8
        %v955 = vpop.permute.xlu0 %954
        %956 = vrot.lane.b32.xlu0 %v543, 8
        %v957 = vpop.permute.xlu0 %956
        %958 = vrot.lane.b32.xlu0 %v544, 8
        %v959 = vpop.permute.xlu0 %958
        %960 = vrot.lane.b32.xlu0 %v545, 8
        %v961 = vpop.permute.xlu0 %960
        %962 = vrot.lane.b32.xlu0 %v546, 8
        %v963 = vpop.permute.xlu0 %962
        %1028 = vrot.lane.b32.xlu0 %v547, 12
        %v1029 = vpop.permute.xlu0 %1028
        %1030 = vrot.lane.b32.xlu0 %v548, 12
        %v1031 = vpop.permute.xlu0 %1030
        %1032 = vrot.lane.b32.xlu0 %v549, 12
        %v1033 = vpop.permute.xlu0 %1032
        %1034 = vrot.lane.b32.xlu0 %v550, 12
        %v1035 = vpop.permute.xlu0 %1034
        %1036 = vrot.lane.b32.xlu0 %v551, 12
        %v1037 = vpop.permute.xlu0 %1036
        %1038 = vrot.lane.b32.xlu0 %v552, 12
        %v1039 = vpop.permute.xlu0 %1038
        %1040 = vrot.lane.b32.xlu0 %v553, 12
        %v1041 = vpop.permute.xlu0 %1040
        %1042 = vrot.lane.b32.xlu0 %v554, 12
        %v1043 = vpop.permute.xlu0 %1042
        %1044 = vrot.lane.b32.xlu0 %v555, 12
        %v1045 = vpop.permute.xlu0 %1044
        %1046 = vrot.lane.b32.xlu0 %v556, 12
        %v1047 = vpop.permute.xlu0 %1046
        %1048 = vrot.lane.b32.xlu0 %v557, 12
        %v1049 = vpop.permute.xlu0 %1048
        %1050 = vrot.lane.b32.xlu0 %v558, 12
        %v1051 = vpop.permute.xlu0 %1050
        %1052 = vrot.lane.b32.xlu0 %v559, 12
        %v1053 = vpop.permute.xlu0 %1052
        %1054 = vrot.lane.b32.xlu0 %v560, 12
        %v1055 = vpop.permute.xlu0 %1054
        %1056 = vrot.lane.b32.xlu0 %v561, 12
        %v1057 = vpop.permute.xlu0 %1056
        %1058 = vrot.lane.b32.xlu0 %v562, 12
        %v1059 = vpop.permute.xlu0 %1058
        %1060 = vrot.lane.b32.xlu0 %v563, 12
        %v1061 = vpop.permute.xlu0 %1060
        %1062 = vrot.lane.b32.xlu0 %v564, 12
        %v1063 = vpop.permute.xlu0 %1062
        %1064 = vrot.lane.b32.xlu0 %v565, 12
        %v1065 = vpop.permute.xlu0 %1064
        %1066 = vrot.lane.b32.xlu0 %v566, 12
        %v1067 = vpop.permute.xlu0 %1066
        %1068 = vrot.lane.b32.xlu0 %v567, 12
        %v1069 = vpop.permute.xlu0 %1068
        %1070 = vrot.lane.b32.xlu0 %v568, 12
        %v1071 = vpop.permute.xlu0 %1070
        %1072 = vrot.lane.b32.xlu0 %v569, 12
        %v1073 = vpop.permute.xlu0 %1072
        %1074 = vrot.lane.b32.xlu0 %v570, 12
        %v1075 = vpop.permute.xlu0 %1074
        %1076 = vrot.lane.b32.xlu0 %v571, 12
        %v1077 = vpop.permute.xlu0 %1076
        %1078 = vrot.lane.b32.xlu0 %v572, 12
        %v1079 = vpop.permute.xlu0 %1078
        %1080 = vrot.lane.b32.xlu0 %v573, 12
        %v1081 = vpop.permute.xlu0 %1080
        %1082 = vrot.lane.b32.xlu0 %v574, 12
        %v1083 = vpop.permute.xlu0 %1082
        %1084 = vrot.lane.b32.xlu0 %v575, 12
        %v1085 = vpop.permute.xlu0 %1084
        %1086 = vrot.lane.b32.xlu0 %v576, 12
        %v1087 = vpop.permute.xlu0 %1086
        %1088 = vrot.lane.b32.xlu0 %v577, 12
        %v1089 = vpop.permute.xlu0 %1088
        %1090 = vrot.lane.b32.xlu0 %v578, 12
        %v1091 = vpop.permute.xlu0 %1090
        %1156 = vrot.lane.b32.xlu0 %v579, 16
        %v1157 = vpop.permute.xlu0 %1156
        %1158 = vrot.lane.b32.xlu0 %v580, 16
        %v1159 = vpop.permute.xlu0 %1158
        %1160 = vrot.lane.b32.xlu0 %v581, 16
        %v1161 = vpop.permute.xlu0 %1160
        %1162 = vrot.lane.b32.xlu0 %v582, 16
        %v1163 = vpop.permute.xlu0 %1162
        %1164 = vrot.lane.b32.xlu0 %v583, 16
        %v1165 = vpop.permute.xlu0 %1164
        %1166 = vrot.lane.b32.xlu0 %v584, 16
        %v1167 = vpop.permute.xlu0 %1166
        %1168 = vrot.lane.b32.xlu0 %v585, 16
        %v1169 = vpop.permute.xlu0 %1168
        %1170 = vrot.lane.b32.xlu0 %v586, 16
        %v1171 = vpop.permute.xlu0 %1170
        %1172 = vrot.lane.b32.xlu0 %v587, 16
        %v1173 = vpop.permute.xlu0 %1172
        %1174 = vrot.lane.b32.xlu0 %v588, 16
        %v1175 = vpop.permute.xlu0 %1174
        %1176 = vrot.lane.b32.xlu0 %v589, 16
        %v1177 = vpop.permute.xlu0 %1176
        %1178 = vrot.lane.b32.xlu0 %v590, 16
        %v1179 = vpop.permute.xlu0 %1178
        %1180 = vrot.lane.b32.xlu0 %v591, 16
        %v1181 = vpop.permute.xlu0 %1180
        %1182 = vrot.lane.b32.xlu0 %v592, 16
        %v1183 = vpop.permute.xlu0 %1182
        %1184 = vrot.lane.b32.xlu0 %v593, 16
        %v1185 = vpop.permute.xlu0 %1184
        %1186 = vrot.lane.b32.xlu0 %v594, 16
        %v1187 = vpop.permute.xlu0 %1186
        %1188 = vrot.lane.b32.xlu0 %v595, 16
        %v1189 = vpop.permute.xlu0 %1188
        %1190 = vrot.lane.b32.xlu0 %v596, 16
        %v1191 = vpop.permute.xlu0 %1190
        %1192 = vrot.lane.b32.xlu0 %v597, 16
        %v1193 = vpop.permute.xlu0 %1192
        %1194 = vrot.lane.b32.xlu0 %v598, 16
        %v1195 = vpop.permute.xlu0 %1194
        %1196 = vrot.lane.b32.xlu0 %v599, 16
        %v1197 = vpop.permute.xlu0 %1196
        %1198 = vrot.lane.b32.xlu0 %v600, 16
        %v1199 = vpop.permute.xlu0 %1198
        %1200 = vrot.lane.b32.xlu0 %v601, 16
        %v1201 = vpop.permute.xlu0 %1200
        %1202 = vrot.lane.b32.xlu0 %v602, 16
        %v1203 = vpop.permute.xlu0 %1202
        %1204 = vrot.lane.b32.xlu0 %v603, 16
        %v1205 = vpop.permute.xlu0 %1204
        %1206 = vrot.lane.b32.xlu0 %v604, 16
        %v1207 = vpop.permute.xlu0 %1206
        %1208 = vrot.lane.b32.xlu0 %v605, 16
        %v1209 = vpop.permute.xlu0 %1208
        %1210 = vrot.lane.b32.xlu0 %v606, 16
        %v1211 = vpop.permute.xlu0 %1210
        %1212 = vrot.lane.b32.xlu0 %v607, 16
        %v1213 = vpop.permute.xlu0 %1212
        %1214 = vrot.lane.b32.xlu0 %v608, 16
        %v1215 = vpop.permute.xlu0 %1214
        %1216 = vrot.lane.b32.xlu0 %v609, 16
        %v1217 = vpop.permute.xlu0 %1216
        %1218 = vrot.lane.b32.xlu0 %v610, 16
        %v1219 = vpop.permute.xlu0 %1218
        %1284 = vrot.lane.b32.xlu0 %v611, 20
        %v1285 = vpop.permute.xlu0 %1284
        %1286 = vrot.lane.b32.xlu0 %v612, 20
        %v1287 = vpop.permute.xlu0 %1286
        %1288 = vrot.lane.b32.xlu0 %v613, 20
        %v1289 = vpop.permute.xlu0 %1288
        %1290 = vrot.lane.b32.xlu0 %v614, 20
        %v1291 = vpop.permute.xlu0 %1290
        %1292 = vrot.lane.b32.xlu0 %v615, 20
        %v1293 = vpop.permute.xlu0 %1292
        %1294 = vrot.lane.b32.xlu0 %v616, 20
        %v1295 = vpop.permute.xlu0 %1294
        %1296 = vrot.lane.b32.xlu0 %v617, 20
        %v1297 = vpop.permute.xlu0 %1296
        %1298 = vrot.lane.b32.xlu0 %v618, 20
        %v1299 = vpop.permute.xlu0 %1298
        %1300 = vrot.lane.b32.xlu0 %v619, 20
        %v1301 = vpop.permute.xlu0 %1300
        %1302 = vrot.lane.b32.xlu0 %v620, 20
        %v1303 = vpop.permute.xlu0 %1302
        %1304 = vrot.lane.b32.xlu0 %v621, 20
        %v1305 = vpop.permute.xlu0 %1304
        %1306 = vrot.lane.b32.xlu0 %v622, 20
        %v1307 = vpop.permute.xlu0 %1306
        %1308 = vrot.lane.b32.xlu0 %v623, 20
        %v1309 = vpop.permute.xlu0 %1308
        %1310 = vrot.lane.b32.xlu0 %v624, 20
        %v1311 = vpop.permute.xlu0 %1310
        %1312 = vrot.lane.b32.xlu0 %v625, 20
        %v1313 = vpop.permute.xlu0 %1312
        %1314 = vrot.lane.b32.xlu0 %v626, 20
        %v1315 = vpop.permute.xlu0 %1314
        %1316 = vrot.lane.b32.xlu0 %v627, 20
        %v1317 = vpop.permute.xlu0 %1316
        %1318 = vrot.lane.b32.xlu0 %v628, 20
        %v1319 = vpop.permute.xlu0 %1318
        %1320 = vrot.lane.b32.xlu0 %v629, 20
        %v1321 = vpop.permute.xlu0 %1320
        %1322 = vrot.lane.b32.xlu0 %v630, 20
        %v1323 = vpop.permute.xlu0 %1322
        %1324 = vrot.lane.b32.xlu0 %v631, 20
        %v1325 = vpop.permute.xlu0 %1324
        %1326 = vrot.lane.b32.xlu0 %v632, 20
        %v1327 = vpop.permute.xlu0 %1326
        %1328 = vrot.lane.b32.xlu0 %v633, 20
        %v1329 = vpop.permute.xlu0 %1328
        %1330 = vrot.lane.b32.xlu0 %v634, 20
        %v1331 = vpop.permute.xlu0 %1330
        %1332 = vrot.lane.b32.xlu0 %v635, 20
        %v1333 = vpop.permute.xlu0 %1332
        %1334 = vrot.lane.b32.xlu0 %v636, 20
        %v1335 = vpop.permute.xlu0 %1334
        %1336 = vrot.lane.b32.xlu0 %v637, 20
        %v1337 = vpop.permute.xlu0 %1336
        %1338 = vrot.lane.b32.xlu0 %v638, 20
        %v1339 = vpop.permute.xlu0 %1338
        %1340 = vrot.lane.b32.xlu0 %v639, 20
        %v1341 = vpop.permute.xlu0 %1340
        %1342 = vrot.lane.b32.xlu0 %v640, 20
        %v1343 = vpop.permute.xlu0 %1342
        %1344 = vrot.lane.b32.xlu0 %v641, 20
        %v1345 = vpop.permute.xlu0 %1344
        %1346 = vrot.lane.b32.xlu0 %v642, 20
        %v1347 = vpop.permute.xlu0 %1346
        %1412 = vrot.lane.b32.xlu0 %v644, 24
        %v1413 = vpop.permute.xlu0 %1412
        %1414 = vrot.lane.b32.xlu0 %v645, 24
        %v1415 = vpop.permute.xlu0 %1414
        %1416 = vrot.lane.b32.xlu0 %v646, 24
        %v1417 = vpop.permute.xlu0 %1416
        %1418 = vrot.lane.b32.xlu0 %v647, 24
        %v1419 = vpop.permute.xlu0 %1418
        %1420 = vrot.lane.b32.xlu0 %v648, 24
        %v1421 = vpop.permute.xlu0 %1420
        %1422 = vrot.lane.b32.xlu0 %v649, 24
        %v1423 = vpop.permute.xlu0 %1422
        %1424 = vrot.lane.b32.xlu0 %v650, 24
        %v1425 = vpop.permute.xlu0 %1424
        %1426 = vrot.lane.b32.xlu0 %v651, 24
        %v1427 = vpop.permute.xlu0 %1426
        %1428 = vrot.lane.b32.xlu0 %v652, 24
        %v1429 = vpop.permute.xlu0 %1428
        %1430 = vrot.lane.b32.xlu0 %v653, 24
        %v1431 = vpop.permute.xlu0 %1430
        %1432 = vrot.lane.b32.xlu0 %v654, 24
        %v1433 = vpop.permute.xlu0 %1432
        %1434 = vrot.lane.b32.xlu0 %v655, 24
        %v1435 = vpop.permute.xlu0 %1434
        %1436 = vrot.lane.b32.xlu0 %v656, 24
        %v1437 = vpop.permute.xlu0 %1436
        %1438 = vrot.lane.b32.xlu0 %v657, 24
        %v1439 = vpop.permute.xlu0 %1438
        %1440 = vrot.lane.b32.xlu0 %v658, 24
        %v1441 = vpop.permute.xlu0 %1440
        %1442 = vrot.lane.b32.xlu0 %v659, 24
        %v1443 = vpop.permute.xlu0 %1442
        %1444 = vrot.lane.b32.xlu0 %v660, 24
        %v1445 = vpop.permute.xlu0 %1444
        %1446 = vrot.lane.b32.xlu0 %v661, 24
        %v1447 = vpop.permute.xlu0 %1446
        %1448 = vrot.lane.b32.xlu0 %v662, 24
        %v1449 = vpop.permute.xlu0 %1448
        %1450 = vrot.lane.b32.xlu0 %v663, 24
        %v1451 = vpop.permute.xlu0 %1450
        %1452 = vrot.lane.b32.xlu0 %v664, 24
        %v1453 = vpop.permute.xlu0 %1452
        %1454 = vrot.lane.b32.xlu0 %v665, 24
        %v1455 = vpop.permute.xlu0 %1454
        %1456 = vrot.lane.b32.xlu0 %v666, 24
        %v1457 = vpop.permute.xlu0 %1456
        %1458 = vrot.lane.b32.xlu0 %v667, 24
        %v1459 = vpop.permute.xlu0 %1458
        %1460 = vrot.lane.b32.xlu0 %v668, 24
        %v1461 = vpop.permute.xlu0 %1460
        %1462 = vrot.lane.b32.xlu0 %v669, 24
        %v1463 = vpop.permute.xlu0 %1462
        %1464 = vrot.lane.b32.xlu0 %v670, 24
        %v1465 = vpop.permute.xlu0 %1464
        %1466 = vrot.lane.b32.xlu0 %v671, 24
        %v1467 = vpop.permute.xlu0 %1466
        %1468 = vrot.lane.b32.xlu0 %v672, 24
        %v1469 = vpop.permute.xlu0 %1468
        %1470 = vrot.lane.b32.xlu0 %v673, 24
        %v1471 = vpop.permute.xlu0 %1470
        %1472 = vrot.lane.b32.xlu0 %v674, 24
        %v1473 = vpop.permute.xlu0 %1472
        %1474 = vrot.lane.b32.xlu0 %v675, 24
        %v1475 = vpop.permute.xlu0 %1474
        %1540 = vrot.lane.b32.xlu0 %v676, 28
        %v1541 = vpop.permute.xlu0 %1540
        %1542 = vrot.lane.b32.xlu0 %v677, 28
        %v1543 = vpop.permute.xlu0 %1542
        %1544 = vrot.lane.b32.xlu0 %v678, 28
        %v1545 = vpop.permute.xlu0 %1544
        %1546 = vrot.lane.b32.xlu0 %v679, 28
        %v1547 = vpop.permute.xlu0 %1546
        %1548 = vrot.lane.b32.xlu0 %v680, 28
        %v1549 = vpop.permute.xlu0 %1548
        %1550 = vrot.lane.b32.xlu0 %v681, 28
        %v1551 = vpop.permute.xlu0 %1550
        %1552 = vrot.lane.b32.xlu0 %v682, 28
        %v1553 = vpop.permute.xlu0 %1552
        %1554 = vrot.lane.b32.xlu0 %v683, 28
        %v1555 = vpop.permute.xlu0 %1554
        %1556 = vrot.lane.b32.xlu0 %v684, 28
        %v1557 = vpop.permute.xlu0 %1556
        %1558 = vrot.lane.b32.xlu0 %v685, 28
        %v1559 = vpop.permute.xlu0 %1558
        %1560 = vrot.lane.b32.xlu0 %v686, 28
        %v1561 = vpop.permute.xlu0 %1560
        %1562 = vrot.lane.b32.xlu0 %v687, 28
        %v1563 = vpop.permute.xlu0 %1562
        %1564 = vrot.lane.b32.xlu0 %v688, 28
        %v1565 = vpop.permute.xlu0 %1564
        %1566 = vrot.lane.b32.xlu0 %v689, 28
        %v1567 = vpop.permute.xlu0 %1566
        %1568 = vrot.lane.b32.xlu0 %v690, 28
        %v1569 = vpop.permute.xlu0 %1568
        %1570 = vrot.lane.b32.xlu0 %v691, 28
        %v1571 = vpop.permute.xlu0 %1570
        %1572 = vrot.lane.b32.xlu0 %v692, 28
        %v1573 = vpop.permute.xlu0 %1572
        %1574 = vrot.lane.b32.xlu0 %v693, 28
        %v1575 = vpop.permute.xlu0 %1574
        %1576 = vrot.lane.b32.xlu0 %v694, 28
        %v1577 = vpop.permute.xlu0 %1576
        %1578 = vrot.lane.b32.xlu0 %v695, 28
        %v1579 = vpop.permute.xlu0 %1578
        %1580 = vrot.lane.b32.xlu0 %v696, 28
        %v1581 = vpop.permute.xlu0 %1580
        %1582 = vrot.lane.b32.xlu0 %v697, 28
        %v1583 = vpop.permute.xlu0 %1582
        %1584 = vrot.lane.b32.xlu0 %v698, 28
        %v1585 = vpop.permute.xlu0 %1584
        %1586 = vrot.lane.b32.xlu0 %v699, 28
        %v1587 = vpop.permute.xlu0 %1586
        %1588 = vrot.lane.b32.xlu0 %v700, 28
        %v1589 = vpop.permute.xlu0 %1588
        %1590 = vrot.lane.b32.xlu0 %v701, 28
        %v1591 = vpop.permute.xlu0 %1590
        %1592 = vrot.lane.b32.xlu0 %v702, 28
        %v1593 = vpop.permute.xlu0 %1592
        %1594 = vrot.lane.b32.xlu0 %v703, 28
        %v1595 = vpop.permute.xlu0 %1594
        %1596 = vrot.lane.b32.xlu0 %v704, 28
        %v1597 = vpop.permute.xlu0 %1596
        %1598 = vrot.lane.b32.xlu0 %v705, 28
        %v1599 = vpop.permute.xlu0 %1598
        %1600 = vrot.lane.b32.xlu0 %v706, 28
        %v1601 = vpop.permute.xlu0 %1600
        %1602 = vrot.lane.b32.xlu0 %v707, 28
        %v1603 = vpop.permute.xlu0 %1602
        %1668 = vrot.lane.b32.xlu0 %v708, 32
        %v1669 = vpop.permute.xlu0 %1668
        %1670 = vrot.lane.b32.xlu0 %v709, 32
        %v1671 = vpop.permute.xlu0 %1670
        %1672 = vrot.lane.b32.xlu0 %v710, 32
        %v1673 = vpop.permute.xlu0 %1672
        %1674 = vrot.lane.b32.xlu0 %v711, 32
        %v1675 = vpop.permute.xlu0 %1674
        %1676 = vrot.lane.b32.xlu0 %v712, 32
        %v1677 = vpop.permute.xlu0 %1676
        %1678 = vrot.lane.b32.xlu0 %v713, 32
        %v1679 = vpop.permute.xlu0 %1678
        %1680 = vrot.lane.b32.xlu0 %v714, 32
        %v1681 = vpop.permute.xlu0 %1680
        %1682 = vrot.lane.b32.xlu0 %v715, 32
        %v1683 = vpop.permute.xlu0 %1682
        %1684 = vrot.lane.b32.xlu0 %v716, 32
        %v1685 = vpop.permute.xlu0 %1684
        %1686 = vrot.lane.b32.xlu0 %v717, 32
        %v1687 = vpop.permute.xlu0 %1686
        %1688 = vrot.lane.b32.xlu0 %v718, 32
        %v1689 = vpop.permute.xlu0 %1688
        %1690 = vrot.lane.b32.xlu0 %v719, 32
        %v1691 = vpop.permute.xlu0 %1690
        %1692 = vrot.lane.b32.xlu0 %v720, 32
        %v1693 = vpop.permute.xlu0 %1692
        %1694 = vrot.lane.b32.xlu0 %v721, 32
        %v1695 = vpop.permute.xlu0 %1694
        %1696 = vrot.lane.b32.xlu0 %v722, 32
        %v1697 = vpop.permute.xlu0 %1696
        %1698 = vrot.lane.b32.xlu0 %v723, 32
        %v1699 = vpop.permute.xlu0 %1698
        %1700 = vrot.lane.b32.xlu0 %v724, 32
        %v1701 = vpop.permute.xlu0 %1700
        %1702 = vrot.lane.b32.xlu0 %v725, 32
        %v1703 = vpop.permute.xlu0 %1702
        %1704 = vrot.lane.b32.xlu0 %v726, 32
        %v1705 = vpop.permute.xlu0 %1704
        %1706 = vrot.lane.b32.xlu0 %v727, 32
        %v1707 = vpop.permute.xlu0 %1706
        %1708 = vrot.lane.b32.xlu0 %v728, 32
        %v1709 = vpop.permute.xlu0 %1708
        %1710 = vrot.lane.b32.xlu0 %v729, 32
        %v1711 = vpop.permute.xlu0 %1710
        %1712 = vrot.lane.b32.xlu0 %v730, 32
        %v1713 = vpop.permute.xlu0 %1712
        %1714 = vrot.lane.b32.xlu0 %v731, 32
        %v1715 = vpop.permute.xlu0 %1714
        %1716 = vrot.lane.b32.xlu0 %v732, 32
        %v1717 = vpop.permute.xlu0 %1716
        %1718 = vrot.lane.b32.xlu0 %v733, 32
        %v1719 = vpop.permute.xlu0 %1718
        %1720 = vrot.lane.b32.xlu0 %v734, 32
        %v1721 = vpop.permute.xlu0 %1720
        %1722 = vrot.lane.b32.xlu0 %v735, 32
        %v1723 = vpop.permute.xlu0 %1722
        %1724 = vrot.lane.b32.xlu0 %v736, 32
        %v1725 = vpop.permute.xlu0 %1724
        %1726 = vrot.lane.b32.xlu0 %v737, 32
        %v1727 = vpop.permute.xlu0 %1726
        %1728 = vrot.lane.b32.xlu0 %v738, 32
        %v1729 = vpop.permute.xlu0 %1728
        %1730 = vrot.lane.b32.xlu0 %v739, 32
        %v1731 = vpop.permute.xlu0 %1730
        %v1764 = vsel %vm330, %v451, %v773
        %v1765 = vsel %vm330, %v452, %v775
        %v1766 = vsel %vm330, %v453, %v777
        %v1767 = vsel %vm330, %v454, %v779
        %v1768 = vsel %vm330, %v455, %v781
        %v1769 = vsel %vm330, %v456, %v783
        %v1770 = vsel %vm330, %v457, %v785
        %v1771 = vsel %vm330, %v458, %v787
        %v1772 = vsel %vm330, %v459, %v789
        %v1773 = vsel %vm330, %v460, %v791
        %v1774 = vsel %vm330, %v461, %v793
        %v1775 = vsel %vm330, %v462, %v795
        %v1776 = vsel %vm330, %v463, %v797
        %v1777 = vsel %vm330, %v464, %v799
        %v1778 = vsel %vm330, %v465, %v801
        %v1779 = vsel %vm330, %v466, %v803
        %v1780 = vsel %vm330, %v467, %v805
        %v1781 = vsel %vm330, %v468, %v807
        %v1782 = vsel %vm330, %v469, %v809
        %v1783 = vsel %vm330, %v470, %v811
        %v1784 = vsel %vm330, %v471, %v813
        %v1785 = vsel %vm330, %v472, %v815
        %v1786 = vsel %vm330, %v473, %v817
        %v1787 = vsel %vm330, %v474, %v819
        %v1788 = vsel %vm330, %v475, %v821
        %v1789 = vsel %vm330, %v476, %v823
        %v1790 = vsel %vm330, %v477, %v825
        %v1791 = vsel %vm330, %v478, %v827
        %v1792 = vsel %vm330, %v479, %v829
        %v1793 = vsel %vm330, %v480, %v831
        %v1794 = vsel %vm330, %v481, %v833
        %v1795 = vsel %vm330, %v482, %v835
        %vm1796 = vcmask 64512
        %v1797 = vsel %vm1796, %v1764, %v901
        %v1798 = vsel %vm1796, %v1765, %v903
        %v1799 = vsel %vm1796, %v1766, %v905
        %v1800 = vsel %vm1796, %v1767, %v907
        %v1801 = vsel %vm1796, %v1768, %v909
        %v1802 = vsel %vm1796, %v1769, %v911
        %v1803 = vsel %vm1796, %v1770, %v913
        %v1804 = vsel %vm1796, %v1771, %v915
        %v1805 = vsel %vm1796, %v1772, %v917
        %v1806 = vsel %vm1796, %v1773, %v919
        %v1807 = vsel %vm1796, %v1774, %v921
        %v1808 = vsel %vm1796, %v1775, %v923
        %v1809 = vsel %vm1796, %v1776, %v925
        %v1810 = vsel %vm1796, %v1777, %v927
        %v1811 = vsel %vm1796, %v1778, %v929
        %v1812 = vsel %vm1796, %v1779, %v931
        %v1813 = vsel %vm1796, %v1780, %v933
        %v1814 = vsel %vm1796, %v1781, %v935
        %v1815 = vsel %vm1796, %v1782, %v937
        %v1816 = vsel %vm1796, %v1783, %v939
        %v1817 = vsel %vm1796, %v1784, %v941
        %v1818 = vsel %vm1796, %v1785, %v943
        %v1819 = vsel %vm1796, %v1786, %v945
        %v1820 = vsel %vm1796, %v1787, %v947
        %v1821 = vsel %vm1796, %v1788, %v949
        %v1822 = vsel %vm1796, %v1789, %v951
        %v1823 = vsel %vm1796, %v1790, %v953
        %v1824 = vsel %vm1796, %v1791, %v955
        %v1825 = vsel %vm1796, %v1792, %v957
        %v1826 = vsel %vm1796, %v1793, %v959
        %v1827 = vsel %vm1796, %v1794, %v961
        %v1828 = vsel %vm1796, %v1795, %v963
        %vm1829 = vcmask 97280
        %v1830 = vsel %vm1829, %v1797, %v1029
        %v1831 = vsel %vm1829, %v1798, %v1031
        %v1832 = vsel %vm1829, %v1799, %v1033
        %v1833 = vsel %vm1829, %v1800, %v1035
        %v1834 = vsel %vm1829, %v1801, %v1037
        %v1835 = vsel %vm1829, %v1802, %v1039
        %v1836 = vsel %vm1829, %v1803, %v1041
        %v1837 = vsel %vm1829, %v1804, %v1043
        %v1838 = vsel %vm1829, %v1805, %v1045
        %v1839 = vsel %vm1829, %v1806, %v1047
        %v1840 = vsel %vm1829, %v1807, %v1049
        %v1841 = vsel %vm1829, %v1808, %v1051
        %v1842 = vsel %vm1829, %v1809, %v1053
        %v1843 = vsel %vm1829, %v1810, %v1055
        %v1844 = vsel %vm1829, %v1811, %v1057
        %v1845 = vsel %vm1829, %v1812, %v1059
        %v1846 = vsel %vm1829, %v1813, %v1061
        %v1847 = vsel %vm1829, %v1814, %v1063
        %v1848 = vsel %vm1829, %v1815, %v1065
        %v1849 = vsel %vm1829, %v1816, %v1067
        %v1850 = vsel %vm1829, %v1817, %v1069
        %v1851 = vsel %vm1829, %v1818, %v1071
        %v1852 = vsel %vm1829, %v1819, %v1073
        %v1853 = vsel %vm1829, %v1820, %v1075
        %v1854 = vsel %vm1829, %v1821, %v1077
        %v1855 = vsel %vm1829, %v1822, %v1079
        %v1856 = vsel %vm1829, %v1823, %v1081
        %v1857 = vsel %vm1829, %v1824, %v1083
        %v1858 = vsel %vm1829, %v1825, %v1085
        %v1859 = vsel %vm1829, %v1826, %v1087
        %v1860 = vsel %vm1829, %v1827, %v1089
        %v1861 = vsel %vm1829, %v1828, %v1091
        %vm1862 = vcmask 130048
        %v1863 = vsel %vm1862, %v1830, %v1157
        %v1864 = vsel %vm1862, %v1831, %v1159
        %v1865 = vsel %vm1862, %v1832, %v1161
        %v1866 = vsel %vm1862, %v1833, %v1163
        %v1867 = vsel %vm1862, %v1834, %v1165
        %v1868 = vsel %vm1862, %v1835, %v1167
        %v1869 = vsel %vm1862, %v1836, %v1169
        %v1870 = vsel %vm1862, %v1837, %v1171
        %v1871 = vsel %vm1862, %v1838, %v1173
        %v1872 = vsel %vm1862, %v1839, %v1175
        %v1873 = vsel %vm1862, %v1840, %v1177
        %v1874 = vsel %vm1862, %v1841, %v1179
        %v1875 = vsel %vm1862, %v1842, %v1181
        %v1876 = vsel %vm1862, %v1843, %v1183
        %v1877 = vsel %vm1862, %v1844, %v1185
        %v1878 = vsel %vm1862, %v1845, %v1187
        %v1879 = vsel %vm1862, %v1846, %v1189
        %v1880 = vsel %vm1862, %v1847, %v1191
        %v1881 = vsel %vm1862, %v1848, %v1193
        %v1882 = vsel %vm1862, %v1849, %v1195
        %v1883 = vsel %vm1862, %v1850, %v1197
        %v1884 = vsel %vm1862, %v1851, %v1199
        %v1885 = vsel %vm1862, %v1852, %v1201
        %v1886 = vsel %vm1862, %v1853, %v1203
        %v1887 = vsel %vm1862, %v1854, %v1205
        %v1888 = vsel %vm1862, %v1855, %v1207
        %v1889 = vsel %vm1862, %v1856, %v1209
        %v1890 = vsel %vm1862, %v1857, %v1211
        %v1891 = vsel %vm1862, %v1858, %v1213
        %v1892 = vsel %vm1862, %v1859, %v1215
        %v1893 = vsel %vm1862, %v1860, %v1217
        %v1894 = vsel %vm1862, %v1861, %v1219
        %vm1895 = vcmask 162816
        %v1896 = vsel %vm1895, %v1863, %v1285
        %v1897 = vsel %vm1895, %v1864, %v1287
        %v1898 = vsel %vm1895, %v1865, %v1289
        %v1899 = vsel %vm1895, %v1866, %v1291
        %v1900 = vsel %vm1895, %v1867, %v1293
        %v1901 = vsel %vm1895, %v1868, %v1295
        %v1902 = vsel %vm1895, %v1869, %v1297
        %v1903 = vsel %vm1895, %v1870, %v1299
        %v1904 = vsel %vm1895, %v1871, %v1301
        %v1905 = vsel %vm1895, %v1872, %v1303
        %v1906 = vsel %vm1895, %v1873, %v1305
        %v1907 = vsel %vm1895, %v1874, %v1307
        %v1908 = vsel %vm1895, %v1875, %v1309
        %v1909 = vsel %vm1895, %v1876, %v1311
        %v1910 = vsel %vm1895, %v1877, %v1313
        %v1911 = vsel %vm1895, %v1878, %v1315
        %v1912 = vsel %vm1895, %v1879, %v1317
        %v1913 = vsel %vm1895, %v1880, %v1319
        %v1914 = vsel %vm1895, %v1881, %v1321
        %v1915 = vsel %vm1895, %v1882, %v1323
        %v1916 = vsel %vm1895, %v1883, %v1325
        %v1917 = vsel %vm1895, %v1884, %v1327
        %v1918 = vsel %vm1895, %v1885, %v1329
        %v1919 = vsel %vm1895, %v1886, %v1331
        %v1920 = vsel %vm1895, %v1887, %v1333
        %v1921 = vsel %vm1895, %v1888, %v1335
        %v1922 = vsel %vm1895, %v1889, %v1337
        %v1923 = vsel %vm1895, %v1890, %v1339
        %v1924 = vsel %vm1895, %v1891, %v1341
        %v1925 = vsel %vm1895, %v1892, %v1343
        %v1926 = vsel %vm1895, %v1893, %v1345
        %v1927 = vsel %vm1895, %v1894, %v1347
        %vm1928 = vcmask 195584
        %v1929 = vsel %vm1928, %v1896, %v1413
        %v1930 = vsel %vm1928, %v1897, %v1415
        %v1931 = vsel %vm1928, %v1898, %v1417
        %v1932 = vsel %vm1928, %v1899, %v1419
        %v1933 = vsel %vm1928, %v1900, %v1421
        %v1934 = vsel %vm1928, %v1901, %v1423
        %v1935 = vsel %vm1928, %v1902, %v1425
        %v1936 = vsel %vm1928, %v1903, %v1427
        %v1937 = vsel %vm1928, %v1904, %v1429
        %v1938 = vsel %vm1928, %v1905, %v1431
        %v1939 = vsel %vm1928, %v1906, %v1433
        %v1940 = vsel %vm1928, %v1907, %v1435
        %v1941 = vsel %vm1928, %v1908, %v1437
        %v1942 = vsel %vm1928, %v1909, %v1439
        %v1943 = vsel %vm1928, %v1910, %v1441
        %v1944 = vsel %vm1928, %v1911, %v1443
        %v1945 = vsel %vm1928, %v1912, %v1445
        %v1946 = vsel %vm1928, %v1913, %v1447
        %v1947 = vsel %vm1928, %v1914, %v1449
        %v1948 = vsel %vm1928, %v1915, %v1451
        %v1949 = vsel %vm1928, %v1916, %v1453
        %v1950 = vsel %vm1928, %v1917, %v1455
        %v1951 = vsel %vm1928, %v1918, %v1457
        %v1952 = vsel %vm1928, %v1919, %v1459
        %v1953 = vsel %vm1928, %v1920, %v1461
        %v1954 = vsel %vm1928, %v1921, %v1463
        %v1955 = vsel %vm1928, %v1922, %v1465
        %v1956 = vsel %vm1928, %v1923, %v1467
        %v1957 = vsel %vm1928, %v1924, %v1469
        %v1958 = vsel %vm1928, %v1925, %v1471
        %v1959 = vsel %vm1928, %v1926, %v1473
        %v1960 = vsel %vm1928, %v1927, %v1475
        %vm1961 = vcmask 228352
        %v1962 = vsel %vm1961, %v1929, %v1541
        %v1963 = vsel %vm1961, %v1930, %v1543
        %v1964 = vsel %vm1961, %v1931, %v1545
        %v1965 = vsel %vm1961, %v1932, %v1547
        %v1966 = vsel %vm1961, %v1933, %v1549
        %v1967 = vsel %vm1961, %v1934, %v1551
        %v1968 = vsel %vm1961, %v1935, %v1553
        %v1969 = vsel %vm1961, %v1936, %v1555
        %v1970 = vsel %vm1961, %v1937, %v1557
        %v1971 = vsel %vm1961, %v1938, %v1559
        %v1972 = vsel %vm1961, %v1939, %v1561
        %v1973 = vsel %vm1961, %v1940, %v1563
        %v1974 = vsel %vm1961, %v1941, %v1565
        %v1975 = vsel %vm1961, %v1942, %v1567
        %v1976 = vsel %vm1961, %v1943, %v1569
        %v1977 = vsel %vm1961, %v1944, %v1571
        %v1978 = vsel %vm1961, %v1945, %v1573
        %v1979 = vsel %vm1961, %v1946, %v1575
        %v1980 = vsel %vm1961, %v1947, %v1577
        %v1981 = vsel %vm1961, %v1948, %v1579
        %v1982 = vsel %vm1961, %v1949, %v1581
        %v1983 = vsel %vm1961, %v1950, %v1583
        %v1984 = vsel %vm1961, %v1951, %v1585
        %v1985 = vsel %vm1961, %v1952, %v1587
        %v1986 = vsel %vm1961, %v1953, %v1589
        %v1987 = vsel %vm1961, %v1954, %v1591
        %v1988 = vsel %vm1961, %v1955, %v1593
        %v1989 = vsel %vm1961, %v1956, %v1595
        %v1990 = vsel %vm1961, %v1957, %v1597
        %v1991 = vsel %vm1961, %v1958, %v1599
        %v1992 = vsel %vm1961, %v1959, %v1601
        %v1993 = vsel %vm1961, %v1960, %v1603
        %vm1994 = vcmask 261120
        %v1995 = vsel %vm1994, %v1962, %v1669
        %v1996 = vsel %vm1994, %v1963, %v1671
        %v1997 = vsel %vm1994, %v1964, %v1673
        %v1998 = vsel %vm1994, %v1965, %v1675
        %v1999 = vsel %vm1994, %v1966, %v1677
        %v2000 = vsel %vm1994, %v1967, %v1679
        %v2001 = vsel %vm1994, %v1968, %v1681
        %v2002 = vsel %vm1994, %v1969, %v1683
        %v2003 = vsel %vm1994, %v1970, %v1685
        %v2004 = vsel %vm1994, %v1971, %v1687
        %v2005 = vsel %vm1994, %v1972, %v1689
        %v2006 = vsel %vm1994, %v1973, %v1691
        %v2007 = vsel %vm1994, %v1974, %v1693
        %v2008 = vsel %vm1994, %v1975, %v1695
        %v2009 = vsel %vm1994, %v1976, %v1697
        %v2010 = vsel %vm1994, %v1977, %v1699
        %v2011 = vsel %vm1994, %v1978, %v1701
        %v2012 = vsel %vm1994, %v1979, %v1703
        %v2013 = vsel %vm1994, %v1980, %v1705
        %v2014 = vsel %vm1994, %v1981, %v1707
        %v2015 = vsel %vm1994, %v1982, %v1709
        %v2016 = vsel %vm1994, %v1983, %v1711
        %v2017 = vsel %vm1994, %v1984, %v1713
        %v2018 = vsel %vm1994, %v1985, %v1715
        %v2019 = vsel %vm1994, %v1986, %v1717
        %v2020 = vsel %vm1994, %v1987, %v1719
        %v2021 = vsel %vm1994, %v1988, %v1721
        %v2022 = vsel %vm1994, %v1989, %v1723
        %v2023 = vsel %vm1994, %v1990, %v1725
        %v2024 = vsel %vm1994, %v1991, %v1727
        %v2025 = vsel %vm1994, %v1992, %v1729
        %v2026 = vsel %vm1994, %v1993, %v1731
        %v2027 = vld [vmem:[%s1] sm:$0xff]
        %v2028 = vld [vmem:[%s1 + $0x8] sm:$0xff]
        %v2029 = vld [vmem:[%s1 + $0x10] sm:$0xff]
        %v2030 = vld [vmem:[%s1 + $0x18] sm:$0xff]
        %v2031 = vld [vmem:[%s1 + $0x20] sm:$0xf]
        %v2032 = vld [vmem:[%s2] sm:$0x1]
        %v2034 = vlaneseq
        %v2035 = vshrl.u32 %v2034, 7
        %v2036 = vsub.s32 0, %v2035
        %v2037 = vrot.slane %v2032, %v2036
        %vm2039 = vcmask 293888
        %v2041 = vsel %vm2039, %v1995, 0
        %v2044 = vsel %vm2039, %v1996, 0
        %v2047 = vsel %vm2039, %v1997, 0
        %v2050 = vsel %vm2039, %v1998, 0
        %v2053 = vsel %vm2039, %v1999, 0
        %v2056 = vsel %vm2039, %v2000, 0
        %v2059 = vsel %vm2039, %v2001, 0
        %v2062 = vsel %vm2039, %v2002, 0
        %v2065 = vsel %vm2039, %v2003, 0
        %v2068 = vsel %vm2039, %v2004, 0
        %v2071 = vsel %vm2039, %v2005, 0
        %v2074 = vsel %vm2039, %v2006, 0
        %v2077 = vsel %vm2039, %v2007, 0
        %v2080 = vsel %vm2039, %v2008, 0
        %v2083 = vsel %vm2039, %v2009, 0
        %v2086 = vsel %vm2039, %v2010, 0
        %v2089 = vsel %vm2039, %v2011, 0
        %v2092 = vsel %vm2039, %v2012, 0
        %v2095 = vsel %vm2039, %v2013, 0
        %v2098 = vsel %vm2039, %v2014, 0
        %v2101 = vsel %vm2039, %v2015, 0
        %v2104 = vsel %vm2039, %v2016, 0
        %v2107 = vsel %vm2039, %v2017, 0
        %v2110 = vsel %vm2039, %v2018, 0
        %v2113 = vsel %vm2039, %v2019, 0
        %v2116 = vsel %vm2039, %v2020, 0
        %v2119 = vsel %vm2039, %v2021, 0
        %v2122 = vsel %vm2039, %v2022, 0
        %v2125 = vsel %vm2039, %v2023, 0
        %v2128 = vsel %vm2039, %v2024, 0
        %v2131 = vsel %vm2039, %v2025, 0
        %v2134 = vsel %vm2039, %v2026, 0
        %vm2136 = vcmask 1043456
        %v2138 = vsel %vm2136, %v2031, 0
        %2140 = vmatprep.subr.mxu0 0.0
        %2141 = vmatpush1.msra.mxu0 0.0
        %2142 = vmatprep.subr.mxu0 0.0
        %2143 = vmatpush1.msra.mxu0 0.0
        %2144 = vmatprep.subr.mxu0 0.0
        %2145 = vmatpush1.msra.mxu0 0.0
        %2146 = vmatprep.subr.mxu0 0.0
        %2147 = vmatpush1.msra.mxu0 0.0
        %2148 = vmatprep.subr.mxu0 0.0
        %2149 = vmatpush1.msra.mxu0 0.0
        %2150 = vmatprep.subr.mxu0 0.0
        %2151 = vmatpush1.msra.mxu0 0.0
        %2152 = vmatprep.subr.mxu0 0.0
        %2153 = vmatpush1.msra.mxu0 0.0
        %2154 = vmatprep.subr.mxu0 0.0
        %2155 = vmatpush1.msra.mxu0 0.0
        %2156 = vmatprep.subr.mxu0 0.0
        %2157 = vmatpush1.msra.mxu0 0.0
        %2158 = vmatprep.subr.mxu0 0.0
        %2159 = vmatpush1.msra.mxu0 0.0
        %2160 = vmatprep.subr.mxu0 0.0
        %2161 = vmatpush1.msra.mxu0 0.0
        %2162 = vmatprep.subr.mxu0 0.0
        %2163 = vmatpush1.msra.mxu0 %v2138
        %2164 = vmatprep.subr.mxu0 0.0
        %2165 = vmatpush1.msra.mxu0 %v2030
        %2166 = vmatprep.subr.mxu0 0.0
        %2167 = vmatpush1.msra.mxu0 %v2029
        %2168 = vmatprep.subr.mxu0 0.0
        %2169 = vmatpush1.msra.mxu0 %v2028
        %2170 = vmatprep.subr.mxu0 0.0
        %2171 = vmatpush1.msra.mxu0 %v2027
        %2172 = vmatprep.subr.mxu0 0.0
        %2173 = vmatpush2.msra.mxu0 0.0
        %2174 = vmatprep.subr.mxu0 0.0
        %2175 = vmatpush2.msra.mxu0 0.0
        %2176 = vmatprep.subr.mxu0 0.0
        %2177 = vmatpush2.msra.mxu0 0.0
        %2178 = vmatprep.subr.mxu0 0.0
        %2179 = vmatpush2.msra.mxu0 0.0
        %2180 = vmatprep.subr.mxu0 0.0
        %2181 = vmatpush2.msra.mxu0 0.0
        %2182 = vmatprep.subr.mxu0 0.0
        %2183 = vmatpush2.msra.mxu0 0.0
        %2184 = vmatprep.subr.mxu0 0.0
        %2185 = vmatpush2.msra.mxu0 0.0
        %2186 = vmatprep.subr.mxu0 0.0
        %2187 = vmatpush2.msra.mxu0 0.0
        %2188 = vmatprep.subr.mxu0 0.0
        %2189 = vmatpush2.msra.mxu0 0.0
        %2190 = vmatprep.subr.mxu0 0.0
        %2191 = vmatpush2.msra.mxu0 0.0
        %2192 = vmatprep.subr.mxu0 0.0
        %2193 = vmatpush2.msra.mxu0 0.0
        %2194 = vmatprep.subr.mxu0 0.0
        %2195 = vmatpush2.msra.mxu0 0.0
        %2196 = vmatprep.subr.mxu0 0.0
        %2197 = vmatpush2.msra.mxu0 0.0
        %2198 = vmatprep.subr.mxu0 0.0
        %2199 = vmatpush2.msra.mxu0 0.0
        %2200 = vmatprep.subr.mxu0 0.0
        %2201 = vmatpush2.msra.mxu0 0.0
        %2202 = vmatprep.subr.mxu0 0.0
        %2203 = vmatpush2.msra.mxu0 0.0
        %2204 = vmatprep.mubr.f32.mxu0 0.0
        %2205 = vmatmul.mubr.f32.gmra.mxu0 %v2041
        %v2206 = vpop.f32.mrf.mxu0
        %v2207 = vadd.f32 %v2037, %v2206
        %v2208 = vpop.f32.mrf.mxu0
        %2209 = vmatprep.mubr.f32.mxu0 0.0
        %2210 = vmatmul.mubr.f32.gmra.mxu0 %v2044
        %v2211 = vpop.f32.mrf.mxu0
        %v2212 = vadd.f32 %v2037, %v2211
        %v2213 = vpop.f32.mrf.mxu0
        %2214 = vmatprep.mubr.f32.mxu0 0.0
        %2215 = vmatmul.mubr.f32.gmra.mxu0 %v2047
        %v2216 = vpop.f32.mrf.mxu0
        %v2217 = vadd.f32 %v2037, %v2216
        %v2218 = vpop.f32.mrf.mxu0
        %2219 = vmatprep.mubr.f32.mxu0 0.0
        %2220 = vmatmul.mubr.f32.gmra.mxu0 %v2050
        %v2221 = vpop.f32.mrf.mxu0
        %v2222 = vadd.f32 %v2037, %v2221
        %v2223 = vpop.f32.mrf.mxu0
        %2224 = vmatprep.mubr.f32.mxu0 0.0
        %2225 = vmatmul.mubr.f32.gmra.mxu0 %v2053
        %v2226 = vpop.f32.mrf.mxu0
        %v2227 = vadd.f32 %v2037, %v2226
        %v2228 = vpop.f32.mrf.mxu0
        %2229 = vmatprep.mubr.f32.mxu0 0.0
        %2230 = vmatmul.mubr.f32.gmra.mxu0 %v2056
        %v2231 = vpop.f32.mrf.mxu0
        %v2232 = vadd.f32 %v2037, %v2231
        %v2233 = vpop.f32.mrf.mxu0
        %2234 = vmatprep.mubr.f32.mxu0 0.0
        %2235 = vmatmul.mubr.f32.gmra.mxu0 %v2059
        %v2236 = vpop.f32.mrf.mxu0
        %v2237 = vadd.f32 %v2037, %v2236
        %v2238 = vpop.f32.mrf.mxu0
        %2239 = vmatprep.mubr.f32.mxu0 0.0
        %2240 = vmatmul.mubr.f32.gmra.mxu0 %v2062
        %v2241 = vpop.f32.mrf.mxu0
        %v2242 = vadd.f32 %v2037, %v2241
        %v2243 = vpop.f32.mrf.mxu0
        %2244 = vmatprep.mubr.f32.mxu0 0.0
        %2245 = vmatmul.mubr.f32.gmra.mxu0 %v2065
        %v2246 = vpop.f32.mrf.mxu0
        %v2247 = vadd.f32 %v2037, %v2246
        %v2248 = vpop.f32.mrf.mxu0
        %2249 = vmatprep.mubr.f32.mxu0 0.0
        %2250 = vmatmul.mubr.f32.gmra.mxu0 %v2068
        %v2251 = vpop.f32.mrf.mxu0
        %v2252 = vadd.f32 %v2037, %v2251
        %v2253 = vpop.f32.mrf.mxu0
        %2254 = vmatprep.mubr.f32.mxu0 0.0
        %2255 = vmatmul.mubr.f32.gmra.mxu0 %v2071
        %v2256 = vpop.f32.mrf.mxu0
        %v2257 = vadd.f32 %v2037, %v2256
        %v2258 = vpop.f32.mrf.mxu0
        %2259 = vmatprep.mubr.f32.mxu0 0.0
        %2260 = vmatmul.mubr.f32.gmra.mxu0 %v2074
        %v2261 = vpop.f32.mrf.mxu0
        %v2262 = vadd.f32 %v2037, %v2261
        %v2263 = vpop.f32.mrf.mxu0
        %2264 = vmatprep.mubr.f32.mxu0 0.0
        %2265 = vmatmul.mubr.f32.gmra.mxu0 %v2077
        %v2266 = vpop.f32.mrf.mxu0
        %v2267 = vadd.f32 %v2037, %v2266
        %v2268 = vpop.f32.mrf.mxu0
        %2269 = vmatprep.mubr.f32.mxu0 0.0
        %2270 = vmatmul.mubr.f32.gmra.mxu0 %v2080
        %v2271 = vpop.f32.mrf.mxu0
        %v2272 = vadd.f32 %v2037, %v2271
        %v2273 = vpop.f32.mrf.mxu0
        %2274 = vmatprep.mubr.f32.mxu0 0.0
        %2275 = vmatmul.mubr.f32.gmra.mxu0 %v2083
        %v2276 = vpop.f32.mrf.mxu0
        %v2277 = vadd.f32 %v2037, %v2276
        %v2278 = vpop.f32.mrf.mxu0
        %2279 = vmatprep.mubr.f32.mxu0 0.0
        %2280 = vmatmul.mubr.f32.gmra.mxu0 %v2086
        %v2281 = vpop.f32.mrf.mxu0
        %v2282 = vadd.f32 %v2037, %v2281
        %v2283 = vpop.f32.mrf.mxu0
        %2284 = vmatprep.mubr.f32.mxu0 0.0
        %2285 = vmatmul.mubr.f32.gmra.mxu0 %v2089
        %v2286 = vpop.f32.mrf.mxu0
        %v2287 = vadd.f32 %v2037, %v2286
        %v2288 = vpop.f32.mrf.mxu0
        %2289 = vmatprep.mubr.f32.mxu0 0.0
        %2290 = vmatmul.mubr.f32.gmra.mxu0 %v2092
        %v2291 = vpop.f32.mrf.mxu0
        %v2292 = vadd.f32 %v2037, %v2291
        %v2293 = vpop.f32.mrf.mxu0
        %2294 = vmatprep.mubr.f32.mxu0 0.0
        %2295 = vmatmul.mubr.f32.gmra.mxu0 %v2095
        %v2296 = vpop.f32.mrf.mxu0
        %v2297 = vadd.f32 %v2037, %v2296
        %v2298 = vpop.f32.mrf.mxu0
        %2299 = vmatprep.mubr.f32.mxu0 0.0
        %2300 = vmatmul.mubr.f32.gmra.mxu0 %v2098
        %v2301 = vpop.f32.mrf.mxu0
        %v2302 = vadd.f32 %v2037, %v2301
        %v2303 = vpop.f32.mrf.mxu0
        %2304 = vmatprep.mubr.f32.mxu0 0.0
        %2305 = vmatmul.mubr.f32.gmra.mxu0 %v2101
        %v2306 = vpop.f32.mrf.mxu0
        %v2307 = vadd.f32 %v2037, %v2306
        %v2308 = vpop.f32.mrf.mxu0
        %2309 = vmatprep.mubr.f32.mxu0 0.0
        %2310 = vmatmul.mubr.f32.gmra.mxu0 %v2104
        %v2311 = vpop.f32.mrf.mxu0
        %v2312 = vadd.f32 %v2037, %v2311
        %v2313 = vpop.f32.mrf.mxu0
        %2314 = vmatprep.mubr.f32.mxu0 0.0
        %2315 = vmatmul.mubr.f32.gmra.mxu0 %v2107
        %v2316 = vpop.f32.mrf.mxu0
        %v2317 = vadd.f32 %v2037, %v2316
        %v2318 = vpop.f32.mrf.mxu0
        %2319 = vmatprep.mubr.f32.mxu0 0.0
        %2320 = vmatmul.mubr.f32.gmra.mxu0 %v2110
        %v2321 = vpop.f32.mrf.mxu0
        %v2322 = vadd.f32 %v2037, %v2321
        %v2323 = vpop.f32.mrf.mxu0
        %2324 = vmatprep.mubr.f32.mxu0 0.0
        %2325 = vmatmul.mubr.f32.gmra.mxu0 %v2113
        %v2326 = vpop.f32.mrf.mxu0
        %v2327 = vadd.f32 %v2037, %v2326
        %v2328 = vpop.f32.mrf.mxu0
        %2329 = vmatprep.mubr.f32.mxu0 0.0
        %2330 = vmatmul.mubr.f32.gmra.mxu0 %v2116
        %v2331 = vpop.f32.mrf.mxu0
        %v2332 = vadd.f32 %v2037, %v2331
        %v2333 = vpop.f32.mrf.mxu0
        %2334 = vmatprep.mubr.f32.mxu0 0.0
        %2335 = vmatmul.mubr.f32.gmra.mxu0 %v2119
        %v2336 = vpop.f32.mrf.mxu0
        %v2337 = vadd.f32 %v2037, %v2336
        %v2338 = vpop.f32.mrf.mxu0
        %2339 = vmatprep.mubr.f32.mxu0 0.0
        %2340 = vmatmul.mubr.f32.gmra.mxu0 %v2122
        %v2341 = vpop.f32.mrf.mxu0
        %v2342 = vadd.f32 %v2037, %v2341
        %v2343 = vpop.f32.mrf.mxu0
        %2344 = vmatprep.mubr.f32.mxu0 0.0
        %2345 = vmatmul.mubr.f32.gmra.mxu0 %v2125
        %v2346 = vpop.f32.mrf.mxu0
        %v2347 = vadd.f32 %v2037, %v2346
        %v2348 = vpop.f32.mrf.mxu0
        %2349 = vmatprep.mubr.f32.mxu0 0.0
        %2350 = vmatmul.mubr.f32.gmra.mxu0 %v2128
        %v2351 = vpop.f32.mrf.mxu0
        %v2352 = vadd.f32 %v2037, %v2351
        %v2353 = vpop.f32.mrf.mxu0
        %2354 = vmatprep.mubr.f32.mxu0 0.0
        %2355 = vmatmul.mubr.f32.gmra.mxu0 %v2131
        %v2356 = vpop.f32.mrf.mxu0
        %v2357 = vadd.f32 %v2037, %v2356
        %v2358 = vpop.f32.mrf.mxu0
        %2359 = vmatprep.mubr.f32.mxu0 0.0
        %2360 = vmatmul.mubr.f32.gmra.mxu0 %v2134
        %v2361 = vpop.f32.mrf.mxu0
        %v2362 = vadd.f32 %v2037, %v2361
        %v2363 = vpop.f32.mrf.mxu0
        %2364 = vdwg.mxu0
        %v2365 = vmax.f32 %v2207, 0.0
        %v2366 = vmax.f32 %v2212, 0.0
        %v2367 = vmax.f32 %v2217, 0.0
        %v2368 = vmax.f32 %v2222, 0.0
        %v2369 = vmax.f32 %v2227, 0.0
        %v2370 = vmax.f32 %v2232, 0.0
        %v2371 = vmax.f32 %v2237, 0.0
        %v2372 = vmax.f32 %v2242, 0.0
        %v2373 = vmax.f32 %v2247, 0.0
        %v2374 = vmax.f32 %v2252, 0.0
        %v2375 = vmax.f32 %v2257, 0.0
        %v2376 = vmax.f32 %v2262, 0.0
        %v2377 = vmax.f32 %v2267, 0.0
        %v2378 = vmax.f32 %v2272, 0.0
        %v2379 = vmax.f32 %v2277, 0.0
        %v2380 = vmax.f32 %v2282, 0.0
        %v2381 = vmax.f32 %v2287, 0.0
        %v2382 = vmax.f32 %v2292, 0.0
        %v2383 = vmax.f32 %v2297, 0.0
        %v2384 = vmax.f32 %v2302, 0.0
        %v2385 = vmax.f32 %v2307, 0.0
        %v2386 = vmax.f32 %v2312, 0.0
        %v2387 = vmax.f32 %v2317, 0.0
        %v2388 = vmax.f32 %v2322, 0.0
        %v2389 = vmax.f32 %v2327, 0.0
        %v2390 = vmax.f32 %v2332, 0.0
        %v2391 = vmax.f32 %v2337, 0.0
        %v2392 = vmax.f32 %v2342, 0.0
        %v2393 = vmax.f32 %v2347, 0.0
        %v2394 = vmax.f32 %v2352, 0.0
        %v2395 = vmax.f32 %v2357, 0.0
        %v2396 = vmax.f32 %v2362, 0.0
        %2397 = vst.msk [vmem:[#allocation3] sm:$0xff] %vm1796, 0.0
        %2398 = vst.msk [vmem:[#allocation3 + $0x8] sm:$0xff] %vm1796, 0.0
        %vm2399 = vcmask 58368
        %2400 = vst.msk [vmem:[#allocation3 + $0x10] sm:$0x3] %vm2399, 0.0
        %2401 = vst.msk [vmem:[#allocation3 + $0x18] sm:$0xff] %vm1796, 0.0
        %2402 = vst.msk [vmem:[#allocation3 + $0x20] sm:$0xff] %vm1796, 0.0
        %2403 = vst.msk [vmem:[#allocation3 + $0x28] sm:$0x3] %vm2399, 0.0
        %2404 = vst.msk [vmem:[#allocation3 + $0x30] sm:$0xff] %vm1796, 0.0
        %2405 = vst.msk [vmem:[#allocation3 + $0x38] sm:$0xff] %vm1796, 0.0
        %2406 = vst.msk [vmem:[#allocation3 + $0x40] sm:$0x3] %vm2399, 0.0
        %2407 = vst.msk [vmem:[#allocation3 + $0x48] sm:$0xff] %vm1796, 0.0
        %2408 = vst.msk [vmem:[#allocation3 + $0x50] sm:$0xff] %vm1796, 0.0
        %2409 = vst.msk [vmem:[#allocation3 + $0x58] sm:$0x3] %vm2399, 0.0
        %2410 = vst.msk [vmem:[#allocation3 + $0x60] sm:$0xff] %vm1796, 0.0
        %2411 = vst.msk [vmem:[#allocation3 + $0x68] sm:$0xff] %vm1796, 0.0
        %2412 = vst.msk [vmem:[#allocation3 + $0x70] sm:$0x3] %vm2399, 0.0
        %2413 = vst.msk [vmem:[#allocation3 + $0x78] sm:$0xff] %vm1796, 0.0
        %2414 = vst.msk [vmem:[#allocation3 + $0x80] sm:$0xff] %vm1796, 0.0
        %2415 = vst.msk [vmem:[#allocation3 + $0x88] sm:$0x3] %vm2399, 0.0
        %2416 = vst.msk [vmem:[#allocation3 + $0x90] sm:$0xff] %vm1796, 0.0
        %2417 = vst.msk [vmem:[#allocation3 + $0x98] sm:$0xff] %vm1796, 0.0
        %2418 = vst.msk [vmem:[#allocation3 + $0xa0] sm:$0x3] %vm2399, 0.0
        %2419 = vst.msk [vmem:[#allocation3 + $0xa8] sm:$0xff] %vm1796, 0.0
        %2420 = vst.msk [vmem:[#allocation3 + $0xb0] sm:$0xff] %vm1796, 0.0
        %2421 = vst.msk [vmem:[#allocation3 + $0xb8] sm:$0x3] %vm2399, 0.0
        %2422 = vst.msk [vmem:[#allocation3 + $0xc0] sm:$0xff] %vm1796, 0.0
        %2423 = vst.msk [vmem:[#allocation3 + $0xc8] sm:$0xff] %vm1796, 0.0
        %2424 = vst.msk [vmem:[#allocation3 + $0xd0] sm:$0x3] %vm2399, 0.0
        %2425 = vst.msk [vmem:[#allocation3 + $0xd8] sm:$0xff] %vm1796, 0.0
        %2426 = vst.msk [vmem:[#allocation3 + $0xe0] sm:$0xff] %vm1796, 0.0
        %2427 = vst.msk [vmem:[#allocation3 + $0xe8] sm:$0x3] %vm2399, 0.0
        %2428 = vst.msk [vmem:[#allocation3 + $0xf0] sm:$0xff] %vm1796, 0.0
        %2429 = vst.msk [vmem:[#allocation3 + $0xf8] sm:$0xff] %vm1796, 0.0
        %2430 = vst.msk [vmem:[#allocation3 + $0x100] sm:$0x3] %vm2399, 0.0
        %2431 = vst.msk [vmem:[#allocation3 + $0x108] sm:$0xff] %vm1796, 0.0
        %2432 = vst.msk [vmem:[#allocation3 + $0x110] sm:$0xff] %vm1796, 0.0
        %2433 = vst.msk [vmem:[#allocation3 + $0x118] sm:$0x3] %vm2399, 0.0
        %2434 = vst.msk [vmem:[#allocation3 + $0x120] sm:$0xff] %vm1796, 0.0
        %2435 = vst.msk [vmem:[#allocation3 + $0x128] sm:$0xff] %vm1796, 0.0
        %2436 = vst.msk [vmem:[#allocation3 + $0x130] sm:$0x3] %vm2399, 0.0
        %2437 = vst.msk [vmem:[#allocation3 + $0x138] sm:$0xff] %vm1796, 0.0
        %2438 = vst.msk [vmem:[#allocation3 + $0x140] sm:$0xff] %vm1796, 0.0
        %2439 = vst.msk [vmem:[#allocation3 + $0x148] sm:$0x3] %vm2399, 0.0
        %2440 = vst.msk [vmem:[#allocation3 + $0x150] sm:$0xff] %vm1796, 0.0
        %2441 = vst.msk [vmem:[#allocation3 + $0x158] sm:$0xff] %vm1796, 0.0
        %2442 = vst.msk [vmem:[#allocation3 + $0x160] sm:$0x3] %vm2399, 0.0
        %2443 = vst.msk [vmem:[#allocation3 + $0x168] sm:$0xff] %vm1796, 0.0
        %2444 = vst.msk [vmem:[#allocation3 + $0x170] sm:$0xff] %vm1796, 0.0
        %2445 = vst.msk [vmem:[#allocation3 + $0x178] sm:$0x3] %vm2399, 0.0
        %2446 = vst.msk [vmem:[#allocation3 + $0x180] sm:$0xff] %vm1796, 0.0
        %2447 = vst.msk [vmem:[#allocation3 + $0x188] sm:$0xff] %vm1796, 0.0
        %2448 = vst.msk [vmem:[#allocation3 + $0x190] sm:$0x3] %vm2399, 0.0
        %2449 = vst.msk [vmem:[#allocation3 + $0x198] sm:$0xff] %vm1796, 0.0
        %2450 = vst.msk [vmem:[#allocation3 + $0x1a0] sm:$0xff] %vm1796, 0.0
        %2451 = vst.msk [vmem:[#allocation3 + $0x1a8] sm:$0x3] %vm2399, 0.0
        %s2452 = scalar_lea.vmem [#allocation3], 24
        %2453 = vst.msk [vmem:[%s2452 + $0x1] sm:$0xff] %vm1796, %v2365
        %2454 = vst.msk [vmem:[%s2452 + $0x9] sm:$0xff] %vm1796, %v2366
        %2455 = vst.msk [vmem:[%s2452 + $0x19] sm:$0xff] %vm1796, %v2367
        %2456 = vst.msk [vmem:[%s2452 + $0x21] sm:$0xff] %vm1796, %v2368
        %2457 = vst.msk [vmem:[%s2452 + $0x31] sm:$0xff] %vm1796, %v2369
        %2458 = vst.msk [vmem:[%s2452 + $0x39] sm:$0xff] %vm1796, %v2370
        %2459 = vst.msk [vmem:[%s2452 + $0x49] sm:$0xff] %vm1796, %v2371
        %2460 = vst.msk [vmem:[%s2452 + $0x51] sm:$0xff] %vm1796, %v2372
        %2461 = vst.msk [vmem:[%s2452 + $0x61] sm:$0xff] %vm1796, %v2373
        %2462 = vst.msk [vmem:[%s2452 + $0x69] sm:$0xff] %vm1796, %v2374
        %2463 = vst.msk [vmem:[%s2452 + $0x79] sm:$0xff] %vm1796, %v2375
        %2464 = vst.msk [vmem:[%s2452 + $0x81] sm:$0xff] %vm1796, %v2376
        %2465 = vst.msk [vmem:[%s2452 + $0x91] sm:$0xff] %vm1796, %v2377
        %2466 = vst.msk [vmem:[%s2452 + $0x99] sm:$0xff] %vm1796, %v2378
        %2467 = vst.msk [vmem:[%s2452 + $0xa9] sm:$0xff] %vm1796, %v2379
        %2468 = vst.msk [vmem:[%s2452 + $0xb1] sm:$0xff] %vm1796, %v2380
        %2469 = vst.msk [vmem:[%s2452 + $0xc1] sm:$0xff] %vm1796, %v2381
        %2470 = vst.msk [vmem:[%s2452 + $0xc9] sm:$0xff] %vm1796, %v2382
        %2471 = vst.msk [vmem:[%s2452 + $0xd9] sm:$0xff] %vm1796, %v2383
        %2472 = vst.msk [vmem:[%s2452 + $0xe1] sm:$0xff] %vm1796, %v2384
        %2473 = vst.msk [vmem:[%s2452 + $0xf1] sm:$0xff] %vm1796, %v2385
        %2474 = vst.msk [vmem:[%s2452 + $0xf9] sm:$0xff] %vm1796, %v2386
        %2475 = vst.msk [vmem:[%s2452 + $0x109] sm:$0xff] %vm1796, %v2387
        %2476 = vst.msk [vmem:[%s2452 + $0x111] sm:$0xff] %vm1796, %v2388
        %2477 = vst.msk [vmem:[%s2452 + $0x121] sm:$0xff] %vm1796, %v2389
        %2478 = vst.msk [vmem:[%s2452 + $0x129] sm:$0xff] %vm1796, %v2390
        %2479 = vst.msk [vmem:[%s2452 + $0x139] sm:$0xff] %vm1796, %v2391
        %2480 = vst.msk [vmem:[%s2452 + $0x141] sm:$0xff] %vm1796, %v2392
        %2481 = vst.msk [vmem:[%s2452 + $0x151] sm:$0xff] %vm1796, %v2393
        %2482 = vst.msk [vmem:[%s2452 + $0x159] sm:$0xff] %vm1796, %v2394
        %2483 = vst.msk [vmem:[%s2452 + $0x169] sm:$0xff] %vm1796, %v2395
        %2484 = vst.msk [vmem:[%s2452 + $0x171] sm:$0xff] %vm1796, %v2396
        %v2485 = vld [vmem:[#allocation3] sm:$0xff]
        %v2486 = vld [vmem:[#allocation3 + $0x8] sm:$0xff]
        %v2487 = vld [vmem:[#allocation3 + $0x18] sm:$0xff]
        %v2488 = vld [vmem:[#allocation3 + $0x20] sm:$0xff]
        %v2489 = vld [vmem:[#allocation3 + $0x30] sm:$0xff]
        %v2490 = vld [vmem:[#allocation3 + $0x38] sm:$0xff]
        %v2491 = vld [vmem:[#allocation3 + $0x48] sm:$0xff]
        %v2492 = vld [vmem:[#allocation3 + $0x50] sm:$0xff]
        %v2493 = vld [vmem:[#allocation3 + $0x60] sm:$0xff]
        %v2494 = vld [vmem:[#allocation3 + $0x68] sm:$0xff]
        %v2495 = vld [vmem:[#allocation3 + $0x78] sm:$0xff]
        %v2496 = vld [vmem:[#allocation3 + $0x80] sm:$0xff]
        %v2497 = vld [vmem:[#allocation3 + $0x90] sm:$0xff]
        %v2498 = vld [vmem:[#allocation3 + $0x98] sm:$0xff]
        %v2499 = vld [vmem:[#allocation3 + $0xa8] sm:$0xff]
        %v2500 = vld [vmem:[#allocation3 + $0xb0] sm:$0xff]
        %v2501 = vld [vmem:[#allocation3 + $0xc0] sm:$0xff]
        %v2502 = vld [vmem:[#allocation3 + $0xc8] sm:$0xff]
        %v2503 = vld [vmem:[#allocation3 + $0xd8] sm:$0xff]
        %v2504 = vld [vmem:[#allocation3 + $0xe0] sm:$0xff]
        %v2505 = vld [vmem:[#allocation3 + $0xf0] sm:$0xff]
        %v2506 = vld [vmem:[#allocation3 + $0xf8] sm:$0xff]
        %v2507 = vld [vmem:[#allocation3 + $0x108] sm:$0xff]
        %v2508 = vld [vmem:[#allocation3 + $0x110] sm:$0xff]
        %v2509 = vld [vmem:[#allocation3 + $0x120] sm:$0xff]
        %v2510 = vld [vmem:[#allocation3 + $0x128] sm:$0xff]
        %v2511 = vld [vmem:[#allocation3 + $0x138] sm:$0xff]
        %v2512 = vld [vmem:[#allocation3 + $0x140] sm:$0xff]
        %v2513 = vld [vmem:[#allocation3 + $0x150] sm:$0xff]
        %v2514 = vld [vmem:[#allocation3 + $0x158] sm:$0xff]
        %v2515 = vld [vmem:[#allocation3 + $0x168] sm:$0xff]
        %v2516 = vld [vmem:[#allocation3 + $0x170] sm:$0xff]
        %v2517 = vld [vmem:[#allocation3 + $0x1] sm:$0xff]
        %v2518 = vld [vmem:[#allocation3 + $0x9] sm:$0xff]
        %v2519 = vld [vmem:[#allocation3 + $0x19] sm:$0xff]
        %v2520 = vld [vmem:[#allocation3 + $0x21] sm:$0xff]
        %v2521 = vld [vmem:[#allocation3 + $0x31] sm:$0xff]
        %v2522 = vld [vmem:[#allocation3 + $0x39] sm:$0xff]
        %v2523 = vld [vmem:[#allocation3 + $0x49] sm:$0xff]
        %v2524 = vld [vmem:[#allocation3 + $0x51] sm:$0xff]
        %v2525 = vld [vmem:[#allocation3 + $0x61] sm:$0xff]
        %v2526 = vld [vmem:[#allocation3 + $0x69] sm:$0xff]
        %v2527 = vld [vmem:[#allocation3 + $0x79] sm:$0xff]
        %v2528 = vld [vmem:[#allocation3 + $0x81] sm:$0xff]
        %v2529 = vld [vmem:[#allocation3 + $0x91] sm:$0xff]
        %v2530 = vld [vmem:[#allocation3 + $0x99] sm:$0xff]
        %v2531 = vld [vmem:[#allocation3 + $0xa9] sm:$0xff]
        %v2532 = vld [vmem:[#allocation3 + $0xb1] sm:$0xff]
        %v2533 = vld [vmem:[#allocation3 + $0xc1] sm:$0xff]
        %v2534 = vld [vmem:[#allocation3 + $0xc9] sm:$0xff]
        %v2535 = vld [vmem:[#allocation3 + $0xd9] sm:$0xff]
        %v2536 = vld [vmem:[#allocation3 + $0xe1] sm:$0xff]
        %v2537 = vld [vmem:[#allocation3 + $0xf1] sm:$0xff]
        %v2538 = vld [vmem:[#allocation3 + $0xf9] sm:$0xff]
        %v2539 = vld [vmem:[#allocation3 + $0x109] sm:$0xff]
        %v2540 = vld [vmem:[#allocation3 + $0x111] sm:$0xff]
        %v2541 = vld [vmem:[#allocation3 + $0x121] sm:$0xff]
        %v2542 = vld [vmem:[#allocation3 + $0x129] sm:$0xff]
        %v2543 = vld [vmem:[#allocation3 + $0x139] sm:$0xff]
        %v2544 = vld [vmem:[#allocation3 + $0x141] sm:$0xff]
        %v2545 = vld [vmem:[#allocation3 + $0x151] sm:$0xff]
        %v2546 = vld [vmem:[#allocation3 + $0x159] sm:$0xff]
        %v2547 = vld [vmem:[#allocation3 + $0x169] sm:$0xff]
        %v2548 = vld [vmem:[#allocation3 + $0x171] sm:$0xff]
        %v2549 = vld [vmem:[#allocation3 + $0x2] sm:$0xff]
        %v2550 = vld [vmem:[#allocation3 + $0xa] sm:$0xff]
        %v2551 = vld [vmem:[#allocation3 + $0x1a] sm:$0xff]
        %v2552 = vld [vmem:[#allocation3 + $0x22] sm:$0xff]
        %v2553 = vld [vmem:[#allocation3 + $0x32] sm:$0xff]
        %v2554 = vld [vmem:[#allocation3 + $0x3a] sm:$0xff]
        %v2555 = vld [vmem:[#allocation3 + $0x4a] sm:$0xff]
        %v2556 = vld [vmem:[#allocation3 + $0x52] sm:$0xff]
        %v2557 = vld [vmem:[#allocation3 + $0x62] sm:$0xff]
        %v2558 = vld [vmem:[#allocation3 + $0x6a] sm:$0xff]
        %v2559 = vld [vmem:[#allocation3 + $0x7a] sm:$0xff]
        %v2560 = vld [vmem:[#allocation3 + $0x82] sm:$0xff]
        %v2561 = vld [vmem:[#allocation3 + $0x92] sm:$0xff]
        %v2562 = vld [vmem:[#allocation3 + $0x9a] sm:$0xff]
        %v2563 = vld [vmem:[#allocation3 + $0xaa] sm:$0xff]
        %v2564 = vld [vmem:[#allocation3 + $0xb2] sm:$0xff]
        %v2565 = vld [vmem:[#allocation3 + $0xc2] sm:$0xff]
        %v2566 = vld [vmem:[#allocation3 + $0xca] sm:$0xff]
        %v2567 = vld [vmem:[#allocation3 + $0xda] sm:$0xff]
        %v2568 = vld [vmem:[#allocation3 + $0xe2] sm:$0xff]
        %v2569 = vld [vmem:[#allocation3 + $0xf2] sm:$0xff]
        %v2570 = vld [vmem:[#allocation3 + $0xfa] sm:$0xff]
        %v2571 = vld [vmem:[#allocation3 + $0x10a] sm:$0xff]
        %v2572 = vld [vmem:[#allocation3 + $0x112] sm:$0xff]
        %v2573 = vld [vmem:[#allocation3 + $0x122] sm:$0xff]
        %v2574 = vld [vmem:[#allocation3 + $0x12a] sm:$0xff]
        %v2575 = vld [vmem:[#allocation3 + $0x13a] sm:$0xff]
        %v2576 = vld [vmem:[#allocation3 + $0x142] sm:$0xff]
        %v2577 = vld [vmem:[#allocation3 + $0x152] sm:$0xff]
        %v2578 = vld [vmem:[#allocation3 + $0x15a] sm:$0xff]
        %v2579 = vld [vmem:[#allocation3 + $0x16a] sm:$0xff]
        %v2580 = vld [vmem:[#allocation3 + $0x172] sm:$0xff]
        %v2581 = vld [vmem:[%s2452] sm:$0xff]
        %v2582 = vld [vmem:[%s2452 + $0x8] sm:$0xff]
        %v2583 = vld [vmem:[%s2452 + $0x18] sm:$0xff]
        %v2584 = vld [vmem:[%s2452 + $0x20] sm:$0xff]
        %v2585 = vld [vmem:[%s2452 + $0x30] sm:$0xff]
        %v2586 = vld [vmem:[%s2452 + $0x38] sm:$0xff]
        %v2587 = vld [vmem:[%s2452 + $0x48] sm:$0xff]
        %v2588 = vld [vmem:[%s2452 + $0x50] sm:$0xff]
        %v2589 = vld [vmem:[%s2452 + $0x60] sm:$0xff]
        %v2590 = vld [vmem:[%s2452 + $0x68] sm:$0xff]
        %v2591 = vld [vmem:[%s2452 + $0x78] sm:$0xff]
        %v2592 = vld [vmem:[%s2452 + $0x80] sm:$0xff]
        %v2593 = vld [vmem:[%s2452 + $0x90] sm:$0xff]
        %v2594 = vld [vmem:[%s2452 + $0x98] sm:$0xff]
        %v2595 = vld [vmem:[%s2452 + $0xa8] sm:$0xff]
        %v2596 = vld [vmem:[%s2452 + $0xb0] sm:$0xff]
        %v2597 = vld [vmem:[%s2452 + $0xc0] sm:$0xff]
        %v2598 = vld [vmem:[%s2452 + $0xc8] sm:$0xff]
        %v2599 = vld [vmem:[%s2452 + $0xd8] sm:$0xff]
        %v2600 = vld [vmem:[%s2452 + $0xe0] sm:$0xff]
        %v2601 = vld [vmem:[%s2452 + $0xf0] sm:$0xff]
        %v2602 = vld [vmem:[%s2452 + $0xf8] sm:$0xff]
        %v2603 = vld [vmem:[%s2452 + $0x108] sm:$0xff]
        %v2604 = vld [vmem:[%s2452 + $0x110] sm:$0xff]
        %v2605 = vld [vmem:[%s2452 + $0x120] sm:$0xff]
        %v2606 = vld [vmem:[%s2452 + $0x128] sm:$0xff]
        %v2607 = vld [vmem:[%s2452 + $0x138] sm:$0xff]
        %v2608 = vld [vmem:[%s2452 + $0x140] sm:$0xff]
        %v2609 = vld [vmem:[%s2452 + $0x150] sm:$0xff]
        %v2610 = vld [vmem:[%s2452 + $0x158] sm:$0xff]
        %v2611 = vld [vmem:[%s2452 + $0x168] sm:$0xff]
        %v2612 = vld [vmem:[%s2452 + $0x170] sm:$0xff]
        %v2613 = vld [vmem:[%s2452 + $0x1] sm:$0xff]
        %v2614 = vld [vmem:[%s2452 + $0x9] sm:$0xff]
        %v2615 = vld [vmem:[%s2452 + $0x19] sm:$0xff]
        %v2616 = vld [vmem:[%s2452 + $0x21] sm:$0xff]
        %v2617 = vld [vmem:[%s2452 + $0x31] sm:$0xff]
        %v2618 = vld [vmem:[%s2452 + $0x39] sm:$0xff]
        %v2619 = vld [vmem:[%s2452 + $0x49] sm:$0xff]
        %v2620 = vld [vmem:[%s2452 + $0x51] sm:$0xff]
        %v2621 = vld [vmem:[%s2452 + $0x61] sm:$0xff]
        %v2622 = vld [vmem:[%s2452 + $0x69] sm:$0xff]
        %v2623 = vld [vmem:[%s2452 + $0x79] sm:$0xff]
        %v2624 = vld [vmem:[%s2452 + $0x81] sm:$0xff]
        %v2625 = vld [vmem:[%s2452 + $0x91] sm:$0xff]
        %v2626 = vld [vmem:[%s2452 + $0x99] sm:$0xff]
        %v2627 = vld [vmem:[%s2452 + $0xa9] sm:$0xff]
        %v2628 = vld [vmem:[%s2452 + $0xb1] sm:$0xff]
        %v2629 = vld [vmem:[%s2452 + $0xc1] sm:$0xff]
        %v2630 = vld [vmem:[%s2452 + $0xc9] sm:$0xff]
        %v2631 = vld [vmem:[%s2452 + $0xd9] sm:$0xff]
        %v2632 = vld [vmem:[%s2452 + $0xe1] sm:$0xff]
        %v2633 = vld [vmem:[%s2452 + $0xf1] sm:$0xff]
        %v2634 = vld [vmem:[%s2452 + $0xf9] sm:$0xff]
        %v2635 = vld [vmem:[%s2452 + $0x109] sm:$0xff]
        %v2636 = vld [vmem:[%s2452 + $0x111] sm:$0xff]
        %v2637 = vld [vmem:[%s2452 + $0x121] sm:$0xff]
        %v2638 = vld [vmem:[%s2452 + $0x129] sm:$0xff]
        %v2639 = vld [vmem:[%s2452 + $0x139] sm:$0xff]
        %v2640 = vld [vmem:[%s2452 + $0x141] sm:$0xff]
        %v2641 = vld [vmem:[%s2452 + $0x151] sm:$0xff]
        %v2642 = vld [vmem:[%s2452 + $0x159] sm:$0xff]
        %v2643 = vld [vmem:[%s2452 + $0x169] sm:$0xff]
        %v2644 = vld [vmem:[%s2452 + $0x171] sm:$0xff]
        %v2645 = vld [vmem:[%s2452 + $0x2] sm:$0xff]
        %v2646 = vld [vmem:[%s2452 + $0xa] sm:$0xff]
        %v2647 = vld [vmem:[%s2452 + $0x1a] sm:$0xff]
        %v2648 = vld [vmem:[%s2452 + $0x22] sm:$0xff]
        %v2649 = vld [vmem:[%s2452 + $0x32] sm:$0xff]
        %v2650 = vld [vmem:[%s2452 + $0x3a] sm:$0xff]
        %v2651 = vld [vmem:[%s2452 + $0x4a] sm:$0xff]
        %v2652 = vld [vmem:[%s2452 + $0x52] sm:$0xff]
        %v2653 = vld [vmem:[%s2452 + $0x62] sm:$0xff]
        %v2654 = vld [vmem:[%s2452 + $0x6a] sm:$0xff]
        %v2655 = vld [vmem:[%s2452 + $0x7a] sm:$0xff]
        %v2656 = vld [vmem:[%s2452 + $0x82] sm:$0xff]
        %v2657 = vld [vmem:[%s2452 + $0x92] sm:$0xff]
        %v2658 = vld [vmem:[%s2452 + $0x9a] sm:$0xff]
        %v2659 = vld [vmem:[%s2452 + $0xaa] sm:$0xff]
        %v2660 = vld [vmem:[%s2452 + $0xb2] sm:$0xff]
        %v2661 = vld [vmem:[%s2452 + $0xc2] sm:$0xff]
        %v2662 = vld [vmem:[%s2452 + $0xca] sm:$0xff]
        %v2663 = vld [vmem:[%s2452 + $0xda] sm:$0xff]
        %v2664 = vld [vmem:[%s2452 + $0xe2] sm:$0xff]
        %v2665 = vld [vmem:[%s2452 + $0xf2] sm:$0xff]
        %v2666 = vld [vmem:[%s2452 + $0xfa] sm:$0xff]
        %v2667 = vld [vmem:[%s2452 + $0x10a] sm:$0xff]
        %v2668 = vld [vmem:[%s2452 + $0x112] sm:$0xff]
        %v2669 = vld [vmem:[%s2452 + $0x122] sm:$0xff]
        %v2670 = vld [vmem:[%s2452 + $0x12a] sm:$0xff]
        %v2671 = vld [vmem:[%s2452 + $0x13a] sm:$0xff]
        %v2672 = vld [vmem:[%s2452 + $0x142] sm:$0xff]
        %v2673 = vld [vmem:[%s2452 + $0x152] sm:$0xff]
        %v2674 = vld [vmem:[%s2452 + $0x15a] sm:$0xff]
        %v2675 = vld [vmem:[%s2452 + $0x16a] sm:$0xff]
        %v2676 = vld [vmem:[%s2452 + $0x172] sm:$0xff]
        %s2677 = scalar_lea.vmem [#allocation3], 48
        %v2678 = vld [vmem:[%s2677] sm:$0xff]
        %v2679 = vld [vmem:[%s2677 + $0x8] sm:$0xff]
        %v2680 = vld [vmem:[%s2677 + $0x18] sm:$0xff]
        %v2681 = vld [vmem:[%s2677 + $0x20] sm:$0xff]
        %v2682 = vld [vmem:[%s2677 + $0x30] sm:$0xff]
        %v2683 = vld [vmem:[%s2677 + $0x38] sm:$0xff]
        %v2684 = vld [vmem:[%s2677 + $0x48] sm:$0xff]
        %v2685 = vld [vmem:[%s2677 + $0x50] sm:$0xff]
        %v2686 = vld [vmem:[%s2677 + $0x60] sm:$0xff]
        %v2687 = vld [vmem:[%s2677 + $0x68] sm:$0xff]
        %v2688 = vld [vmem:[%s2677 + $0x78] sm:$0xff]
        %v2689 = vld [vmem:[%s2677 + $0x80] sm:$0xff]
        %v2690 = vld [vmem:[%s2677 + $0x90] sm:$0xff]
        %v2691 = vld [vmem:[%s2677 + $0x98] sm:$0xff]
        %v2692 = vld [vmem:[%s2677 + $0xa8] sm:$0xff]
        %v2693 = vld [vmem:[%s2677 + $0xb0] sm:$0xff]
        %v2694 = vld [vmem:[%s2677 + $0xc0] sm:$0xff]
        %v2695 = vld [vmem:[%s2677 + $0xc8] sm:$0xff]
        %v2696 = vld [vmem:[%s2677 + $0xd8] sm:$0xff]
        %v2697 = vld [vmem:[%s2677 + $0xe0] sm:$0xff]
        %v2698 = vld [vmem:[%s2677 + $0xf0] sm:$0xff]
        %v2699 = vld [vmem:[%s2677 + $0xf8] sm:$0xff]
        %v2700 = vld [vmem:[%s2677 + $0x108] sm:$0xff]
        %v2701 = vld [vmem:[%s2677 + $0x110] sm:$0xff]
        %v2702 = vld [vmem:[%s2677 + $0x120] sm:$0xff]
        %v2703 = vld [vmem:[%s2677 + $0x128] sm:$0xff]
        %v2704 = vld [vmem:[%s2677 + $0x138] sm:$0xff]
        %v2705 = vld [vmem:[%s2677 + $0x140] sm:$0xff]
        %v2706 = vld [vmem:[%s2677 + $0x150] sm:$0xff]
        %v2707 = vld [vmem:[%s2677 + $0x158] sm:$0xff]
        %v2708 = vld [vmem:[%s2677 + $0x168] sm:$0xff]
        %v2709 = vld [vmem:[%s2677 + $0x170] sm:$0xff]
        %v2710 = vld [vmem:[%s2677 + $0x1] sm:$0xff]
        %v2711 = vld [vmem:[%s2677 + $0x9] sm:$0xff]
        %v2712 = vld [vmem:[%s2677 + $0x19] sm:$0xff]
        %v2713 = vld [vmem:[%s2677 + $0x21] sm:$0xff]
        %v2714 = vld [vmem:[%s2677 + $0x31] sm:$0xff]
        %v2715 = vld [vmem:[%s2677 + $0x39] sm:$0xff]
        %v2716 = vld [vmem:[%s2677 + $0x49] sm:$0xff]
        %v2717 = vld [vmem:[%s2677 + $0x51] sm:$0xff]
        %v2718 = vld [vmem:[%s2677 + $0x61] sm:$0xff]
        %v2719 = vld [vmem:[%s2677 + $0x69] sm:$0xff]
        %v2720 = vld [vmem:[%s2677 + $0x79] sm:$0xff]
        %v2721 = vld [vmem:[%s2677 + $0x81] sm:$0xff]
        %v2722 = vld [vmem:[%s2677 + $0x91] sm:$0xff]
        %v2723 = vld [vmem:[%s2677 + $0x99] sm:$0xff]
        %v2724 = vld [vmem:[%s2677 + $0xa9] sm:$0xff]
        %v2725 = vld [vmem:[%s2677 + $0xb1] sm:$0xff]
        %v2726 = vld [vmem:[%s2677 + $0xc1] sm:$0xff]
        %v2727 = vld [vmem:[%s2677 + $0xc9] sm:$0xff]
        %v2728 = vld [vmem:[%s2677 + $0xd9] sm:$0xff]
        %v2729 = vld [vmem:[%s2677 + $0xe1] sm:$0xff]
        %v2730 = vld [vmem:[%s2677 + $0xf1] sm:$0xff]
        %v2731 = vld [vmem:[%s2677 + $0xf9] sm:$0xff]
        %v2732 = vld [vmem:[%s2677 + $0x109] sm:$0xff]
        %v2733 = vld [vmem:[%s2677 + $0x111] sm:$0xff]
        %v2734 = vld [vmem:[%s2677 + $0x121] sm:$0xff]
        %v2735 = vld [vmem:[%s2677 + $0x129] sm:$0xff]
        %v2736 = vld [vmem:[%s2677 + $0x139] sm:$0xff]
        %v2737 = vld [vmem:[%s2677 + $0x141] sm:$0xff]
        %v2738 = vld [vmem:[%s2677 + $0x151] sm:$0xff]
        %v2739 = vld [vmem:[%s2677 + $0x159] sm:$0xff]
        %v2740 = vld [vmem:[%s2677 + $0x169] sm:$0xff]
        %v2741 = vld [vmem:[%s2677 + $0x171] sm:$0xff]
        %v2742 = vld [vmem:[%s2677 + $0x2] sm:$0xff]
        %v2743 = vld [vmem:[%s2677 + $0xa] sm:$0xff]
        %v2744 = vld [vmem:[%s2677 + $0x1a] sm:$0xff]
        %v2745 = vld [vmem:[%s2677 + $0x22] sm:$0xff]
        %v2746 = vld [vmem:[%s2677 + $0x32] sm:$0xff]
        %v2747 = vld [vmem:[%s2677 + $0x3a] sm:$0xff]
        %v2748 = vld [vmem:[%s2677 + $0x4a] sm:$0xff]
        %v2749 = vld [vmem:[%s2677 + $0x52] sm:$0xff]
        %v2750 = vld [vmem:[%s2677 + $0x62] sm:$0xff]
        %v2751 = vld [vmem:[%s2677 + $0x6a] sm:$0xff]
        %v2752 = vld [vmem:[%s2677 + $0x7a] sm:$0xff]
        %v2753 = vld [vmem:[%s2677 + $0x82] sm:$0xff]
        %v2754 = vld [vmem:[%s2677 + $0x92] sm:$0xff]
        %v2755 = vld [vmem:[%s2677 + $0x9a] sm:$0xff]
        %v2756 = vld [vmem:[%s2677 + $0xaa] sm:$0xff]
        %v2757 = vld [vmem:[%s2677 + $0xb2] sm:$0xff]
        %v2758 = vld [vmem:[%s2677 + $0xc2] sm:$0xff]
        %v2759 = vld [vmem:[%s2677 + $0xca] sm:$0xff]
        %v2760 = vld [vmem:[%s2677 + $0xda] sm:$0xff]
        %v2761 = vld [vmem:[%s2677 + $0xe2] sm:$0xff]
        %v2762 = vld [vmem:[%s2677 + $0xf2] sm:$0xff]
        %v2763 = vld [vmem:[%s2677 + $0xfa] sm:$0xff]
        %v2764 = vld [vmem:[%s2677 + $0x10a] sm:$0xff]
        %v2765 = vld [vmem:[%s2677 + $0x112] sm:$0xff]
        %v2766 = vld [vmem:[%s2677 + $0x122] sm:$0xff]
        %v2767 = vld [vmem:[%s2677 + $0x12a] sm:$0xff]
        %v2768 = vld [vmem:[%s2677 + $0x13a] sm:$0xff]
        %v2769 = vld [vmem:[%s2677 + $0x142] sm:$0xff]
        %v2770 = vld [vmem:[%s2677 + $0x152] sm:$0xff]
        %v2771 = vld [vmem:[%s2677 + $0x15a] sm:$0xff]
        %v2772 = vld [vmem:[%s2677 + $0x16a] sm:$0xff]
        %v2773 = vld [vmem:[%s2677 + $0x172] sm:$0xff]
        %2806 = vrot.lane.b32.xlu0 %v2517, 8
        %v2807 = vpop.permute.xlu0 %2806
        %2808 = vrot.lane.b32.xlu0 %v2518, 8
        %v2809 = vpop.permute.xlu0 %2808
        %2810 = vrot.lane.b32.xlu0 %v2519, 8
        %v2811 = vpop.permute.xlu0 %2810
        %2812 = vrot.lane.b32.xlu0 %v2520, 8
        %v2813 = vpop.permute.xlu0 %2812
        %2814 = vrot.lane.b32.xlu0 %v2521, 8
        %v2815 = vpop.permute.xlu0 %2814
        %2816 = vrot.lane.b32.xlu0 %v2522, 8
        %v2817 = vpop.permute.xlu0 %2816
        %2818 = vrot.lane.b32.xlu0 %v2523, 8
        %v2819 = vpop.permute.xlu0 %2818
        %2820 = vrot.lane.b32.xlu0 %v2524, 8
        %v2821 = vpop.permute.xlu0 %2820
        %2822 = vrot.lane.b32.xlu0 %v2525, 8
        %v2823 = vpop.permute.xlu0 %2822
        %2824 = vrot.lane.b32.xlu0 %v2526, 8
        %v2825 = vpop.permute.xlu0 %2824
        %2826 = vrot.lane.b32.xlu0 %v2527, 8
        %v2827 = vpop.permute.xlu0 %2826
        %2828 = vrot.lane.b32.xlu0 %v2528, 8
        %v2829 = vpop.permute.xlu0 %2828
        %2830 = vrot.lane.b32.xlu0 %v2529, 8
        %v2831 = vpop.permute.xlu0 %2830
        %2832 = vrot.lane.b32.xlu0 %v2530, 8
        %v2833 = vpop.permute.xlu0 %2832
        %2834 = vrot.lane.b32.xlu0 %v2531, 8
        %v2835 = vpop.permute.xlu0 %2834
        %2836 = vrot.lane.b32.xlu0 %v2532, 8
        %v2837 = vpop.permute.xlu0 %2836
        %2838 = vrot.lane.b32.xlu0 %v2533, 8
        %v2839 = vpop.permute.xlu0 %2838
        %2840 = vrot.lane.b32.xlu0 %v2534, 8
        %v2841 = vpop.permute.xlu0 %2840
        %2842 = vrot.lane.b32.xlu0 %v2535, 8
        %v2843 = vpop.permute.xlu0 %2842
        %2844 = vrot.lane.b32.xlu0 %v2536, 8
        %v2845 = vpop.permute.xlu0 %2844
        %2846 = vrot.lane.b32.xlu0 %v2537, 8
        %v2847 = vpop.permute.xlu0 %2846
        %2848 = vrot.lane.b32.xlu0 %v2538, 8
        %v2849 = vpop.permute.xlu0 %2848
        %2850 = vrot.lane.b32.xlu0 %v2539, 8
        %v2851 = vpop.permute.xlu0 %2850
        %2852 = vrot.lane.b32.xlu0 %v2540, 8
        %v2853 = vpop.permute.xlu0 %2852
        %2854 = vrot.lane.b32.xlu0 %v2541, 8
        %v2855 = vpop.permute.xlu0 %2854
        %2856 = vrot.lane.b32.xlu0 %v2542, 8
        %v2857 = vpop.permute.xlu0 %2856
        %2858 = vrot.lane.b32.xlu0 %v2543, 8
        %v2859 = vpop.permute.xlu0 %2858
        %2860 = vrot.lane.b32.xlu0 %v2544, 8
        %v2861 = vpop.permute.xlu0 %2860
        %2862 = vrot.lane.b32.xlu0 %v2545, 8
        %v2863 = vpop.permute.xlu0 %2862
        %2864 = vrot.lane.b32.xlu0 %v2546, 8
        %v2865 = vpop.permute.xlu0 %2864
        %2866 = vrot.lane.b32.xlu0 %v2547, 8
        %v2867 = vpop.permute.xlu0 %2866
        %2868 = vrot.lane.b32.xlu0 %v2548, 8
        %v2869 = vpop.permute.xlu0 %2868
        %2934 = vrot.lane.b32.xlu0 %v2549, 16
        %v2935 = vpop.permute.xlu0 %2934
        %2936 = vrot.lane.b32.xlu0 %v2550, 16
        %v2937 = vpop.permute.xlu0 %2936
        %2938 = vrot.lane.b32.xlu0 %v2551, 16
        %v2939 = vpop.permute.xlu0 %2938
        %2940 = vrot.lane.b32.xlu0 %v2552, 16
        %v2941 = vpop.permute.xlu0 %2940
        %2942 = vrot.lane.b32.xlu0 %v2553, 16
        %v2943 = vpop.permute.xlu0 %2942
        %2944 = vrot.lane.b32.xlu0 %v2554, 16
        %v2945 = vpop.permute.xlu0 %2944
        %2946 = vrot.lane.b32.xlu0 %v2555, 16
        %v2947 = vpop.permute.xlu0 %2946
        %2948 = vrot.lane.b32.xlu0 %v2556, 16
        %v2949 = vpop.permute.xlu0 %2948
        %2950 = vrot.lane.b32.xlu0 %v2557, 16
        %v2951 = vpop.permute.xlu0 %2950
        %2952 = vrot.lane.b32.xlu0 %v2558, 16
        %v2953 = vpop.permute.xlu0 %2952
        %2954 = vrot.lane.b32.xlu0 %v2559, 16
        %v2955 = vpop.permute.xlu0 %2954
        %2956 = vrot.lane.b32.xlu0 %v2560, 16
        %v2957 = vpop.permute.xlu0 %2956
        %2958 = vrot.lane.b32.xlu0 %v2561, 16
        %v2959 = vpop.permute.xlu0 %2958
        %2960 = vrot.lane.b32.xlu0 %v2562, 16
        %v2961 = vpop.permute.xlu0 %2960
        %2962 = vrot.lane.b32.xlu0 %v2563, 16
        %v2963 = vpop.permute.xlu0 %2962
        %2964 = vrot.lane.b32.xlu0 %v2564, 16
        %v2965 = vpop.permute.xlu0 %2964
        %2966 = vrot.lane.b32.xlu0 %v2565, 16
        %v2967 = vpop.permute.xlu0 %2966
        %2968 = vrot.lane.b32.xlu0 %v2566, 16
        %v2969 = vpop.permute.xlu0 %2968
        %2970 = vrot.lane.b32.xlu0 %v2567, 16
        %v2971 = vpop.permute.xlu0 %2970
        %2972 = vrot.lane.b32.xlu0 %v2568, 16
        %v2973 = vpop.permute.xlu0 %2972
        %2974 = vrot.lane.b32.xlu0 %v2569, 16
        %v2975 = vpop.permute.xlu0 %2974
        %2976 = vrot.lane.b32.xlu0 %v2570, 16
        %v2977 = vpop.permute.xlu0 %2976
        %2978 = vrot.lane.b32.xlu0 %v2571, 16
        %v2979 = vpop.permute.xlu0 %2978
        %2980 = vrot.lane.b32.xlu0 %v2572, 16
        %v2981 = vpop.permute.xlu0 %2980
        %2982 = vrot.lane.b32.xlu0 %v2573, 16
        %v2983 = vpop.permute.xlu0 %2982
        %2984 = vrot.lane.b32.xlu0 %v2574, 16
        %v2985 = vpop.permute.xlu0 %2984
        %2986 = vrot.lane.b32.xlu0 %v2575, 16
        %v2987 = vpop.permute.xlu0 %2986
        %2988 = vrot.lane.b32.xlu0 %v2576, 16
        %v2989 = vpop.permute.xlu0 %2988
        %2990 = vrot.lane.b32.xlu0 %v2577, 16
        %v2991 = vpop.permute.xlu0 %2990
        %2992 = vrot.lane.b32.xlu0 %v2578, 16
        %v2993 = vpop.permute.xlu0 %2992
        %2994 = vrot.lane.b32.xlu0 %v2579, 16
        %v2995 = vpop.permute.xlu0 %2994
        %2996 = vrot.lane.b32.xlu0 %v2580, 16
        %v2997 = vpop.permute.xlu0 %2996
        %3062 = vrot.lane.b32.xlu0 %v2581, 24
        %v3063 = vpop.permute.xlu0 %3062
        %3064 = vrot.lane.b32.xlu0 %v2582, 24
        %v3065 = vpop.permute.xlu0 %3064
        %3066 = vrot.lane.b32.xlu0 %v2583, 24
        %v3067 = vpop.permute.xlu0 %3066
        %3068 = vrot.lane.b32.xlu0 %v2584, 24
        %v3069 = vpop.permute.xlu0 %3068
        %3070 = vrot.lane.b32.xlu0 %v2585, 24
        %v3071 = vpop.permute.xlu0 %3070
        %3072 = vrot.lane.b32.xlu0 %v2586, 24
        %v3073 = vpop.permute.xlu0 %3072
        %3074 = vrot.lane.b32.xlu0 %v2587, 24
        %v3075 = vpop.permute.xlu0 %3074
        %3076 = vrot.lane.b32.xlu0 %v2588, 24
        %v3077 = vpop.permute.xlu0 %3076
        %3078 = vrot.lane.b32.xlu0 %v2589, 24
        %v3079 = vpop.permute.xlu0 %3078
        %3080 = vrot.lane.b32.xlu0 %v2590, 24
        %v3081 = vpop.permute.xlu0 %3080
        %3082 = vrot.lane.b32.xlu0 %v2591, 24
        %v3083 = vpop.permute.xlu0 %3082
        %3084 = vrot.lane.b32.xlu0 %v2592, 24
        %v3085 = vpop.permute.xlu0 %3084
        %3086 = vrot.lane.b32.xlu0 %v2593, 24
        %v3087 = vpop.permute.xlu0 %3086
        %3088 = vrot.lane.b32.xlu0 %v2594, 24
        %v3089 = vpop.permute.xlu0 %3088
        %3090 = vrot.lane.b32.xlu0 %v2595, 24
        %v3091 = vpop.permute.xlu0 %3090
        %3092 = vrot.lane.b32.xlu0 %v2596, 24
        %v3093 = vpop.permute.xlu0 %3092
        %3094 = vrot.lane.b32.xlu0 %v2597, 24
        %v3095 = vpop.permute.xlu0 %3094
        %3096 = vrot.lane.b32.xlu0 %v2598, 24
        %v3097 = vpop.permute.xlu0 %3096
        %3098 = vrot.lane.b32.xlu0 %v2599, 24
        %v3099 = vpop.permute.xlu0 %3098
        %3100 = vrot.lane.b32.xlu0 %v2600, 24
        %v3101 = vpop.permute.xlu0 %3100
        %3102 = vrot.lane.b32.xlu0 %v2601, 24
        %v3103 = vpop.permute.xlu0 %3102
        %3104 = vrot.lane.b32.xlu0 %v2602, 24
        %v3105 = vpop.permute.xlu0 %3104
        %3106 = vrot.lane.b32.xlu0 %v2603, 24
        %v3107 = vpop.permute.xlu0 %3106
        %3108 = vrot.lane.b32.xlu0 %v2604, 24
        %v3109 = vpop.permute.xlu0 %3108
        %3110 = vrot.lane.b32.xlu0 %v2605, 24
        %v3111 = vpop.permute.xlu0 %3110
        %3112 = vrot.lane.b32.xlu0 %v2606, 24
        %v3113 = vpop.permute.xlu0 %3112
        %3114 = vrot.lane.b32.xlu0 %v2607, 24
        %v3115 = vpop.permute.xlu0 %3114
        %3116 = vrot.lane.b32.xlu0 %v2608, 24
        %v3117 = vpop.permute.xlu0 %3116
        %3118 = vrot.lane.b32.xlu0 %v2609, 24
        %v3119 = vpop.permute.xlu0 %3118
        %3120 = vrot.lane.b32.xlu0 %v2610, 24
        %v3121 = vpop.permute.xlu0 %3120
        %3122 = vrot.lane.b32.xlu0 %v2611, 24
        %v3123 = vpop.permute.xlu0 %3122
        %3124 = vrot.lane.b32.xlu0 %v2612, 24
        %v3125 = vpop.permute.xlu0 %3124
        %3190 = vrot.lane.b32.xlu0 %v2613, 32
        %v3191 = vpop.permute.xlu0 %3190
        %3192 = vrot.lane.b32.xlu0 %v2614, 32
        %v3193 = vpop.permute.xlu0 %3192
        %3194 = vrot.lane.b32.xlu0 %v2615, 32
        %v3195 = vpop.permute.xlu0 %3194
        %3196 = vrot.lane.b32.xlu0 %v2616, 32
        %v3197 = vpop.permute.xlu0 %3196
        %3198 = vrot.lane.b32.xlu0 %v2617, 32
        %v3199 = vpop.permute.xlu0 %3198
        %3200 = vrot.lane.b32.xlu0 %v2618, 32
        %v3201 = vpop.permute.xlu0 %3200
        %3202 = vrot.lane.b32.xlu0 %v2619, 32
        %v3203 = vpop.permute.xlu0 %3202
        %3204 = vrot.lane.b32.xlu0 %v2620, 32
        %v3205 = vpop.permute.xlu0 %3204
        %3206 = vrot.lane.b32.xlu0 %v2621, 32
        %v3207 = vpop.permute.xlu0 %3206
        %3208 = vrot.lane.b32.xlu0 %v2622, 32
        %v3209 = vpop.permute.xlu0 %3208
        %3210 = vrot.lane.b32.xlu0 %v2623, 32
        %v3211 = vpop.permute.xlu0 %3210
        %3212 = vrot.lane.b32.xlu0 %v2624, 32
        %v3213 = vpop.permute.xlu0 %3212
        %3214 = vrot.lane.b32.xlu0 %v2625, 32
        %v3215 = vpop.permute.xlu0 %3214
        %3216 = vrot.lane.b32.xlu0 %v2626, 32
        %v3217 = vpop.permute.xlu0 %3216
        %3218 = vrot.lane.b32.xlu0 %v2627, 32
        %v3219 = vpop.permute.xlu0 %3218
        %3220 = vrot.lane.b32.xlu0 %v2628, 32
        %v3221 = vpop.permute.xlu0 %3220
        %3222 = vrot.lane.b32.xlu0 %v2629, 32
        %v3223 = vpop.permute.xlu0 %3222
        %3224 = vrot.lane.b32.xlu0 %v2630, 32
        %v3225 = vpop.permute.xlu0 %3224
        %3226 = vrot.lane.b32.xlu0 %v2631, 32
        %v3227 = vpop.permute.xlu0 %3226
        %3228 = vrot.lane.b32.xlu0 %v2632, 32
        %v3229 = vpop.permute.xlu0 %3228
        %3230 = vrot.lane.b32.xlu0 %v2633, 32
        %v3231 = vpop.permute.xlu0 %3230
        %3232 = vrot.lane.b32.xlu0 %v2634, 32
        %v3233 = vpop.permute.xlu0 %3232
        %3234 = vrot.lane.b32.xlu0 %v2635, 32
        %v3235 = vpop.permute.xlu0 %3234
        %3236 = vrot.lane.b32.xlu0 %v2636, 32
        %v3237 = vpop.permute.xlu0 %3236
        %3238 = vrot.lane.b32.xlu0 %v2637, 32
        %v3239 = vpop.permute.xlu0 %3238
        %3240 = vrot.lane.b32.xlu0 %v2638, 32
        %v3241 = vpop.permute.xlu0 %3240
        %3242 = vrot.lane.b32.xlu0 %v2639, 32
        %v3243 = vpop.permute.xlu0 %3242
        %3244 = vrot.lane.b32.xlu0 %v2640, 32
        %v3245 = vpop.permute.xlu0 %3244
        %3246 = vrot.lane.b32.xlu0 %v2641, 32
        %v3247 = vpop.permute.xlu0 %3246
        %3248 = vrot.lane.b32.xlu0 %v2642, 32
        %v3249 = vpop.permute.xlu0 %3248
        %3250 = vrot.lane.b32.xlu0 %v2643, 32
        %v3251 = vpop.permute.xlu0 %3250
        %3252 = vrot.lane.b32.xlu0 %v2644, 32
        %v3253 = vpop.permute.xlu0 %3252
        %3318 = vrot.lane.b32.xlu0 %v2645, 40
        %v3319 = vpop.permute.xlu0 %3318
        %3320 = vrot.lane.b32.xlu0 %v2646, 40
        %v3321 = vpop.permute.xlu0 %3320
        %3322 = vrot.lane.b32.xlu0 %v2647, 40
        %v3323 = vpop.permute.xlu0 %3322
        %3324 = vrot.lane.b32.xlu0 %v2648, 40
        %v3325 = vpop.permute.xlu0 %3324
        %3326 = vrot.lane.b32.xlu0 %v2649, 40
        %v3327 = vpop.permute.xlu0 %3326
        %3328 = vrot.lane.b32.xlu0 %v2650, 40
        %v3329 = vpop.permute.xlu0 %3328
        %3330 = vrot.lane.b32.xlu0 %v2651, 40
        %v3331 = vpop.permute.xlu0 %3330
        %3332 = vrot.lane.b32.xlu0 %v2652, 40
        %v3333 = vpop.permute.xlu0 %3332
        %3334 = vrot.lane.b32.xlu0 %v2653, 40
        %v3335 = vpop.permute.xlu0 %3334
        %3336 = vrot.lane.b32.xlu0 %v2654, 40
        %v3337 = vpop.permute.xlu0 %3336
        %3338 = vrot.lane.b32.xlu0 %v2655, 40
        %v3339 = vpop.permute.xlu0 %3338
        %3340 = vrot.lane.b32.xlu0 %v2656, 40
        %v3341 = vpop.permute.xlu0 %3340
        %3342 = vrot.lane.b32.xlu0 %v2657, 40
        %v3343 = vpop.permute.xlu0 %3342
        %3344 = vrot.lane.b32.xlu0 %v2658, 40
        %v3345 = vpop.permute.xlu0 %3344
        %3346 = vrot.lane.b32.xlu0 %v2659, 40
        %v3347 = vpop.permute.xlu0 %3346
        %3348 = vrot.lane.b32.xlu0 %v2660, 40
        %v3349 = vpop.permute.xlu0 %3348
        %3350 = vrot.lane.b32.xlu0 %v2661, 40
        %v3351 = vpop.permute.xlu0 %3350
        %3352 = vrot.lane.b32.xlu0 %v2662, 40
        %v3353 = vpop.permute.xlu0 %3352
        %3354 = vrot.lane.b32.xlu0 %v2663, 40
        %v3355 = vpop.permute.xlu0 %3354
        %3356 = vrot.lane.b32.xlu0 %v2664, 40
        %v3357 = vpop.permute.xlu0 %3356
        %3358 = vrot.lane.b32.xlu0 %v2665, 40
        %v3359 = vpop.permute.xlu0 %3358
        %3360 = vrot.lane.b32.xlu0 %v2666, 40
        %v3361 = vpop.permute.xlu0 %3360
        %3362 = vrot.lane.b32.xlu0 %v2667, 40
        %v3363 = vpop.permute.xlu0 %3362
        %3364 = vrot.lane.b32.xlu0 %v2668, 40
        %v3365 = vpop.permute.xlu0 %3364
        %3366 = vrot.lane.b32.xlu0 %v2669, 40
        %v3367 = vpop.permute.xlu0 %3366
        %3368 = vrot.lane.b32.xlu0 %v2670, 40
        %v3369 = vpop.permute.xlu0 %3368
        %3370 = vrot.lane.b32.xlu0 %v2671, 40
        %v3371 = vpop.permute.xlu0 %3370
        %3372 = vrot.lane.b32.xlu0 %v2672, 40
        %v3373 = vpop.permute.xlu0 %3372
        %3374 = vrot.lane.b32.xlu0 %v2673, 40
        %v3375 = vpop.permute.xlu0 %3374
        %3376 = vrot.lane.b32.xlu0 %v2674, 40
        %v3377 = vpop.permute.xlu0 %3376
        %3378 = vrot.lane.b32.xlu0 %v2675, 40
        %v3379 = vpop.permute.xlu0 %3378
        %3380 = vrot.lane.b32.xlu0 %v2676, 40
        %v3381 = vpop.permute.xlu0 %3380
        %3446 = vrot.lane.b32.xlu0 %v2678, 48
        %v3447 = vpop.permute.xlu0 %3446
        %3448 = vrot.lane.b32.xlu0 %v2679, 48
        %v3449 = vpop.permute.xlu0 %3448
        %3450 = vrot.lane.b32.xlu0 %v2680, 48
        %v3451 = vpop.permute.xlu0 %3450
        %3452 = vrot.lane.b32.xlu0 %v2681, 48
        %v3453 = vpop.permute.xlu0 %3452
        %3454 = vrot.lane.b32.xlu0 %v2682, 48
        %v3455 = vpop.permute.xlu0 %3454
        %3456 = vrot.lane.b32.xlu0 %v2683, 48
        %v3457 = vpop.permute.xlu0 %3456
        %3458 = vrot.lane.b32.xlu0 %v2684, 48
        %v3459 = vpop.permute.xlu0 %3458
        %3460 = vrot.lane.b32.xlu0 %v2685, 48
        %v3461 = vpop.permute.xlu0 %3460
        %3462 = vrot.lane.b32.xlu0 %v2686, 48
        %v3463 = vpop.permute.xlu0 %3462
        %3464 = vrot.lane.b32.xlu0 %v2687, 48
        %v3465 = vpop.permute.xlu0 %3464
        %3466 = vrot.lane.b32.xlu0 %v2688, 48
        %v3467 = vpop.permute.xlu0 %3466
        %3468 = vrot.lane.b32.xlu0 %v2689, 48
        %v3469 = vpop.permute.xlu0 %3468
        %3470 = vrot.lane.b32.xlu0 %v2690, 48
        %v3471 = vpop.permute.xlu0 %3470
        %3472 = vrot.lane.b32.xlu0 %v2691, 48
        %v3473 = vpop.permute.xlu0 %3472
        %3474 = vrot.lane.b32.xlu0 %v2692, 48
        %v3475 = vpop.permute.xlu0 %3474
        %3476 = vrot.lane.b32.xlu0 %v2693, 48
        %v3477 = vpop.permute.xlu0 %3476
        %3478 = vrot.lane.b32.xlu0 %v2694, 48
        %v3479 = vpop.permute.xlu0 %3478
        %3480 = vrot.lane.b32.xlu0 %v2695, 48
        %v3481 = vpop.permute.xlu0 %3480
        %3482 = vrot.lane.b32.xlu0 %v2696, 48
        %v3483 = vpop.permute.xlu0 %3482
        %3484 = vrot.lane.b32.xlu0 %v2697, 48
        %v3485 = vpop.permute.xlu0 %3484
        %3486 = vrot.lane.b32.xlu0 %v2698, 48
        %v3487 = vpop.permute.xlu0 %3486
        %3488 = vrot.lane.b32.xlu0 %v2699, 48
        %v3489 = vpop.permute.xlu0 %3488
        %3490 = vrot.lane.b32.xlu0 %v2700, 48
        %v3491 = vpop.permute.xlu0 %3490
        %3492 = vrot.lane.b32.xlu0 %v2701, 48
        %v3493 = vpop.permute.xlu0 %3492
        %3494 = vrot.lane.b32.xlu0 %v2702, 48
        %v3495 = vpop.permute.xlu0 %3494
        %3496 = vrot.lane.b32.xlu0 %v2703, 48
        %v3497 = vpop.permute.xlu0 %3496
        %3498 = vrot.lane.b32.xlu0 %v2704, 48
        %v3499 = vpop.permute.xlu0 %3498
        %3500 = vrot.lane.b32.xlu0 %v2705, 48
        %v3501 = vpop.permute.xlu0 %3500
        %3502 = vrot.lane.b32.xlu0 %v2706, 48
        %v3503 = vpop.permute.xlu0 %3502
        %3504 = vrot.lane.b32.xlu0 %v2707, 48
        %v3505 = vpop.permute.xlu0 %3504
        %3506 = vrot.lane.b32.xlu0 %v2708, 48
        %v3507 = vpop.permute.xlu0 %3506
        %3508 = vrot.lane.b32.xlu0 %v2709, 48
        %v3509 = vpop.permute.xlu0 %3508
        %3574 = vrot.lane.b32.xlu0 %v2710, 56
        %v3575 = vpop.permute.xlu0 %3574
        %3576 = vrot.lane.b32.xlu0 %v2711, 56
        %v3577 = vpop.permute.xlu0 %3576
        %3578 = vrot.lane.b32.xlu0 %v2712, 56
        %v3579 = vpop.permute.xlu0 %3578
        %3580 = vrot.lane.b32.xlu0 %v2713, 56
        %v3581 = vpop.permute.xlu0 %3580
        %3582 = vrot.lane.b32.xlu0 %v2714, 56
        %v3583 = vpop.permute.xlu0 %3582
        %3584 = vrot.lane.b32.xlu0 %v2715, 56
        %v3585 = vpop.permute.xlu0 %3584
        %3586 = vrot.lane.b32.xlu0 %v2716, 56
        %v3587 = vpop.permute.xlu0 %3586
        %3588 = vrot.lane.b32.xlu0 %v2717, 56
        %v3589 = vpop.permute.xlu0 %3588
        %3590 = vrot.lane.b32.xlu0 %v2718, 56
        %v3591 = vpop.permute.xlu0 %3590
        %3592 = vrot.lane.b32.xlu0 %v2719, 56
        %v3593 = vpop.permute.xlu0 %3592
        %3594 = vrot.lane.b32.xlu0 %v2720, 56
        %v3595 = vpop.permute.xlu0 %3594
        %3596 = vrot.lane.b32.xlu0 %v2721, 56
        %v3597 = vpop.permute.xlu0 %3596
        %3598 = vrot.lane.b32.xlu0 %v2722, 56
        %v3599 = vpop.permute.xlu0 %3598
        %3600 = vrot.lane.b32.xlu0 %v2723, 56
        %v3601 = vpop.permute.xlu0 %3600
        %3602 = vrot.lane.b32.xlu0 %v2724, 56
        %v3603 = vpop.permute.xlu0 %3602
        %3604 = vrot.lane.b32.xlu0 %v2725, 56
        %v3605 = vpop.permute.xlu0 %3604
        %3606 = vrot.lane.b32.xlu0 %v2726, 56
        %v3607 = vpop.permute.xlu0 %3606
        %3608 = vrot.lane.b32.xlu0 %v2727, 56
        %v3609 = vpop.permute.xlu0 %3608
        %3610 = vrot.lane.b32.xlu0 %v2728, 56
        %v3611 = vpop.permute.xlu0 %3610
        %3612 = vrot.lane.b32.xlu0 %v2729, 56
        %v3613 = vpop.permute.xlu0 %3612
        %3614 = vrot.lane.b32.xlu0 %v2730, 56
        %v3615 = vpop.permute.xlu0 %3614
        %3616 = vrot.lane.b32.xlu0 %v2731, 56
        %v3617 = vpop.permute.xlu0 %3616
        %3618 = vrot.lane.b32.xlu0 %v2732, 56
        %v3619 = vpop.permute.xlu0 %3618
        %3620 = vrot.lane.b32.xlu0 %v2733, 56
        %v3621 = vpop.permute.xlu0 %3620
        %3622 = vrot.lane.b32.xlu0 %v2734, 56
        %v3623 = vpop.permute.xlu0 %3622
        %3624 = vrot.lane.b32.xlu0 %v2735, 56
        %v3625 = vpop.permute.xlu0 %3624
        %3626 = vrot.lane.b32.xlu0 %v2736, 56
        %v3627 = vpop.permute.xlu0 %3626
        %3628 = vrot.lane.b32.xlu0 %v2737, 56
        %v3629 = vpop.permute.xlu0 %3628
        %3630 = vrot.lane.b32.xlu0 %v2738, 56
        %v3631 = vpop.permute.xlu0 %3630
        %3632 = vrot.lane.b32.xlu0 %v2739, 56
        %v3633 = vpop.permute.xlu0 %3632
        %3634 = vrot.lane.b32.xlu0 %v2740, 56
        %v3635 = vpop.permute.xlu0 %3634
        %3636 = vrot.lane.b32.xlu0 %v2741, 56
        %v3637 = vpop.permute.xlu0 %3636
        %3702 = vrot.lane.b32.xlu0 %v2742, 64
        %v3703 = vpop.permute.xlu0 %3702
        %3704 = vrot.lane.b32.xlu0 %v2743, 64
        %v3705 = vpop.permute.xlu0 %3704
        %3706 = vrot.lane.b32.xlu0 %v2744, 64
        %v3707 = vpop.permute.xlu0 %3706
        %3708 = vrot.lane.b32.xlu0 %v2745, 64
        %v3709 = vpop.permute.xlu0 %3708
        %3710 = vrot.lane.b32.xlu0 %v2746, 64
        %v3711 = vpop.permute.xlu0 %3710
        %3712 = vrot.lane.b32.xlu0 %v2747, 64
        %v3713 = vpop.permute.xlu0 %3712
        %3714 = vrot.lane.b32.xlu0 %v2748, 64
        %v3715 = vpop.permute.xlu0 %3714
        %3716 = vrot.lane.b32.xlu0 %v2749, 64
        %v3717 = vpop.permute.xlu0 %3716
        %3718 = vrot.lane.b32.xlu0 %v2750, 64
        %v3719 = vpop.permute.xlu0 %3718
        %3720 = vrot.lane.b32.xlu0 %v2751, 64
        %v3721 = vpop.permute.xlu0 %3720
        %3722 = vrot.lane.b32.xlu0 %v2752, 64
        %v3723 = vpop.permute.xlu0 %3722
        %3724 = vrot.lane.b32.xlu0 %v2753, 64
        %v3725 = vpop.permute.xlu0 %3724
        %3726 = vrot.lane.b32.xlu0 %v2754, 64
        %v3727 = vpop.permute.xlu0 %3726
        %3728 = vrot.lane.b32.xlu0 %v2755, 64
        %v3729 = vpop.permute.xlu0 %3728
        %3730 = vrot.lane.b32.xlu0 %v2756, 64
        %v3731 = vpop.permute.xlu0 %3730
        %3732 = vrot.lane.b32.xlu0 %v2757, 64
        %v3733 = vpop.permute.xlu0 %3732
        %3734 = vrot.lane.b32.xlu0 %v2758, 64
        %v3735 = vpop.permute.xlu0 %3734
        %3736 = vrot.lane.b32.xlu0 %v2759, 64
        %v3737 = vpop.permute.xlu0 %3736
        %3738 = vrot.lane.b32.xlu0 %v2760, 64
        %v3739 = vpop.permute.xlu0 %3738
        %3740 = vrot.lane.b32.xlu0 %v2761, 64
        %v3741 = vpop.permute.xlu0 %3740
        %3742 = vrot.lane.b32.xlu0 %v2762, 64
        %v3743 = vpop.permute.xlu0 %3742
        %3744 = vrot.lane.b32.xlu0 %v2763, 64
        %v3745 = vpop.permute.xlu0 %3744
        %3746 = vrot.lane.b32.xlu0 %v2764, 64
        %v3747 = vpop.permute.xlu0 %3746
        %3748 = vrot.lane.b32.xlu0 %v2765, 64
        %v3749 = vpop.permute.xlu0 %3748
        %3750 = vrot.lane.b32.xlu0 %v2766, 64
        %v3751 = vpop.permute.xlu0 %3750
        %3752 = vrot.lane.b32.xlu0 %v2767, 64
        %v3753 = vpop.permute.xlu0 %3752
        %3754 = vrot.lane.b32.xlu0 %v2768, 64
        %v3755 = vpop.permute.xlu0 %3754
        %3756 = vrot.lane.b32.xlu0 %v2769, 64
        %v3757 = vpop.permute.xlu0 %3756
        %3758 = vrot.lane.b32.xlu0 %v2770, 64
        %v3759 = vpop.permute.xlu0 %3758
        %3760 = vrot.lane.b32.xlu0 %v2771, 64
        %v3761 = vpop.permute.xlu0 %3760
        %3762 = vrot.lane.b32.xlu0 %v2772, 64
        %v3763 = vpop.permute.xlu0 %3762
        %3764 = vrot.lane.b32.xlu0 %v2773, 64
        %v3765 = vpop.permute.xlu0 %3764
        %v3798 = vsel %vm1796, %v2485, %v2807
        %v3799 = vsel %vm1796, %v2486, %v2809
        %v3800 = vsel %vm1796, %v2487, %v2811
        %v3801 = vsel %vm1796, %v2488, %v2813
        %v3802 = vsel %vm1796, %v2489, %v2815
        %v3803 = vsel %vm1796, %v2490, %v2817
        %v3804 = vsel %vm1796, %v2491, %v2819
        %v3805 = vsel %vm1796, %v2492, %v2821
        %v3806 = vsel %vm1796, %v2493, %v2823
        %v3807 = vsel %vm1796, %v2494, %v2825
        %v3808 = vsel %vm1796, %v2495, %v2827
        %v3809 = vsel %vm1796, %v2496, %v2829
        %v3810 = vsel %vm1796, %v2497, %v2831
        %v3811 = vsel %vm1796, %v2498, %v2833
        %v3812 = vsel %vm1796, %v2499, %v2835
        %v3813 = vsel %vm1796, %v2500, %v2837
        %v3814 = vsel %vm1796, %v2501, %v2839
        %v3815 = vsel %vm1796, %v2502, %v2841
        %v3816 = vsel %vm1796, %v2503, %v2843
        %v3817 = vsel %vm1796, %v2504, %v2845
        %v3818 = vsel %vm1796, %v2505, %v2847
        %v3819 = vsel %vm1796, %v2506, %v2849
        %v3820 = vsel %vm1796, %v2507, %v2851
        %v3821 = vsel %vm1796, %v2508, %v2853
        %v3822 = vsel %vm1796, %v2509, %v2855
        %v3823 = vsel %vm1796, %v2510, %v2857
        %v3824 = vsel %vm1796, %v2511, %v2859
        %v3825 = vsel %vm1796, %v2512, %v2861
        %v3826 = vsel %vm1796, %v2513, %v2863
        %v3827 = vsel %vm1796, %v2514, %v2865
        %v3828 = vsel %vm1796, %v2515, %v2867
        %v3829 = vsel %vm1796, %v2516, %v2869
        %v3830 = vsel %vm1862, %v3798, %v2935
        %v3831 = vsel %vm1862, %v3799, %v2937
        %v3832 = vsel %vm1862, %v3800, %v2939
        %v3833 = vsel %vm1862, %v3801, %v2941
        %v3834 = vsel %vm1862, %v3802, %v2943
        %v3835 = vsel %vm1862, %v3803, %v2945
        %v3836 = vsel %vm1862, %v3804, %v2947
        %v3837 = vsel %vm1862, %v3805, %v2949
        %v3838 = vsel %vm1862, %v3806, %v2951
        %v3839 = vsel %vm1862, %v3807, %v2953
        %v3840 = vsel %vm1862, %v3808, %v2955
        %v3841 = vsel %vm1862, %v3809, %v2957
        %v3842 = vsel %vm1862, %v3810, %v2959
        %v3843 = vsel %vm1862, %v3811, %v2961
        %v3844 = vsel %vm1862, %v3812, %v2963
        %v3845 = vsel %vm1862, %v3813, %v2965
        %v3846 = vsel %vm1862, %v3814, %v2967
        %v3847 = vsel %vm1862, %v3815, %v2969
        %v3848 = vsel %vm1862, %v3816, %v2971
        %v3849 = vsel %vm1862, %v3817, %v2973
        %v3850 = vsel %vm1862, %v3818, %v2975
        %v3851 = vsel %vm1862, %v3819, %v2977
        %v3852 = vsel %vm1862, %v3820, %v2979
        %v3853 = vsel %vm1862, %v3821, %v2981
        %v3854 = vsel %vm1862, %v3822, %v2983
        %v3855 = vsel %vm1862, %v3823, %v2985
        %v3856 = vsel %vm1862, %v3824, %v2987
        %v3857 = vsel %vm1862, %v3825, %v2989
        %v3858 = vsel %vm1862, %v3826, %v2991
        %v3859 = vsel %vm1862, %v3827, %v2993
        %v3860 = vsel %vm1862, %v3828, %v2995
        %v3861 = vsel %vm1862, %v3829, %v2997
        %v3862 = vsel %vm1928, %v3830, %v3063
        %v3863 = vsel %vm1928, %v3831, %v3065
        %v3864 = vsel %vm1928, %v3832, %v3067
        %v3865 = vsel %vm1928, %v3833, %v3069
        %v3866 = vsel %vm1928, %v3834, %v3071
        %v3867 = vsel %vm1928, %v3835, %v3073
        %v3868 = vsel %vm1928, %v3836, %v3075
        %v3869 = vsel %vm1928, %v3837, %v3077
        %v3870 = vsel %vm1928, %v3838, %v3079
        %v3871 = vsel %vm1928, %v3839, %v3081
        %v3872 = vsel %vm1928, %v3840, %v3083
        %v3873 = vsel %vm1928, %v3841, %v3085
        %v3874 = vsel %vm1928, %v3842, %v3087
        %v3875 = vsel %vm1928, %v3843, %v3089
        %v3876 = vsel %vm1928, %v3844, %v3091
        %v3877 = vsel %vm1928, %v3845, %v3093
        %v3878 = vsel %vm1928, %v3846, %v3095
        %v3879 = vsel %vm1928, %v3847, %v3097
        %v3880 = vsel %vm1928, %v3848, %v3099
        %v3881 = vsel %vm1928, %v3849, %v3101
        %v3882 = vsel %vm1928, %v3850, %v3103
        %v3883 = vsel %vm1928, %v3851, %v3105
        %v3884 = vsel %vm1928, %v3852, %v3107
        %v3885 = vsel %vm1928, %v3853, %v3109
        %v3886 = vsel %vm1928, %v3854, %v3111
        %v3887 = vsel %vm1928, %v3855, %v3113
        %v3888 = vsel %vm1928, %v3856, %v3115
        %v3889 = vsel %vm1928, %v3857, %v3117
        %v3890 = vsel %vm1928, %v3858, %v3119
        %v3891 = vsel %vm1928, %v3859, %v3121
        %v3892 = vsel %vm1928, %v3860, %v3123
        %v3893 = vsel %vm1928, %v3861, %v3125
        %v3894 = vsel %vm1994, %v3862, %v3191
        %v3895 = vsel %vm1994, %v3863, %v3193
        %v3896 = vsel %vm1994, %v3864, %v3195
        %v3897 = vsel %vm1994, %v3865, %v3197
        %v3898 = vsel %vm1994, %v3866, %v3199
        %v3899 = vsel %vm1994, %v3867, %v3201
        %v3900 = vsel %vm1994, %v3868, %v3203
        %v3901 = vsel %vm1994, %v3869, %v3205
        %v3902 = vsel %vm1994, %v3870, %v3207
        %v3903 = vsel %vm1994, %v3871, %v3209
        %v3904 = vsel %vm1994, %v3872, %v3211
        %v3905 = vsel %vm1994, %v3873, %v3213
        %v3906 = vsel %vm1994, %v3874, %v3215
        %v3907 = vsel %vm1994, %v3875, %v3217
        %v3908 = vsel %vm1994, %v3876, %v3219
        %v3909 = vsel %vm1994, %v3877, %v3221
        %v3910 = vsel %vm1994, %v3878, %v3223
        %v3911 = vsel %vm1994, %v3879, %v3225
        %v3912 = vsel %vm1994, %v3880, %v3227
        %v3913 = vsel %vm1994, %v3881, %v3229
        %v3914 = vsel %vm1994, %v3882, %v3231
        %v3915 = vsel %vm1994, %v3883, %v3233
        %v3916 = vsel %vm1994, %v3884, %v3235
        %v3917 = vsel %vm1994, %v3885, %v3237
        %v3918 = vsel %vm1994, %v3886, %v3239
        %v3919 = vsel %vm1994, %v3887, %v3241
        %v3920 = vsel %vm1994, %v3888, %v3243
        %v3921 = vsel %vm1994, %v3889, %v3245
        %v3922 = vsel %vm1994, %v3890, %v3247
        %v3923 = vsel %vm1994, %v3891, %v3249
        %v3924 = vsel %vm1994, %v3892, %v3251
        %v3925 = vsel %vm1994, %v3893, %v3253
        %vm3926 = vcmask 326656
        %v3927 = vsel %vm3926, %v3894, %v3319
        %v3928 = vsel %vm3926, %v3895, %v3321
        %v3929 = vsel %vm3926, %v3896, %v3323
        %v3930 = vsel %vm3926, %v3897, %v3325
        %v3931 = vsel %vm3926, %v3898, %v3327
        %v3932 = vsel %vm3926, %v3899, %v3329
        %v3933 = vsel %vm3926, %v3900, %v3331
        %v3934 = vsel %vm3926, %v3901, %v3333
        %v3935 = vsel %vm3926, %v3902, %v3335
        %v3936 = vsel %vm3926, %v3903, %v3337
        %v3937 = vsel %vm3926, %v3904, %v3339
        %v3938 = vsel %vm3926, %v3905, %v3341
        %v3939 = vsel %vm3926, %v3906, %v3343
        %v3940 = vsel %vm3926, %v3907, %v3345
        %v3941 = vsel %vm3926, %v3908, %v3347
        %v3942 = vsel %vm3926, %v3909, %v3349
        %v3943 = vsel %vm3926, %v3910, %v3351
        %v3944 = vsel %vm3926, %v3911, %v3353
        %v3945 = vsel %vm3926, %v3912, %v3355
        %v3946 = vsel %vm3926, %v3913, %v3357
        %v3947 = vsel %vm3926, %v3914, %v3359
        %v3948 = vsel %vm3926, %v3915, %v3361
        %v3949 = vsel %vm3926, %v3916, %v3363
        %v3950 = vsel %vm3926, %v3917, %v3365
        %v3951 = vsel %vm3926, %v3918, %v3367
        %v3952 = vsel %vm3926, %v3919, %v3369
        %v3953 = vsel %vm3926, %v3920, %v3371
        %v3954 = vsel %vm3926, %v3921, %v3373
        %v3955 = vsel %vm3926, %v3922, %v3375
        %v3956 = vsel %vm3926, %v3923, %v3377
        %v3957 = vsel %vm3926, %v3924, %v3379
        %v3958 = vsel %vm3926, %v3925, %v3381
        %vm3959 = vcmask 392192
        %v3960 = vsel %vm3959, %v3927, %v3447
        %v3961 = vsel %vm3959, %v3928, %v3449
        %v3962 = vsel %vm3959, %v3929, %v3451
        %v3963 = vsel %vm3959, %v3930, %v3453
        %v3964 = vsel %vm3959, %v3931, %v3455
        %v3965 = vsel %vm3959, %v3932, %v3457
        %v3966 = vsel %vm3959, %v3933, %v3459
        %v3967 = vsel %vm3959, %v3934, %v3461
        %v3968 = vsel %vm3959, %v3935, %v3463
        %v3969 = vsel %vm3959, %v3936, %v3465
        %v3970 = vsel %vm3959, %v3937, %v3467
        %v3971 = vsel %vm3959, %v3938, %v3469
        %v3972 = vsel %vm3959, %v3939, %v3471
        %v3973 = vsel %vm3959, %v3940, %v3473
        %v3974 = vsel %vm3959, %v3941, %v3475
        %v3975 = vsel %vm3959, %v3942, %v3477
        %v3976 = vsel %vm3959, %v3943, %v3479
        %v3977 = vsel %vm3959, %v3944, %v3481
        %v3978 = vsel %vm3959, %v3945, %v3483
        %v3979 = vsel %vm3959, %v3946, %v3485
        %v3980 = vsel %vm3959, %v3947, %v3487
        %v3981 = vsel %vm3959, %v3948, %v3489
        %v3982 = vsel %vm3959, %v3949, %v3491
        %v3983 = vsel %vm3959, %v3950, %v3493
        %v3984 = vsel %vm3959, %v3951, %v3495
        %v3985 = vsel %vm3959, %v3952, %v3497
        %v3986 = vsel %vm3959, %v3953, %v3499
        %v3987 = vsel %vm3959, %v3954, %v3501
        %v3988 = vsel %vm3959, %v3955, %v3503
        %v3989 = vsel %vm3959, %v3956, %v3505
        %v3990 = vsel %vm3959, %v3957, %v3507
        %v3991 = vsel %vm3959, %v3958, %v3509
        %vm3992 = vcmask 457728
        %v3993 = vsel %vm3992, %v3960, %v3575
        %v3994 = vsel %vm3992, %v3961, %v3577
        %v3995 = vsel %vm3992, %v3962, %v3579
        %v3996 = vsel %vm3992, %v3963, %v3581
        %v3997 = vsel %vm3992, %v3964, %v3583
        %v3998 = vsel %vm3992, %v3965, %v3585
        %v3999 = vsel %vm3992, %v3966, %v3587
        %v4000 = vsel %vm3992, %v3967, %v3589
        %v4001 = vsel %vm3992, %v3968, %v3591
        %v4002 = vsel %vm3992, %v3969, %v3593
        %v4003 = vsel %vm3992, %v3970, %v3595
        %v4004 = vsel %vm3992, %v3971, %v3597
        %v4005 = vsel %vm3992, %v3972, %v3599
        %v4006 = vsel %vm3992, %v3973, %v3601
        %v4007 = vsel %vm3992, %v3974, %v3603
        %v4008 = vsel %vm3992, %v3975, %v3605
        %v4009 = vsel %vm3992, %v3976, %v3607
        %v4010 = vsel %vm3992, %v3977, %v3609
        %v4011 = vsel %vm3992, %v3978, %v3611
        %v4012 = vsel %vm3992, %v3979, %v3613
        %v4013 = vsel %vm3992, %v3980, %v3615
        %v4014 = vsel %vm3992, %v3981, %v3617
        %v4015 = vsel %vm3992, %v3982, %v3619
        %v4016 = vsel %vm3992, %v3983, %v3621
        %v4017 = vsel %vm3992, %v3984, %v3623
        %v4018 = vsel %vm3992, %v3985, %v3625
        %v4019 = vsel %vm3992, %v3986, %v3627
        %v4020 = vsel %vm3992, %v3987, %v3629
        %v4021 = vsel %vm3992, %v3988, %v3631
        %v4022 = vsel %vm3992, %v3989, %v3633
        %v4023 = vsel %vm3992, %v3990, %v3635
        %v4024 = vsel %vm3992, %v3991, %v3637
        %vm4025 = vcmask 523264
        %v4026 = vsel %vm4025, %v3993, %v3703
        %v4027 = vsel %vm4025, %v3994, %v3705
        %v4028 = vsel %vm4025, %v3995, %v3707
        %v4029 = vsel %vm4025, %v3996, %v3709
        %v4030 = vsel %vm4025, %v3997, %v3711
        %v4031 = vsel %vm4025, %v3998, %v3713
        %v4032 = vsel %vm4025, %v3999, %v3715
        %v4033 = vsel %vm4025, %v4000, %v3717
        %v4034 = vsel %vm4025, %v4001, %v3719
        %v4035 = vsel %vm4025, %v4002, %v3721
        %v4036 = vsel %vm4025, %v4003, %v3723
        %v4037 = vsel %vm4025, %v4004, %v3725
        %v4038 = vsel %vm4025, %v4005, %v3727
        %v4039 = vsel %vm4025, %v4006, %v3729
        %v4040 = vsel %vm4025, %v4007, %v3731
        %v4041 = vsel %vm4025, %v4008, %v3733
        %v4042 = vsel %vm4025, %v4009, %v3735
        %v4043 = vsel %vm4025, %v4010, %v3737
        %v4044 = vsel %vm4025, %v4011, %v3739
        %v4045 = vsel %vm4025, %v4012, %v3741
        %v4046 = vsel %vm4025, %v4013, %v3743
        %v4047 = vsel %vm4025, %v4014, %v3745
        %v4048 = vsel %vm4025, %v4015, %v3747
        %v4049 = vsel %vm4025, %v4016, %v3749
        %v4050 = vsel %vm4025, %v4017, %v3751
        %v4051 = vsel %vm4025, %v4018, %v3753
        %v4052 = vsel %vm4025, %v4019, %v3755
        %v4053 = vsel %vm4025, %v4020, %v3757
        %v4054 = vsel %vm4025, %v4021, %v3759
        %v4055 = vsel %vm4025, %v4022, %v3761
        %v4056 = vsel %vm4025, %v4023, %v3763
        %v4057 = vsel %vm4025, %v4024, %v3765
        %v4058 = vld [vmem:[%s3] sm:$0xff]
        %v4059 = vld [vmem:[%s3 + $0x8] sm:$0xff]
        %v4060 = vld [vmem:[%s3 + $0x10] sm:$0xff]
        %v4061 = vld [vmem:[%s3 + $0x18] sm:$0xff]
        %v4062 = vld [vmem:[%s3 + $0x20] sm:$0xff]
        %v4063 = vld [vmem:[%s3 + $0x28] sm:$0xff]
        %v4064 = vld [vmem:[%s3 + $0x30] sm:$0xff]
        %v4065 = vld [vmem:[%s3 + $0x38] sm:$0xff]
        %v4066 = vld [vmem:[%s3 + $0x40] sm:$0xff]
        %v4067 = vld [vmem:[%s4] sm:$0x1]
        %v4069 = vlaneseq
        %v4070 = vshrl.u32 %v4069, 7
        %v4071 = vsub.s32 0, %v4070
        %v4072 = vrot.slane %v4067, %v4071
        %vm4074 = vcmask 588800
        %v4076 = vsel %vm4074, %v4026, 0
        %v4079 = vsel %vm4074, %v4027, 0
        %v4082 = vsel %vm4074, %v4028, 0
        %v4085 = vsel %vm4074, %v4029, 0
        %v4088 = vsel %vm4074, %v4030, 0
        %v4091 = vsel %vm4074, %v4031, 0
        %v4094 = vsel %vm4074, %v4032, 0
        %v4097 = vsel %vm4074, %v4033, 0
        %v4100 = vsel %vm4074, %v4034, 0
        %v4103 = vsel %vm4074, %v4035, 0
        %v4106 = vsel %vm4074, %v4036, 0
        %v4109 = vsel %vm4074, %v4037, 0
        %v4112 = vsel %vm4074, %v4038, 0
        %v4115 = vsel %vm4074, %v4039, 0
        %v4118 = vsel %vm4074, %v4040, 0
        %v4121 = vsel %vm4074, %v4041, 0
        %v4124 = vsel %vm4074, %v4042, 0
        %v4127 = vsel %vm4074, %v4043, 0
        %v4130 = vsel %vm4074, %v4044, 0
        %v4133 = vsel %vm4074, %v4045, 0
        %v4136 = vsel %vm4074, %v4046, 0
        %v4139 = vsel %vm4074, %v4047, 0
        %v4142 = vsel %vm4074, %v4048, 0
        %v4145 = vsel %vm4074, %v4049, 0
        %v4148 = vsel %vm4074, %v4050, 0
        %v4151 = vsel %vm4074, %v4051, 0
        %v4154 = vsel %vm4074, %v4052, 0
        %v4157 = vsel %vm4074, %v4053, 0
        %v4160 = vsel %vm4074, %v4054, 0
        %v4163 = vsel %vm4074, %v4055, 0
        %v4166 = vsel %vm4074, %v4056, 0
        %v4169 = vsel %vm4074, %v4057, 0
        %4171 = vmatprep.subr.mxu0 0.0
        %4172 = vmatpush1.msra.mxu0 0.0
        %4173 = vmatprep.subr.mxu0 0.0
        %4174 = vmatpush1.msra.mxu0 0.0
        %4175 = vmatprep.subr.mxu0 0.0
        %4176 = vmatpush1.msra.mxu0 0.0
        %4177 = vmatprep.subr.mxu0 0.0
        %4178 = vmatpush1.msra.mxu0 0.0
        %4179 = vmatprep.subr.mxu0 0.0
        %4180 = vmatpush1.msra.mxu0 0.0
        %4181 = vmatprep.subr.mxu0 0.0
        %4182 = vmatpush1.msra.mxu0 0.0
        %4183 = vmatprep.subr.mxu0 0.0
        %4184 = vmatpush1.msra.mxu0 0.0
        %4185 = vmatprep.subr.mxu0 0.0
        %4186 = vmatpush1.msra.mxu0 %v4066
        %4187 = vmatprep.subr.mxu0 0.0
        %4188 = vmatpush1.msra.mxu0 %v4065
        %4189 = vmatprep.subr.mxu0 0.0
        %4190 = vmatpush1.msra.mxu0 %v4064
        %4191 = vmatprep.subr.mxu0 0.0
        %4192 = vmatpush1.msra.mxu0 %v4063
        %4193 = vmatprep.subr.mxu0 0.0
        %4194 = vmatpush1.msra.mxu0 %v4062
        %4195 = vmatprep.subr.mxu0 0.0
        %4196 = vmatpush1.msra.mxu0 %v4061
        %4197 = vmatprep.subr.mxu0 0.0
        %4198 = vmatpush1.msra.mxu0 %v4060
        %4199 = vmatprep.subr.mxu0 0.0
        %4200 = vmatpush1.msra.mxu0 %v4059
        %4201 = vmatprep.subr.mxu0 0.0
        %4202 = vmatpush1.msra.mxu0 %v4058
        %4203 = vmatprep.subr.mxu0 0.0
        %4204 = vmatpush2.msra.mxu0 0.0
        %4205 = vmatprep.subr.mxu0 0.0
        %4206 = vmatpush2.msra.mxu0 0.0
        %4207 = vmatprep.subr.mxu0 0.0
        %4208 = vmatpush2.msra.mxu0 0.0
        %4209 = vmatprep.subr.mxu0 0.0
        %4210 = vmatpush2.msra.mxu0 0.0
        %4211 = vmatprep.subr.mxu0 0.0
        %4212 = vmatpush2.msra.mxu0 0.0
        %4213 = vmatprep.subr.mxu0 0.0
        %4214 = vmatpush2.msra.mxu0 0.0
        %4215 = vmatprep.subr.mxu0 0.0
        %4216 = vmatpush2.msra.mxu0 0.0
        %4217 = vmatprep.subr.mxu0 0.0
        %4218 = vmatpush2.msra.mxu0 0.0
        %4219 = vmatprep.subr.mxu0 0.0
        %4220 = vmatpush2.msra.mxu0 0.0
        %4221 = vmatprep.subr.mxu0 0.0
        %4222 = vmatpush2.msra.mxu0 0.0
        %4223 = vmatprep.subr.mxu0 0.0
        %4224 = vmatpush2.msra.mxu0 0.0
        %4225 = vmatprep.subr.mxu0 0.0
        %4226 = vmatpush2.msra.mxu0 0.0
        %4227 = vmatprep.subr.mxu0 0.0
        %4228 = vmatpush2.msra.mxu0 0.0
        %4229 = vmatprep.subr.mxu0 0.0
        %4230 = vmatpush2.msra.mxu0 0.0
        %4231 = vmatprep.subr.mxu0 0.0
        %4232 = vmatpush2.msra.mxu0 0.0
        %4233 = vmatprep.subr.mxu0 0.0
        %4234 = vmatpush2.msra.mxu0 0.0
        %4235 = vmatprep.mubr.f32.mxu0 0.0
        %4236 = vmatmul.mubr.f32.gmra.mxu0 %v4076
        %v4237 = vpop.f32.mrf.mxu0
        %v4238 = vadd.f32 %v4072, %v4237
        %v4239 = vpop.f32.mrf.mxu0
        %4240 = vmatprep.mubr.f32.mxu0 0.0
        %4241 = vmatmul.mubr.f32.gmra.mxu0 %v4079
        %v4242 = vpop.f32.mrf.mxu0
        %v4243 = vadd.f32 %v4072, %v4242
        %v4244 = vpop.f32.mrf.mxu0
        %4245 = vmatprep.mubr.f32.mxu0 0.0
        %4246 = vmatmul.mubr.f32.gmra.mxu0 %v4082
        %v4247 = vpop.f32.mrf.mxu0
        %v4248 = vadd.f32 %v4072, %v4247
        %v4249 = vpop.f32.mrf.mxu0
        %4250 = vmatprep.mubr.f32.mxu0 0.0
        %4251 = vmatmul.mubr.f32.gmra.mxu0 %v4085
        %v4252 = vpop.f32.mrf.mxu0
        %v4253 = vadd.f32 %v4072, %v4252
        %v4254 = vpop.f32.mrf.mxu0
        %4255 = vmatprep.mubr.f32.mxu0 0.0
        %4256 = vmatmul.mubr.f32.gmra.mxu0 %v4088
        %v4257 = vpop.f32.mrf.mxu0
        %v4258 = vadd.f32 %v4072, %v4257
        %v4259 = vpop.f32.mrf.mxu0
        %4260 = vmatprep.mubr.f32.mxu0 0.0
        %4261 = vmatmul.mubr.f32.gmra.mxu0 %v4091
        %v4262 = vpop.f32.mrf.mxu0
        %v4263 = vadd.f32 %v4072, %v4262
        %v4264 = vpop.f32.mrf.mxu0
        %4265 = vmatprep.mubr.f32.mxu0 0.0
        %4266 = vmatmul.mubr.f32.gmra.mxu0 %v4094
        %v4267 = vpop.f32.mrf.mxu0
        %v4268 = vadd.f32 %v4072, %v4267
        %v4269 = vpop.f32.mrf.mxu0
        %4270 = vmatprep.mubr.f32.mxu0 0.0
        %4271 = vmatmul.mubr.f32.gmra.mxu0 %v4097
        %v4272 = vpop.f32.mrf.mxu0
        %v4273 = vadd.f32 %v4072, %v4272
        %v4274 = vpop.f32.mrf.mxu0
        %4275 = vmatprep.mubr.f32.mxu0 0.0
        %4276 = vmatmul.mubr.f32.gmra.mxu0 %v4100
        %v4277 = vpop.f32.mrf.mxu0
        %v4278 = vadd.f32 %v4072, %v4277
        %v4279 = vpop.f32.mrf.mxu0
        %4280 = vmatprep.mubr.f32.mxu0 0.0
        %4281 = vmatmul.mubr.f32.gmra.mxu0 %v4103
        %v4282 = vpop.f32.mrf.mxu0
        %v4283 = vadd.f32 %v4072, %v4282
        %v4284 = vpop.f32.mrf.mxu0
        %4285 = vmatprep.mubr.f32.mxu0 0.0
        %4286 = vmatmul.mubr.f32.gmra.mxu0 %v4106
        %v4287 = vpop.f32.mrf.mxu0
        %v4288 = vadd.f32 %v4072, %v4287
        %v4289 = vpop.f32.mrf.mxu0
        %4290 = vmatprep.mubr.f32.mxu0 0.0
        %4291 = vmatmul.mubr.f32.gmra.mxu0 %v4109
        %v4292 = vpop.f32.mrf.mxu0
        %v4293 = vadd.f32 %v4072, %v4292
        %v4294 = vpop.f32.mrf.mxu0
        %4295 = vmatprep.mubr.f32.mxu0 0.0
        %4296 = vmatmul.mubr.f32.gmra.mxu0 %v4112
        %v4297 = vpop.f32.mrf.mxu0
        %v4298 = vadd.f32 %v4072, %v4297
        %v4299 = vpop.f32.mrf.mxu0
        %4300 = vmatprep.mubr.f32.mxu0 0.0
        %4301 = vmatmul.mubr.f32.gmra.mxu0 %v4115
        %v4302 = vpop.f32.mrf.mxu0
        %v4303 = vadd.f32 %v4072, %v4302
        %v4304 = vpop.f32.mrf.mxu0
        %4305 = vmatprep.mubr.f32.mxu0 0.0
        %4306 = vmatmul.mubr.f32.gmra.mxu0 %v4118
        %v4307 = vpop.f32.mrf.mxu0
        %v4308 = vadd.f32 %v4072, %v4307
        %v4309 = vpop.f32.mrf.mxu0
        %4310 = vmatprep.mubr.f32.mxu0 0.0
        %4311 = vmatmul.mubr.f32.gmra.mxu0 %v4121
        %v4312 = vpop.f32.mrf.mxu0
        %v4313 = vadd.f32 %v4072, %v4312
        %v4314 = vpop.f32.mrf.mxu0
        %4315 = vmatprep.mubr.f32.mxu0 0.0
        %4316 = vmatmul.mubr.f32.gmra.mxu0 %v4124
        %v4317 = vpop.f32.mrf.mxu0
        %v4318 = vadd.f32 %v4072, %v4317
        %v4319 = vpop.f32.mrf.mxu0
        %4320 = vmatprep.mubr.f32.mxu0 0.0
        %4321 = vmatmul.mubr.f32.gmra.mxu0 %v4127
        %v4322 = vpop.f32.mrf.mxu0
        %v4323 = vadd.f32 %v4072, %v4322
        %v4324 = vpop.f32.mrf.mxu0
        %4325 = vmatprep.mubr.f32.mxu0 0.0
        %4326 = vmatmul.mubr.f32.gmra.mxu0 %v4130
        %v4327 = vpop.f32.mrf.mxu0
        %v4328 = vadd.f32 %v4072, %v4327
        %v4329 = vpop.f32.mrf.mxu0
        %4330 = vmatprep.mubr.f32.mxu0 0.0
        %4331 = vmatmul.mubr.f32.gmra.mxu0 %v4133
        %v4332 = vpop.f32.mrf.mxu0
        %v4333 = vadd.f32 %v4072, %v4332
        %v4334 = vpop.f32.mrf.mxu0
        %4335 = vmatprep.mubr.f32.mxu0 0.0
        %4336 = vmatmul.mubr.f32.gmra.mxu0 %v4136
        %v4337 = vpop.f32.mrf.mxu0
        %v4338 = vadd.f32 %v4072, %v4337
        %v4339 = vpop.f32.mrf.mxu0
        %4340 = vmatprep.mubr.f32.mxu0 0.0
        %4341 = vmatmul.mubr.f32.gmra.mxu0 %v4139
        %v4342 = vpop.f32.mrf.mxu0
        %v4343 = vadd.f32 %v4072, %v4342
        %v4344 = vpop.f32.mrf.mxu0
        %4345 = vmatprep.mubr.f32.mxu0 0.0
        %4346 = vmatmul.mubr.f32.gmra.mxu0 %v4142
        %v4347 = vpop.f32.mrf.mxu0
        %v4348 = vadd.f32 %v4072, %v4347
        %v4349 = vpop.f32.mrf.mxu0
        %4350 = vmatprep.mubr.f32.mxu0 0.0
        %4351 = vmatmul.mubr.f32.gmra.mxu0 %v4145
        %v4352 = vpop.f32.mrf.mxu0
        %v4353 = vadd.f32 %v4072, %v4352
        %v4354 = vpop.f32.mrf.mxu0
        %4355 = vmatprep.mubr.f32.mxu0 0.0
        %4356 = vmatmul.mubr.f32.gmra.mxu0 %v4148
        %v4357 = vpop.f32.mrf.mxu0
        %v4358 = vadd.f32 %v4072, %v4357
        %v4359 = vpop.f32.mrf.mxu0
        %4360 = vmatprep.mubr.f32.mxu0 0.0
        %4361 = vmatmul.mubr.f32.gmra.mxu0 %v4151
        %v4362 = vpop.f32.mrf.mxu0
        %v4363 = vadd.f32 %v4072, %v4362
        %v4364 = vpop.f32.mrf.mxu0
        %4365 = vmatprep.mubr.f32.mxu0 0.0
        %4366 = vmatmul.mubr.f32.gmra.mxu0 %v4154
        %v4367 = vpop.f32.mrf.mxu0
        %v4368 = vadd.f32 %v4072, %v4367
        %v4369 = vpop.f32.mrf.mxu0
        %4370 = vmatprep.mubr.f32.mxu0 0.0
        %4371 = vmatmul.mubr.f32.gmra.mxu0 %v4157
        %v4372 = vpop.f32.mrf.mxu0
        %v4373 = vadd.f32 %v4072, %v4372
        %v4374 = vpop.f32.mrf.mxu0
        %4375 = vmatprep.mubr.f32.mxu0 0.0
        %4376 = vmatmul.mubr.f32.gmra.mxu0 %v4160
        %v4377 = vpop.f32.mrf.mxu0
        %v4378 = vadd.f32 %v4072, %v4377
        %v4379 = vpop.f32.mrf.mxu0
        %4380 = vmatprep.mubr.f32.mxu0 0.0
        %4381 = vmatmul.mubr.f32.gmra.mxu0 %v4163
        %v4382 = vpop.f32.mrf.mxu0
        %v4383 = vadd.f32 %v4072, %v4382
        %v4384 = vpop.f32.mrf.mxu0
        %4385 = vmatprep.mubr.f32.mxu0 0.0
        %4386 = vmatmul.mubr.f32.gmra.mxu0 %v4166
        %v4387 = vpop.f32.mrf.mxu0
        %v4388 = vadd.f32 %v4072, %v4387
        %v4389 = vpop.f32.mrf.mxu0
        %4390 = vmatprep.mubr.f32.mxu0 0.0
        %4391 = vmatmul.mubr.f32.gmra.mxu0 %v4169
        %v4392 = vpop.f32.mrf.mxu0
        %v4393 = vadd.f32 %v4072, %v4392
        %v4394 = vpop.f32.mrf.mxu0
        %4395 = vdwg.mxu0
        %v4396 = vmax.f32 %v4238, 0.0
        %v4397 = vmax.f32 %v4243, 0.0
        %v4398 = vmax.f32 %v4248, 0.0
        %v4399 = vmax.f32 %v4253, 0.0
        %v4400 = vmax.f32 %v4258, 0.0
        %v4401 = vmax.f32 %v4263, 0.0
        %v4402 = vmax.f32 %v4268, 0.0
        %v4403 = vmax.f32 %v4273, 0.0
        %v4404 = vmax.f32 %v4278, 0.0
        %v4405 = vmax.f32 %v4283, 0.0
        %v4406 = vmax.f32 %v4288, 0.0
        %v4407 = vmax.f32 %v4293, 0.0
        %v4408 = vmax.f32 %v4298, 0.0
        %v4409 = vmax.f32 %v4303, 0.0
        %v4410 = vmax.f32 %v4308, 0.0
        %v4411 = vmax.f32 %v4313, 0.0
        %v4412 = vmax.f32 %v4318, 0.0
        %v4413 = vmax.f32 %v4323, 0.0
        %v4414 = vmax.f32 %v4328, 0.0
        %v4415 = vmax.f32 %v4333, 0.0
        %v4416 = vmax.f32 %v4338, 0.0
        %v4417 = vmax.f32 %v4343, 0.0
        %v4418 = vmax.f32 %v4348, 0.0
        %v4419 = vmax.f32 %v4353, 0.0
        %v4420 = vmax.f32 %v4358, 0.0
        %v4421 = vmax.f32 %v4363, 0.0
        %v4422 = vmax.f32 %v4368, 0.0
        %v4423 = vmax.f32 %v4373, 0.0
        %v4424 = vmax.f32 %v4378, 0.0
        %v4425 = vmax.f32 %v4383, 0.0
        %v4426 = vmax.f32 %v4388, 0.0
        %v4427 = vmax.f32 %v4393, 0.0
        %v4428 = vsel %vm1796, %v4396, 0.0
        %v4429 = vsel %vm1796, %v4397, 0.0
        %v4430 = vadd.f32 %v4428, %v4429
        %v4431 = vsel %vm1796, %v4398, 0.0
        %v4432 = vadd.f32 %v4430, %v4431
        %v4433 = vsel %vm1796, %v4399, 0.0
        %v4434 = vadd.f32 %v4432, %v4433
        %v4435 = vsel %vm1796, %v4400, 0.0
        %v4436 = vadd.f32 %v4434, %v4435
        %v4437 = vsel %vm1796, %v4401, 0.0
        %v4438 = vadd.f32 %v4436, %v4437
        %v4439 = vsel %vm1796, %v4402, 0.0
        %v4440 = vadd.f32 %v4438, %v4439
        %v4441 = vsel %vm1796, %v4403, 0.0
        %v4442 = vadd.f32 %v4440, %v4441
        %v4443 = vsel %vm1796, %v4404, 0.0
        %v4444 = vadd.f32 %v4442, %v4443
        %v4445 = vsel %vm1796, %v4405, 0.0
        %v4446 = vadd.f32 %v4444, %v4445
        %v4447 = vsel %vm1796, %v4406, 0.0
        %v4448 = vadd.f32 %v4446, %v4447
        %v4449 = vsel %vm1796, %v4407, 0.0
        %v4450 = vadd.f32 %v4448, %v4449
        %v4451 = vsel %vm1796, %v4408, 0.0
        %v4452 = vadd.f32 %v4450, %v4451
        %v4453 = vsel %vm1796, %v4409, 0.0
        %v4454 = vadd.f32 %v4452, %v4453
        %v4455 = vsel %vm1796, %v4410, 0.0
        %v4456 = vadd.f32 %v4454, %v4455
        %v4457 = vsel %vm1796, %v4411, 0.0
        %v4458 = vadd.f32 %v4456, %v4457
        %v4459 = vsel %vm1796, %v4412, 0.0
        %v4460 = vadd.f32 %v4458, %v4459
        %v4461 = vsel %vm1796, %v4413, 0.0
        %v4462 = vadd.f32 %v4460, %v4461
        %v4463 = vsel %vm1796, %v4414, 0.0
        %v4464 = vadd.f32 %v4462, %v4463
        %v4465 = vsel %vm1796, %v4415, 0.0
        %v4466 = vadd.f32 %v4464, %v4465
        %v4467 = vsel %vm1796, %v4416, 0.0
        %v4468 = vadd.f32 %v4466, %v4467
        %v4469 = vsel %vm1796, %v4417, 0.0
        %v4470 = vadd.f32 %v4468, %v4469
        %v4471 = vsel %vm1796, %v4418, 0.0
        %v4472 = vadd.f32 %v4470, %v4471
        %v4473 = vsel %vm1796, %v4419, 0.0
        %v4474 = vadd.f32 %v4472, %v4473
        %v4475 = vsel %vm1796, %v4420, 0.0
        %v4476 = vadd.f32 %v4474, %v4475
        %v4477 = vsel %vm1796, %v4421, 0.0
        %v4478 = vadd.f32 %v4476, %v4477
        %v4479 = vsel %vm1796, %v4422, 0.0
        %v4480 = vadd.f32 %v4478, %v4479
        %v4481 = vsel %vm1796, %v4423, 0.0
        %v4482 = vadd.f32 %v4480, %v4481
        %v4483 = vsel %vm1796, %v4424, 0.0
        %v4484 = vadd.f32 %v4482, %v4483
        %v4485 = vsel %vm1796, %v4425, 0.0
        %v4486 = vadd.f32 %v4484, %v4485
        %v4487 = vsel %vm1796, %v4426, 0.0
        %v4488 = vadd.f32 %v4486, %v4487
        %v4489 = vsel %vm1796, %v4427, 0.0
        %v4490 = vadd.f32 %v4488, %v4489
        %v4491 = vrot.slane %v4490, 4
        %v4492 = vadd.f32 %v4490, %v4491
        %v4493 = vrot.slane %v4492, 2
        %v4494 = vadd.f32 %v4492, %v4493
        %v4495 = vrot.slane %v4494, 1
        %v4496 = vadd.f32 %v4494, %v4495
        %v4497 = vmul.f32 %v4496, 0.00390625
        %v4498 = vld [vmem:[%s5] sm:$0xff]
        %v4499 = vld [vmem:[%s6] sm:$0x1]
        %v4501 = vsel %vm1796, %v4497, 0
        %4503 = vmatprep.subr.mxu0 0.0
        %4504 = vmatpush1.msra.mxu0 0.0
        %4505 = vmatprep.subr.mxu0 0.0
        %4506 = vmatpush1.msra.mxu0 0.0
        %4507 = vmatprep.subr.mxu0 0.0
        %4508 = vmatpush1.msra.mxu0 0.0
        %4509 = vmatprep.subr.mxu0 0.0
        %4510 = vmatpush1.msra.mxu0 0.0
        %4511 = vmatprep.subr.mxu0 0.0
        %4512 = vmatpush1.msra.mxu0 0.0
        %4513 = vmatprep.subr.mxu0 0.0
        %4514 = vmatpush1.msra.mxu0 0.0
        %4515 = vmatprep.subr.mxu0 0.0
        %4516 = vmatpush1.msra.mxu0 0.0
        %4517 = vmatprep.subr.mxu0 0.0
        %4518 = vmatpush1.msra.mxu0 0.0
        %4519 = vmatprep.subr.mxu0 0.0
        %4520 = vmatpush1.msra.mxu0 0.0
        %4521 = vmatprep.subr.mxu0 0.0
        %4522 = vmatpush1.msra.mxu0 0.0
        %4523 = vmatprep.subr.mxu0 0.0
        %4524 = vmatpush1.msra.mxu0 0.0
        %4525 = vmatprep.subr.mxu0 0.0
        %4526 = vmatpush1.msra.mxu0 0.0
        %4527 = vmatprep.subr.mxu0 0.0
        %4528 = vmatpush1.msra.mxu0 0.0
        %4529 = vmatprep.subr.mxu0 0.0
        %4530 = vmatpush1.msra.mxu0 0.0
        %4531 = vmatprep.subr.mxu0 0.0
        %4532 = vmatpush1.msra.mxu0 0.0
        %4533 = vmatprep.subr.mxu0 0.0
        %4534 = vmatpush1.msra.mxu0 %v4498
        %4535 = vmatprep.subr.mxu0 0.0
        %4536 = vmatpush2.msra.mxu0 0.0
        %4537 = vmatprep.subr.mxu0 0.0
        %4538 = vmatpush2.msra.mxu0 0.0
        %4539 = vmatprep.subr.mxu0 0.0
        %4540 = vmatpush2.msra.mxu0 0.0
        %4541 = vmatprep.subr.mxu0 0.0
        %4542 = vmatpush2.msra.mxu0 0.0
        %4543 = vmatprep.subr.mxu0 0.0
        %4544 = vmatpush2.msra.mxu0 0.0
        %4545 = vmatprep.subr.mxu0 0.0
        %4546 = vmatpush2.msra.mxu0 0.0
        %4547 = vmatprep.subr.mxu0 0.0
        %4548 = vmatpush2.msra.mxu0 0.0
        %4549 = vmatprep.subr.mxu0 0.0
        %4550 = vmatpush2.msra.mxu0 0.0
        %4551 = vmatprep.subr.mxu0 0.0
        %4552 = vmatpush2.msra.mxu0 0.0
        %4553 = vmatprep.subr.mxu0 0.0
        %4554 = vmatpush2.msra.mxu0 0.0
        %4555 = vmatprep.subr.mxu0 0.0
        %4556 = vmatpush2.msra.mxu0 0.0
        %4557 = vmatprep.subr.mxu0 0.0
        %4558 = vmatpush2.msra.mxu0 0.0
        %4559 = vmatprep.subr.mxu0 0.0
        %4560 = vmatpush2.msra.mxu0 0.0
        %4561 = vmatprep.subr.mxu0 0.0
        %4562 = vmatpush2.msra.mxu0 0.0
        %4563 = vmatprep.subr.mxu0 0.0
        %4564 = vmatpush2.msra.mxu0 0.0
        %4565 = vmatprep.subr.mxu0 0.0
        %4566 = vmatpush2.msra.mxu0 0.0
        %4567 = vmatprep.mubr.f32.mxu0 0.0
        %4568 = vmatmul.mubr.f32.gmra.mxu0 %v4501
        %v4569 = vpop.f32.mrf.mxu0
        %v4570 = vadd.f32 %v4499, %v4569
        %v4571 = vpop.f32.mrf.mxu0
        %4572 = vdwg.mxu0
        %v4573 = vmax.f32 %v4570, 0.0
        %v4574 = vld [vmem:[%s7] sm:$0xff]
        %v4575 = vld [vmem:[%s7 + $0x8] sm:$0xff]
        %v4576 = vld [vmem:[%s7 + $0x10] sm:$0xff]
        %v4577 = vld [vmem:[%s7 + $0x18] sm:$0xff]
        %v4578 = vld [vmem:[%s8] sm:$0x1]
        %v4580 = vsel %vm1994, %v4573, 0
        %4582 = vmatprep.subr.mxu0 0.0
        %4583 = vmatpush1.msra.mxu0 0.0
        %4584 = vmatprep.subr.mxu0 0.0
        %4585 = vmatpush1.msra.mxu0 0.0
        %4586 = vmatprep.subr.mxu0 0.0
        %4587 = vmatpush1.msra.mxu0 0.0
        %4588 = vmatprep.subr.mxu0 0.0
        %4589 = vmatpush1.msra.mxu0 0.0
        %4590 = vmatprep.subr.mxu0 0.0
        %4591 = vmatpush1.msra.mxu0 0.0
        %4592 = vmatprep.subr.mxu0 0.0
        %4593 = vmatpush1.msra.mxu0 0.0
        %4594 = vmatprep.subr.mxu0 0.0
        %4595 = vmatpush1.msra.mxu0 0.0
        %4596 = vmatprep.subr.mxu0 0.0
        %4597 = vmatpush1.msra.mxu0 0.0
        %4598 = vmatprep.subr.mxu0 0.0
        %4599 = vmatpush1.msra.mxu0 0.0
        %4600 = vmatprep.subr.mxu0 0.0
        %4601 = vmatpush1.msra.mxu0 0.0
        %4602 = vmatprep.subr.mxu0 0.0
        %4603 = vmatpush1.msra.mxu0 0.0
        %4604 = vmatprep.subr.mxu0 0.0
        %4605 = vmatpush1.msra.mxu0 0.0
        %4606 = vmatprep.subr.mxu0 0.0
        %4607 = vmatpush1.msra.mxu0 %v4577
        %4608 = vmatprep.subr.mxu0 0.0
        %4609 = vmatpush1.msra.mxu0 %v4576
        %4610 = vmatprep.subr.mxu0 0.0
        %4611 = vmatpush1.msra.mxu0 %v4575
        %4612 = vmatprep.subr.mxu0 0.0
        %4613 = vmatpush1.msra.mxu0 %v4574
        %4614 = vmatprep.subr.mxu0 0.0
        %4615 = vmatpush2.msra.mxu0 0.0
        %4616 = vmatprep.subr.mxu0 0.0
        %4617 = vmatpush2.msra.mxu0 0.0
        %4618 = vmatprep.subr.mxu0 0.0
        %4619 = vmatpush2.msra.mxu0 0.0
        %4620 = vmatprep.subr.mxu0 0.0
        %4621 = vmatpush2.msra.mxu0 0.0
        %4622 = vmatprep.subr.mxu0 0.0
        %4623 = vmatpush2.msra.mxu0 0.0
        %4624 = vmatprep.subr.mxu0 0.0
        %4625 = vmatpush2.msra.mxu0 0.0
        %4626 = vmatprep.subr.mxu0 0.0
        %4627 = vmatpush2.msra.mxu0 0.0
        %4628 = vmatprep.subr.mxu0 0.0
        %4629 = vmatpush2.msra.mxu0 0.0
        %4630 = vmatprep.subr.mxu0 0.0
        %4631 = vmatpush2.msra.mxu0 0.0
        %4632 = vmatprep.subr.mxu0 0.0
        %4633 = vmatpush2.msra.mxu0 0.0
        %4634 = vmatprep.subr.mxu0 0.0
        %4635 = vmatpush2.msra.mxu0 0.0
        %4636 = vmatprep.subr.mxu0 0.0
        %4637 = vmatpush2.msra.mxu0 0.0
        %4638 = vmatprep.subr.mxu0 0.0
        %4639 = vmatpush2.msra.mxu0 0.0
        %4640 = vmatprep.subr.mxu0 0.0
        %4641 = vmatpush2.msra.mxu0 0.0
        %4642 = vmatprep.subr.mxu0 0.0
        %4643 = vmatpush2.msra.mxu0 0.0
        %4644 = vmatprep.subr.mxu0 0.0
        %4645 = vmatpush2.msra.mxu0 0.0
        %4646 = vmatprep.mubr.f32.mxu0 0.0
        %4647 = vmatmul.mubr.f32.gmra.mxu0 %v4580
        %v4648 = vpop.f32.mrf.mxu0
        %v4649 = vadd.f32 %v4578, %v4648
        %v4650 = vpop.f32.mrf.mxu0
        %4651 = vdwg.mxu0
        %vm4652 = vcmask 73728
        %4653 = vst.msk [vmem:[%s324] sm:$0x1] %vm4652, %v4649
        %s4654 = sand.u32 %s225, 1
        %s4655 = scalar_lea.sflag [#allocation5], %s4654
        %s4656 = sand.u32 %s225, 1
        %s4657 = scalar_lea.vmem [#allocation4], %s4656
        // Predicated region
        $region57: #{tpu_custom_call.1} parent=55 // pred_check
          %p4658 = pneg %p235
        $region58: #{tpu_custom_call.1} parent=55 // pred_check_branch
          %4660 = sbr.rel (%p4658) target = $region60
        $region59: #{tpu_custom_call.1} parent=55 // pred_region
          %s4662 = ssub.s32 16, 16
          %4663 = vsyncadd %s4655, %s4662
          %s4664 = smul.addr %s23, 16
          %s4665 = scalar_lea.hbm %s9, %s4664
          %s4667 = sshll.u32 %s4657, 4
          %s4668 = int_to_ptr.vmem [resolvable:$true] %s4667
          %4670 = dma.vmem_to_hbm [thread:$0]  %s4668, 16, %s4665, %s4655
        $region60: #{tpu_custom_call.1} parent=55 // pred_fallthru
          _
      $region56: #{tpu_custom_call.1} parent=5 // pred_fallthru
        _
      %p4671 = scmp.le.s32.totalorder 2, %s18
      // Predicated region
      $region61: #{tpu_custom_call.1} parent=5 // pred_check
        %p4672 = pneg %p4671
      $region62: #{tpu_custom_call.1} parent=5 // pred_check_branch
        %4674 = sbr.rel (%p4672) target = $region64
      $region63: #{tpu_custom_call.1} parent=5 // pred_region
        %s4675 = ssub.s32 %s18, 2
        // Predicated region
        $region65: #{tpu_custom_call.1} parent=63 // pred_check
          %p4676 = pneg %p241
        $region66: #{tpu_custom_call.1} parent=63 // pred_check_branch
          %4678 = sbr.rel (%p4676) target = $region68
        $region67: #{tpu_custom_call.1} parent=63 // pred_region
          %s4679 = sand.u32 %s226, 1
          %s4680 = scalar_lea.sflag [#allocation5], %s4679
          %s4681 = sand.u32 %s226, 1
          %s4682 = scalar_lea.vmem [#allocation4], %s4681
          %4683 = dma.done %s4680, 16
        $region68: #{tpu_custom_call.1} parent=63 // pred_fallthru
          _
      $region64: #{tpu_custom_call.1} parent=5 // pred_fallthru
        _
    $region6: #{tpu_custom_call.1} parent=1 // loop_footer
      %s22 = sadd.s32 1, %s18
    $region7: #{tpu_custom_call.1} parent=1 // loop_footer_branch
      %17 = sbr.rel target = $region3
    $region8: #{tpu_custom_call.1} parent=1 // loop_exit
      _
    %4684 = vsyncpa [#allocation5], 1
    %s4685 = scalar_lea.sflag [#allocation5], 1
    %4686 = vsyncpa %s4685, 1

</llo_original>
